<compile_context>
chip_gen: v7x
topology: tpu7x:2x2x1
jax: 0.10.0
libtpu: 0.0.40
codegen_flags: <defaults>
</compile_context>

<pallas_src>
import functools

import jax
import jax.numpy as jnp
from jax import lax
from jax.experimental import pallas as pl
from jax.experimental.pallas import tpu as pltpu


def _layer_norm(h, g, b, eps=1e-5):
    mu = jnp.mean(h, axis=-1, keepdims=True)
    var = jnp.mean((h - mu) ** 2, axis=-1, keepdims=True)
    return (h - mu) * lax.rsqrt(var + eps) * g + b


def trf_kernel(x_ref, pos_ref, w1_ref, b1_ref,
               wqkv_ref, bqkv_ref, ow_ref, ob_ref,
               f1w_ref, f1b_ref, f2w_ref, f2b_ref,
               ln1w_ref, ln1b_ref, ln2w_ref, ln2b_ref,
               w2_ref, b2_ref,
               out_ref, *, nhead, num_layers):
    f32 = jnp.float32
    S = x_ref.shape[0]
    D = pos_ref.shape[1]
    Dh = D // nhead
    scale = 1.0 / float(Dh) ** 0.5
    cdt = w1_ref.dtype                       # bf16: MXU-native operand dtype

    # ---- stem: linear -> silu -> (+) reversed positional embedding ----
    h0 = jnp.dot(x_ref[...].astype(cdt), w1_ref[...],
                 preferred_element_type=f32) + b1_ref[...]
    x = jax.nn.silu(h0) + pos_ref[...]       # (S, D) f32 activations

    # ---- additive causal bias, built once per call (cheap VPU iota) ----
    row = lax.broadcasted_iota(jnp.int32, (S, S), 0)
    col = lax.broadcasted_iota(jnp.int32, (S, S), 1)
    bias = jnp.where(col > row, -1e30, 0.0).astype(f32)

    # ---- post-norm encoder layers: static unroll, all weights resident ----
    for l in range(num_layers):
        x_b = x.astype(cdt)                  # bf16 shadow, cast once per value
        xb = jnp.broadcast_to(x_b[None], (3 * nhead, S, D))

        # head-batched QKV projection: one batched matmul, no lane slicing
        qkv = jnp.einsum('hsd,hdk->hsk', xb, wqkv_ref[l],
                         preferred_element_type=f32) + bqkv_ref[l]
        q = qkv[0 * nhead:1 * nhead] * scale     # leading-dim slices are free
        k = qkv[1 * nhead:2 * nhead]
        v = qkv[2 * nhead:3 * nhead]

        s = jnp.einsum('hqd,hkd->hqk', q.astype(cdt), k.astype(cdt),
                       preferred_element_type=f32) + bias
        m = jnp.max(s, axis=-1, keepdims=True)
        e = jnp.exp(s - m)
        p = e * pl.reciprocal(jnp.sum(e, axis=-1, keepdims=True), approx=True)
        ctx = jnp.einsum('hqk,hkd->hqd', p.astype(cdt), v.astype(cdt),
                         preferred_element_type=f32)          # (H, S, Dh)

        # per-head output projection summed over heads (no lane concat)
        attn = jnp.einsum('hsd,hdn->hsn', ctx.astype(cdt), ow_ref[l],
                          preferred_element_type=f32).sum(axis=0) + ob_ref[l]

        h1 = _layer_norm(x + attn, ln1w_ref[l], ln1b_ref[l])

        ff = jnp.dot(h1.astype(cdt), f1w_ref[l],
                     preferred_element_type=f32) + f1b_ref[l]
        ff = jax.nn.silu(ff)
        ff = jnp.dot(ff.astype(cdt), f2w_ref[l],
                     preferred_element_type=f32) + f2b_ref[l]
        x = _layer_norm(h1 + ff, ln2w_ref[l], ln2b_ref[l])

    # ---- head: silu -> linear (lane-dense padded output) ----
    y = jax.nn.silu(x)
    out_ref[...] = (jnp.dot(y.astype(cdt), w2_ref[...],
                            preferred_element_type=f32)
                    + b2_ref[...]).astype(out_ref.dtype)


def trf_forward(x, params, *, nhead):
    S = x.shape[0]
    D = params['pos'].shape[1]
    L = params['in_w'].shape[0]
    Dh = D // nhead
    num_output = params['w2'].shape[1]
    bf16, f32 = jnp.bfloat16, jnp.float32

    # ---- wrapper-side layout plumbing (pure reshape/cast, done once) ----
    # head-batched QKV projection weights: (L, 3*H, D, Dh)
    wqkv = (params['in_w'].reshape(L, D, 3, nhead, Dh)
            .transpose(0, 2, 3, 1, 4).reshape(L, 3 * nhead, D, Dh)
            .astype(bf16))
    bqkv = (params['in_b'].reshape(L, 1, 3, nhead, Dh)
            .transpose(0, 2, 3, 1, 4).reshape(L, 3 * nhead, 1, Dh)
            .astype(f32))
    # per-head output-projection row blocks: (L, H, Dh, D)
    ow = params['out_w'].reshape(L, nhead, Dh, D).astype(bf16)

    # lane-dense padded head weights / output slab
    n_pad = ((num_output + 127) // 128) * 128
    w2p = jnp.zeros((D, n_pad), f32).at[:, :num_output].set(
        params['w2'].astype(f32)).astype(bf16)
    b2p = jnp.zeros((1, n_pad), f32).at[:, :num_output].set(
        params['b2'].astype(f32))

    args = (x.astype(f32), params['pos'].astype(f32),
            params['w1'].astype(bf16), params['b1'].astype(f32),
            wqkv, bqkv, ow, params['out_b'].astype(f32),
            params['ff1_w'].astype(bf16), params['ff1_b'].astype(f32),
            params['ff2_w'].astype(bf16), params['ff2_b'].astype(f32),
            params['ln1_w'].astype(f32), params['ln1_b'].astype(f32),
            params['ln2_w'].astype(f32), params['ln2_b'].astype(f32),
            w2p, b2p)

    def full(a):                 # whole array resident in VMEM, one DMA
        nd = a.ndim

        def imap(i):
            return (0,) * nd
        return pl.BlockSpec(a.shape, imap)

    in_specs = [full(a) for a in args]

    # explicit VMEM budget: everything is resident (single grid step)
    nbytes = lambda a: int(a.size) * a.dtype.itemsize
    total = sum(nbytes(a) for a in args) + S * n_pad * 4
    try:
        phys = int(pltpu.get_tpu_info().vmem_capacity_bytes)
    except Exception:
        phys = 64 << 20          # v7x per-core VMEM (smallest generation)
    cap = max(phys - (16 << 20), 32 << 20)
    vmem_limit = int(min(max(2 * total + (8 << 20), 16 << 20), cap))

    out = pl.pallas_call(
        functools.partial(trf_kernel, nhead=nhead, num_layers=L),
        out_shape=jax.ShapeDtypeStruct((S, n_pad), jnp.float32),
        grid_spec=pltpu.PrefetchScalarGridSpec(
            num_scalar_prefetch=0,
            grid=(1,),
            in_specs=in_specs,
            out_specs=pl.BlockSpec((S, n_pad), lambda i: (0, 0)),
        ),
        compiler_params=pltpu.CompilerParams(
            dimension_semantics=("arbitrary",),
            vmem_limit_bytes=vmem_limit),
    )(*args)
    return out[:, :num_output]


# ---------------- pure-JAX reference (for correctness check) ----------------
def reference_forward(x, params, nhead):
    D = params['w1'].shape[1]
    S = x.shape[0]
    Dh = D // nhead
    h = jax.nn.silu(x @ params['w1'] + params['b1']) + params['pos']
    mask = jnp.triu(jnp.ones((S, S), bool), k=1)
    for l in range(params['in_w'].shape[0]):
        qkv = h @ params['in_w'][l] + params['in_b'][l]
        q, k, v = qkv[:, :D], qkv[:, D:2 * D], qkv[:, 2 * D:]
        qh = q.reshape(S, nhead, Dh).transpose(1, 0, 2)
        kh = k.reshape(S, nhead, Dh).transpose(1, 0, 2)
        vh = v.reshape(S, nhead, Dh).transpose(1, 0, 2)
        s = jnp.einsum('hqd,hkd->hqk', qh, kh) / jnp.sqrt(Dh)
        s = jnp.where(mask[None], -jnp.inf, s)
        p = jax.nn.softmax(s, axis=-1)
        ctx = jnp.einsum('hqk,hkd->hqd', p, vh).transpose(1, 0, 2).reshape(S, D)
        attn = ctx @ params['out_w'][l] + params['out_b'][l]
        h = _layer_norm(h + attn, params['ln1_w'][l], params['ln1_b'][l])
        ff = jax.nn.silu(h @ params['ff1_w'][l] + params['ff1_b'][l])
        ff = ff @ params['ff2_w'][l] + params['ff2_b'][l]
        h = _layer_norm(h + ff, params['ln2_w'][l], params['ln2_b'][l])
    return jax.nn.silu(h) @ params['w2'] + params['b2']


def init_params(key, input_size, num_output, max_len, d_model,
                dim_feedforward, num_layers):
    ks = jax.random.split(key, 13)
    f = lambda k, shape: 0.05 * jax.random.normal(k, shape, jnp.float32)
    return dict(
        w1=f(ks[0], (input_size, d_model)),
        b1=f(ks[1], (1, d_model)),
        pos_table=f(ks[2], (max_len, d_model)),
        in_w=f(ks[3], (num_layers, d_model, 3 * d_model)),
        in_b=f(ks[4], (num_layers, 1, 3 * d_model)),
        out_w=f(ks[5], (num_layers, d_model, d_model)),
        out_b=f(ks[6], (num_layers, 1, d_model)),
        ff1_w=f(ks[7], (num_layers, d_model, dim_feedforward)),
        ff1_b=f(ks[8], (num_layers, 1, dim_feedforward)),
        ff2_w=f(ks[9], (num_layers, dim_feedforward, d_model)),
        ff2_b=f(ks[10], (num_layers, 1, d_model)),
        ln1_w=jnp.ones((num_layers, 1, d_model), jnp.float32),
        ln1_b=jnp.zeros((num_layers, 1, d_model), jnp.float32),
        ln2_w=jnp.ones((num_layers, 1, d_model), jnp.float32),
        ln2_b=jnp.zeros((num_layers, 1, d_model), jnp.float32),
        w2=f(ks[11], (d_model, num_output)),
        b2=f(ks[12], (1, num_output)),
    )


if __name__ == "__main__":
    # small shapes consistent with the module's (configurable) ctor args
    input_size, num_output = 16, 4
    max_len, d_model, nhead, dim_ff, num_layers = 64, 32, 4, 32, 2
    S = 8

    key = jax.random.PRNGKey(0)
    kx, kp = jax.random.split(key)
    x = jax.random.normal(kx, (S, input_size), jnp.float32)

    params = init_params(kp, input_size, num_output, max_len, d_model,
                         dim_ff, num_layers)
    # positional_embedding(arange(S).flip(0)) == reversed first-S rows of table
    params['pos'] = jnp.flip(params['pos_table'][:S], axis=0)

    out = jax.block_until_ready(trf_forward(x, params, nhead=nhead))

    # reference: same weights rounded through bf16 (kernel's MXU operand
    # dtype), pure f32 math.  Residual diff = bf16 activation rounding +
    # approx softmax reciprocal (both documented, small).
    rparams = dict(params)
    for name in ('w1', 'in_w', 'out_w', 'ff1_w', 'ff2_w', 'w2'):
        rparams[name] = params[name].astype(jnp.bfloat16).astype(jnp.float32)
    ref = reference_forward(x, rparams, nhead)

    assert out.shape == (S, num_output)
    assert jnp.allclose(out, ref, atol=2e-2, rtol=2e-2), (out, ref)
    print("KERNEL_OK")
</pallas_src>

<mosaic_0001>
module attributes {stable_mosaic.version = 11 : i64} {
  func.func @trf_kernel(%arg0: i32, %arg1: memref<8x16xf32, #tpu.memory_space<vmem>>, %arg2: memref<8x32xf32, #tpu.memory_space<vmem>>, %arg3: memref<16x32xbf16, #tpu.memory_space<vmem>>, %arg4: memref<1x32xf32, #tpu.memory_space<vmem>>, %arg5: memref<2x12x32x8xbf16, #tpu.memory_space<vmem>>, %arg6: memref<2x12x1x8xf32, #tpu.memory_space<vmem>>, %arg7: memref<2x4x8x32xbf16, #tpu.memory_space<vmem>>, %arg8: memref<2x1x32xf32, #tpu.memory_space<vmem>>, %arg9: memref<2x32x32xbf16, #tpu.memory_space<vmem>>, %arg10: memref<2x1x32xf32, #tpu.memory_space<vmem>>, %arg11: memref<2x32x32xbf16, #tpu.memory_space<vmem>>, %arg12: memref<2x1x32xf32, #tpu.memory_space<vmem>>, %arg13: memref<2x1x32xf32, #tpu.memory_space<vmem>>, %arg14: memref<2x1x32xf32, #tpu.memory_space<vmem>>, %arg15: memref<2x1x32xf32, #tpu.memory_space<vmem>>, %arg16: memref<2x1x32xf32, #tpu.memory_space<vmem>>, %arg17: memref<32x128xbf16, #tpu.memory_space<vmem>>, %arg18: memref<1x128xf32, #tpu.memory_space<vmem>>, %arg19: memref<8x128xf32, #tpu.memory_space<vmem>>) attributes {dimension_semantics = [#tpu.dimension_semantics<arbitrary>], iteration_bounds = array<i64: 1>, scalar_prefetch = 0 : i64, scratch_operands = 0 : i64, tpu.core_type = #tpu.core_type<tc>, window_params = [{pipeline_mode = #tpu.pipeline_mode<synchronous>, transform_indices = @transform_0, window_bounds = array<i64: 8, 16>}, {pipeline_mode = #tpu.pipeline_mode<synchronous>, transform_indices = @transform_1, window_bounds = array<i64: 8, 32>}, {pipeline_mode = #tpu.pipeline_mode<synchronous>, transform_indices = @transform_2, window_bounds = array<i64: 16, 32>}, {pipeline_mode = #tpu.pipeline_mode<synchronous>, transform_indices = @transform_3, window_bounds = array<i64: 1, 32>}, {pipeline_mode = #tpu.pipeline_mode<synchronous>, transform_indices = @transform_4, window_bounds = array<i64: 2, 12, 32, 8>}, {pipeline_mode = #tpu.pipeline_mode<synchronous>, transform_indices = @transform_5, window_bounds = array<i64: 2, 12, 1, 8>}, {pipeline_mode = #tpu.pipeline_mode<synchronous>, transform_indices = @transform_6, window_bounds = array<i64: 2, 4, 8, 32>}, {pipeline_mode = #tpu.pipeline_mode<synchronous>, transform_indices = @transform_7, window_bounds = array<i64: 2, 1, 32>}, {pipeline_mode = #tpu.pipeline_mode<synchronous>, transform_indices = @transform_8, window_bounds = array<i64: 2, 32, 32>}, {pipeline_mode = #tpu.pipeline_mode<synchronous>, transform_indices = @transform_9, window_bounds = array<i64: 2, 1, 32>}, {pipeline_mode = #tpu.pipeline_mode<synchronous>, transform_indices = @transform_10, window_bounds = array<i64: 2, 32, 32>}, {pipeline_mode = #tpu.pipeline_mode<synchronous>, transform_indices = @transform_11, window_bounds = array<i64: 2, 1, 32>}, {pipeline_mode = #tpu.pipeline_mode<synchronous>, transform_indices = @transform_12, window_bounds = array<i64: 2, 1, 32>}, {pipeline_mode = #tpu.pipeline_mode<synchronous>, transform_indices = @transform_13, window_bounds = array<i64: 2, 1, 32>}, {pipeline_mode = #tpu.pipeline_mode<synchronous>, transform_indices = @transform_14, window_bounds = array<i64: 2, 1, 32>}, {pipeline_mode = #tpu.pipeline_mode<synchronous>, transform_indices = @transform_15, window_bounds = array<i64: 2, 1, 32>}, {pipeline_mode = #tpu.pipeline_mode<synchronous>, transform_indices = @transform_16, window_bounds = array<i64: 32, 128>}, {pipeline_mode = #tpu.pipeline_mode<synchronous>, transform_indices = @transform_17, window_bounds = array<i64: 1, 128>}, {pipeline_mode = #tpu.pipeline_mode<synchronous>, transform_indices = @transform_18, window_bounds = array<i64: 8, 128>}]} {
    %c0 = arith.constant 0 : index
    %c0_0 = arith.constant 0 : index
    %0 = vector.load %arg1[%c0, %c0_0] : memref<8x16xf32, #tpu.memory_space<vmem>>, vector<8x16xf32>
    %1 = arith.truncf %0 : vector<8x16xf32> to vector<8x16xbf16>
    %c0_1 = arith.constant 0 : index
    %c0_2 = arith.constant 0 : index
    %2 = vector.load %arg3[%c0_1, %c0_2] : memref<16x32xbf16, #tpu.memory_space<vmem>>, vector<16x32xbf16>
    %cst = arith.constant dense<0.000000e+00> : vector<8x32xf32>
    %3 = tpu.matmul %1, %2, %cst {dimension_numbers = #tpu.dot_dimension_numbers<[1], [0], [0], [1], [0, 0, 1, 1], [], []>} : vector<8x16xbf16>, vector<16x32xbf16>, vector<8x32xf32> -> vector<8x32xf32>
    %c0_3 = arith.constant 0 : index
    %c0_4 = arith.constant 0 : index
    %4 = vector.load %arg4[%c0_3, %c0_4] : memref<1x32xf32, #tpu.memory_space<vmem>>, vector<1x32xf32>
    %5 = vector.broadcast %4 : vector<1x32xf32> to vector<8x32xf32>
    %6 = arith.addf %3, %5 : vector<8x32xf32>
    %7 = arith.negf %6 : vector<8x32xf32>
    %8 = math.exp %7 : vector<8x32xf32>
    %cst_5 = arith.constant 1.000000e+00 : f32
    %9 = vector.broadcast %cst_5 : f32 to vector<8x32xf32>
    %10 = arith.addf %9, %8 : vector<8x32xf32>
    %11 = arith.divf %9, %10 : vector<8x32xf32>
    %12 = arith.mulf %6, %11 : vector<8x32xf32>
    %c0_6 = arith.constant 0 : index
    %c0_7 = arith.constant 0 : index
    %13 = vector.load %arg2[%c0_6, %c0_7] : memref<8x32xf32, #tpu.memory_space<vmem>>, vector<8x32xf32>
    %14 = arith.addf %12, %13 : vector<8x32xf32>
    %15 = tpu.iota {dimensions = array<i32: 0>} : vector<8x8xi32>
    %16 = tpu.iota {dimensions = array<i32: 1>} : vector<8x8xi32>
    %17 = arith.cmpi sgt, %16, %15 : vector<8x8xi32>
    %cst_8 = arith.constant -1.000000e+30 : f32
    %cst_9 = arith.constant 0.000000e+00 : f32
    %18 = vector.broadcast %cst_8 : f32 to vector<8x8xf32>
    %19 = vector.broadcast %cst_9 : f32 to vector<8x8xf32>
    %20 = arith.select %17, %18, %19 : vector<8x8xi1>, vector<8x8xf32>
    %21 = arith.truncf %14 : vector<8x32xf32> to vector<8x32xbf16>
    %22 = vector.shape_cast %21 : vector<8x32xbf16> to vector<1x8x32xbf16>
    %23 = vector.shape_cast %22 : vector<1x8x32xbf16> to vector<1x8x32xbf16>
    %24 = vector.broadcast %23 : vector<1x8x32xbf16> to vector<12x8x32xbf16>
    %c0_10 = arith.constant 0 : index
    %c0_11 = arith.constant 0 : index
    %c0_12 = arith.constant 0 : index
    %c0_13 = arith.constant 0 : index
    %25 = vector.load %arg5[%c0_10, %c0_11, %c0_12, %c0_13] : memref<2x12x32x8xbf16, #tpu.memory_space<vmem>>, vector<1x12x32x8xbf16>
    %26 = vector.shape_cast %25 : vector<1x12x32x8xbf16> to vector<12x32x8xbf16>
    "tpu.trace_start"() <{level = 10 : i32, message = "hsd,hdk->hsk"}> : () -> ()
    %cst_14 = arith.constant dense<0.000000e+00> : vector<12x8x8xf32>
    %27 = tpu.matmul %24, %26, %cst_14 {dimension_numbers = #tpu.dot_dimension_numbers<[2], [1], [1], [2], [0, 0, 0, 1, 1, 2], [0], [0]>} : vector<12x8x32xbf16>, vector<12x32x8xbf16>, vector<12x8x8xf32> -> vector<12x8x8xf32>
    "tpu.trace_stop"() : () -> ()
    %c0_15 = arith.constant 0 : index
    %c0_16 = arith.constant 0 : index
    %c0_17 = arith.constant 0 : index
    %c0_18 = arith.constant 0 : index
    %28 = vector.load %arg6[%c0_15, %c0_16, %c0_17, %c0_18] : memref<2x12x1x8xf32, #tpu.memory_space<vmem>>, vector<1x12x1x8xf32>
    %29 = vector.shape_cast %28 : vector<1x12x1x8xf32> to vector<12x1x8xf32>
    %30 = vector.broadcast %29 : vector<12x1x8xf32> to vector<12x8x8xf32>
    %31 = arith.addf %27, %30 : vector<12x8x8xf32>
    %32 = vector.extract_strided_slice %31 {offsets = [0, 0, 0], sizes = [4, 8, 8], strides = [1, 1, 1]} : vector<12x8x8xf32> to vector<4x8x8xf32>
    %cst_19 = arith.constant 0.353553385 : f32
    %33 = vector.broadcast %cst_19 : f32 to vector<4x8x8xf32>
    %34 = arith.mulf %32, %33 : vector<4x8x8xf32>
    %35 = vector.extract_strided_slice %31 {offsets = [4, 0, 0], sizes = [4, 8, 8], strides = [1, 1, 1]} : vector<12x8x8xf32> to vector<4x8x8xf32>
    %36 = vector.extract_strided_slice %31 {offsets = [8, 0, 0], sizes = [4, 8, 8], strides = [1, 1, 1]} : vector<12x8x8xf32> to vector<4x8x8xf32>
    %37 = arith.truncf %34 : vector<4x8x8xf32> to vector<4x8x8xbf16>
    %38 = arith.truncf %35 : vector<4x8x8xf32> to vector<4x8x8xbf16>
    "tpu.trace_start"() <{level = 10 : i32, message = "hqd,hkd->hqk"}> : () -> ()
    %cst_20 = arith.constant dense<0.000000e+00> : vector<4x8x8xf32>
    %39 = tpu.matmul %37, %38, %cst_20 {dimension_numbers = #tpu.dot_dimension_numbers<[2], [2], [1], [1], [0, 0, 0, 1, 1, 1], [0], [0]>} : vector<4x8x8xbf16>, vector<4x8x8xbf16>, vector<4x8x8xf32> -> vector<4x8x8xf32>
    "tpu.trace_stop"() : () -> ()
    %40 = vector.shape_cast %20 : vector<8x8xf32> to vector<1x8x8xf32>
    %41 = vector.broadcast %40 : vector<1x8x8xf32> to vector<4x8x8xf32>
    %42 = arith.addf %39, %41 : vector<4x8x8xf32>
    %cst_21 = arith.constant dense<0xFF800000> : vector<4x8xf32>
    %43 = vector.multi_reduction <maximumf>, %42, %cst_21 [2] : vector<4x8x8xf32> to vector<4x8xf32>
    %44 = vector.shape_cast %43 : vector<4x8xf32> to vector<4x8x1xf32>
    %45 = vector.broadcast %44 : vector<4x8x1xf32> to vector<4x8x8xf32>
    %46 = arith.subf %42, %45 : vector<4x8x8xf32>
    %47 = math.exp %46 : vector<4x8x8xf32>
    %cst_22 = arith.constant dense<0.000000e+00> : vector<4x8xf32>
    %48 = vector.multi_reduction <add>, %47, %cst_22 [2] : vector<4x8x8xf32> to vector<4x8xf32>
    %49 = vector.shape_cast %48 : vector<4x8xf32> to vector<4x8x1xf32>
    %50 = tpu.reciprocal %49 {approx = true} : vector<4x8x1xf32> -> vector<4x8x1xf32>
    %51 = vector.broadcast %50 : vector<4x8x1xf32> to vector<4x8x8xf32>
    %52 = arith.mulf %47, %51 : vector<4x8x8xf32>
    %53 = arith.truncf %52 : vector<4x8x8xf32> to vector<4x8x8xbf16>
    %54 = arith.truncf %36 : vector<4x8x8xf32> to vector<4x8x8xbf16>
    "tpu.trace_start"() <{level = 10 : i32, message = "hqk,hkd->hqd"}> : () -> ()
    %cst_23 = arith.constant dense<0.000000e+00> : vector<4x8x8xf32>
    %55 = tpu.matmul %53, %54, %cst_23 {dimension_numbers = #tpu.dot_dimension_numbers<[2], [1], [1], [2], [0, 0, 0, 1, 1, 2], [0], [0]>} : vector<4x8x8xbf16>, vector<4x8x8xbf16>, vector<4x8x8xf32> -> vector<4x8x8xf32>
    "tpu.trace_stop"() : () -> ()
    %56 = arith.truncf %55 : vector<4x8x8xf32> to vector<4x8x8xbf16>
    %c0_24 = arith.constant 0 : index
    %c0_25 = arith.constant 0 : index
    %c0_26 = arith.constant 0 : index
    %c0_27 = arith.constant 0 : index
    %57 = vector.load %arg7[%c0_24, %c0_25, %c0_26, %c0_27] : memref<2x4x8x32xbf16, #tpu.memory_space<vmem>>, vector<1x4x8x32xbf16>
    %58 = vector.shape_cast %57 : vector<1x4x8x32xbf16> to vector<4x8x32xbf16>
    "tpu.trace_start"() <{level = 10 : i32, message = "hsd,hdn->hsn"}> : () -> ()
    %cst_28 = arith.constant dense<0.000000e+00> : vector<4x8x32xf32>
    %59 = tpu.matmul %56, %58, %cst_28 {dimension_numbers = #tpu.dot_dimension_numbers<[2], [1], [1], [2], [0, 0, 0, 1, 1, 2], [0], [0]>} : vector<4x8x8xbf16>, vector<4x8x32xbf16>, vector<4x8x32xf32> -> vector<4x8x32xf32>
    "tpu.trace_stop"() : () -> ()
    %cst_29 = arith.constant dense<0.000000e+00> : vector<8x32xf32>
    %60 = vector.multi_reduction <add>, %59, %cst_29 [0] : vector<4x8x32xf32> to vector<8x32xf32>
    %c0_30 = arith.constant 0 : index
    %c0_31 = arith.constant 0 : index
    %c0_32 = arith.constant 0 : index
    %61 = vector.load %arg8[%c0_30, %c0_31, %c0_32] : memref<2x1x32xf32, #tpu.memory_space<vmem>>, vector<1x1x32xf32>
    %62 = vector.shape_cast %61 : vector<1x1x32xf32> to vector<1x32xf32>
    %63 = vector.broadcast %62 : vector<1x32xf32> to vector<8x32xf32>
    %64 = arith.addf %60, %63 : vector<8x32xf32>
    %65 = arith.addf %14, %64 : vector<8x32xf32>
    %c0_33 = arith.constant 0 : index
    %c0_34 = arith.constant 0 : index
    %c0_35 = arith.constant 0 : index
    %66 = vector.load %arg13[%c0_33, %c0_34, %c0_35] : memref<2x1x32xf32, #tpu.memory_space<vmem>>, vector<1x1x32xf32>
    %67 = vector.shape_cast %66 : vector<1x1x32xf32> to vector<1x32xf32>
    %c0_36 = arith.constant 0 : index
    %c0_37 = arith.constant 0 : index
    %c0_38 = arith.constant 0 : index
    %68 = vector.load %arg14[%c0_36, %c0_37, %c0_38] : memref<2x1x32xf32, #tpu.memory_space<vmem>>, vector<1x1x32xf32>
    %69 = vector.shape_cast %68 : vector<1x1x32xf32> to vector<1x32xf32>
    %cst_39 = arith.constant dense<0.000000e+00> : vector<8xf32>
    %70 = vector.multi_reduction <add>, %65, %cst_39 [1] : vector<8x32xf32> to vector<8xf32>
    %71 = vector.shape_cast %70 : vector<8xf32> to vector<8x1xf32>
    %cst_40 = arith.constant 3.200000e+01 : f32
    %72 = vector.broadcast %cst_40 : f32 to vector<8x1xf32>
    %73 = arith.divf %71, %72 : vector<8x1xf32>
    %74 = vector.broadcast %73 : vector<8x1xf32> to vector<8x32xf32>
    %75 = arith.subf %65, %74 : vector<8x32xf32>
    %76 = arith.mulf %75, %75 : vector<8x32xf32>
    %cst_41 = arith.constant dense<0.000000e+00> : vector<8xf32>
    %77 = vector.multi_reduction <add>, %76, %cst_41 [1] : vector<8x32xf32> to vector<8xf32>
    %78 = vector.shape_cast %77 : vector<8xf32> to vector<8x1xf32>
    %cst_42 = arith.constant 3.200000e+01 : f32
    %79 = vector.broadcast %cst_42 : f32 to vector<8x1xf32>
    %80 = arith.divf %78, %79 : vector<8x1xf32>
    %81 = vector.broadcast %73 : vector<8x1xf32> to vector<8x32xf32>
    %82 = arith.subf %65, %81 : vector<8x32xf32>
    %cst_43 = arith.constant 9.99999974E-6 : f32
    %83 = vector.broadcast %cst_43 : f32 to vector<8x1xf32>
    %84 = arith.addf %80, %83 : vector<8x1xf32>
    %85 = math.rsqrt %84 : vector<8x1xf32>
    %86 = vector.broadcast %85 : vector<8x1xf32> to vector<8x32xf32>
    %87 = arith.mulf %82, %86 : vector<8x32xf32>
    %88 = vector.broadcast %67 : vector<1x32xf32> to vector<8x32xf32>
    %89 = arith.mulf %87, %88 : vector<8x32xf32>
    %90 = vector.broadcast %69 : vector<1x32xf32> to vector<8x32xf32>
    %91 = arith.addf %89, %90 : vector<8x32xf32>
    %92 = arith.truncf %91 : vector<8x32xf32> to vector<8x32xbf16>
    %c0_44 = arith.constant 0 : index
    %c0_45 = arith.constant 0 : index
    %c0_46 = arith.constant 0 : index
    %93 = vector.load %arg9[%c0_44, %c0_45, %c0_46] : memref<2x32x32xbf16, #tpu.memory_space<vmem>>, vector<1x32x32xbf16>
    %94 = vector.shape_cast %93 : vector<1x32x32xbf16> to vector<32x32xbf16>
    %cst_47 = arith.constant dense<0.000000e+00> : vector<8x32xf32>
    %95 = tpu.matmul %92, %94, %cst_47 {dimension_numbers = #tpu.dot_dimension_numbers<[1], [0], [0], [1], [0, 0, 1, 1], [], []>} : vector<8x32xbf16>, vector<32x32xbf16>, vector<8x32xf32> -> vector<8x32xf32>
    %c0_48 = arith.constant 0 : index
    %c0_49 = arith.constant 0 : index
    %c0_50 = arith.constant 0 : index
    %96 = vector.load %arg10[%c0_48, %c0_49, %c0_50] : memref<2x1x32xf32, #tpu.memory_space<vmem>>, vector<1x1x32xf32>
    %97 = vector.shape_cast %96 : vector<1x1x32xf32> to vector<1x32xf32>
    %98 = vector.broadcast %97 : vector<1x32xf32> to vector<8x32xf32>
    %99 = arith.addf %95, %98 : vector<8x32xf32>
    %100 = arith.negf %99 : vector<8x32xf32>
    %101 = math.exp %100 : vector<8x32xf32>
    %cst_51 = arith.constant 1.000000e+00 : f32
    %102 = vector.broadcast %cst_51 : f32 to vector<8x32xf32>
    %103 = arith.addf %102, %101 : vector<8x32xf32>
    %104 = arith.divf %102, %103 : vector<8x32xf32>
    %105 = arith.mulf %99, %104 : vector<8x32xf32>
    %106 = arith.truncf %105 : vector<8x32xf32> to vector<8x32xbf16>
    %c0_52 = arith.constant 0 : index
    %c0_53 = arith.constant 0 : index
    %c0_54 = arith.constant 0 : index
    %107 = vector.load %arg11[%c0_52, %c0_53, %c0_54] : memref<2x32x32xbf16, #tpu.memory_space<vmem>>, vector<1x32x32xbf16>
    %108 = vector.shape_cast %107 : vector<1x32x32xbf16> to vector<32x32xbf16>
    %cst_55 = arith.constant dense<0.000000e+00> : vector<8x32xf32>
    %109 = tpu.matmul %106, %108, %cst_55 {dimension_numbers = #tpu.dot_dimension_numbers<[1], [0], [0], [1], [0, 0, 1, 1], [], []>} : vector<8x32xbf16>, vector<32x32xbf16>, vector<8x32xf32> -> vector<8x32xf32>
    %c0_56 = arith.constant 0 : index
    %c0_57 = arith.constant 0 : index
    %c0_58 = arith.constant 0 : index
    %110 = vector.load %arg12[%c0_56, %c0_57, %c0_58] : memref<2x1x32xf32, #tpu.memory_space<vmem>>, vector<1x1x32xf32>
    %111 = vector.shape_cast %110 : vector<1x1x32xf32> to vector<1x32xf32>
    %112 = vector.broadcast %111 : vector<1x32xf32> to vector<8x32xf32>
    %113 = arith.addf %109, %112 : vector<8x32xf32>
    %114 = arith.addf %91, %113 : vector<8x32xf32>
    %c0_59 = arith.constant 0 : index
    %c0_60 = arith.constant 0 : index
    %c0_61 = arith.constant 0 : index
    %115 = vector.load %arg15[%c0_59, %c0_60, %c0_61] : memref<2x1x32xf32, #tpu.memory_space<vmem>>, vector<1x1x32xf32>
    %116 = vector.shape_cast %115 : vector<1x1x32xf32> to vector<1x32xf32>
    %c0_62 = arith.constant 0 : index
    %c0_63 = arith.constant 0 : index
    %c0_64 = arith.constant 0 : index
    %117 = vector.load %arg16[%c0_62, %c0_63, %c0_64] : memref<2x1x32xf32, #tpu.memory_space<vmem>>, vector<1x1x32xf32>
    %118 = vector.shape_cast %117 : vector<1x1x32xf32> to vector<1x32xf32>
    %cst_65 = arith.constant dense<0.000000e+00> : vector<8xf32>
    %119 = vector.multi_reduction <add>, %114, %cst_65 [1] : vector<8x32xf32> to vector<8xf32>
    %120 = vector.shape_cast %119 : vector<8xf32> to vector<8x1xf32>
    %cst_66 = arith.constant 3.200000e+01 : f32
    %121 = vector.broadcast %cst_66 : f32 to vector<8x1xf32>
    %122 = arith.divf %120, %121 : vector<8x1xf32>
    %123 = vector.broadcast %122 : vector<8x1xf32> to vector<8x32xf32>
    %124 = arith.subf %114, %123 : vector<8x32xf32>
    %125 = arith.mulf %124, %124 : vector<8x32xf32>
    %cst_67 = arith.constant dense<0.000000e+00> : vector<8xf32>
    %126 = vector.multi_reduction <add>, %125, %cst_67 [1] : vector<8x32xf32> to vector<8xf32>
    %127 = vector.shape_cast %126 : vector<8xf32> to vector<8x1xf32>
    %cst_68 = arith.constant 3.200000e+01 : f32
    %128 = vector.broadcast %cst_68 : f32 to vector<8x1xf32>
    %129 = arith.divf %127, %128 : vector<8x1xf32>
    %130 = vector.broadcast %122 : vector<8x1xf32> to vector<8x32xf32>
    %131 = arith.subf %114, %130 : vector<8x32xf32>
    %cst_69 = arith.constant 9.99999974E-6 : f32
    %132 = vector.broadcast %cst_69 : f32 to vector<8x1xf32>
    %133 = arith.addf %129, %132 : vector<8x1xf32>
    %134 = math.rsqrt %133 : vector<8x1xf32>
    %135 = vector.broadcast %134 : vector<8x1xf32> to vector<8x32xf32>
    %136 = arith.mulf %131, %135 : vector<8x32xf32>
    %137 = vector.broadcast %116 : vector<1x32xf32> to vector<8x32xf32>
    %138 = arith.mulf %136, %137 : vector<8x32xf32>
    %139 = vector.broadcast %118 : vector<1x32xf32> to vector<8x32xf32>
    %140 = arith.addf %138, %139 : vector<8x32xf32>
    %141 = arith.truncf %140 : vector<8x32xf32> to vector<8x32xbf16>
    %142 = vector.shape_cast %141 : vector<8x32xbf16> to vector<1x8x32xbf16>
    %143 = vector.shape_cast %142 : vector<1x8x32xbf16> to vector<1x8x32xbf16>
    %144 = vector.broadcast %143 : vector<1x8x32xbf16> to vector<12x8x32xbf16>
    %c1 = arith.constant 1 : index
    %c0_70 = arith.constant 0 : index
    %c0_71 = arith.constant 0 : index
    %c0_72 = arith.constant 0 : index
    %145 = vector.load %arg5[%c1, %c0_70, %c0_71, %c0_72] : memref<2x12x32x8xbf16, #tpu.memory_space<vmem>>, vector<1x12x32x8xbf16>
    %146 = vector.shape_cast %145 : vector<1x12x32x8xbf16> to vector<12x32x8xbf16>
    "tpu.trace_start"() <{level = 10 : i32, message = "hsd,hdk->hsk"}> : () -> ()
    %cst_73 = arith.constant dense<0.000000e+00> : vector<12x8x8xf32>
    %147 = tpu.matmul %144, %146, %cst_73 {dimension_numbers = #tpu.dot_dimension_numbers<[2], [1], [1], [2], [0, 0, 0, 1, 1, 2], [0], [0]>} : vector<12x8x32xbf16>, vector<12x32x8xbf16>, vector<12x8x8xf32> -> vector<12x8x8xf32>
    "tpu.trace_stop"() : () -> ()
    %c1_74 = arith.constant 1 : index
    %c0_75 = arith.constant 0 : index
    %c0_76 = arith.constant 0 : index
    %c0_77 = arith.constant 0 : index
    %148 = vector.load %arg6[%c1_74, %c0_75, %c0_76, %c0_77] : memref<2x12x1x8xf32, #tpu.memory_space<vmem>>, vector<1x12x1x8xf32>
    %149 = vector.shape_cast %148 : vector<1x12x1x8xf32> to vector<12x1x8xf32>
    %150 = vector.broadcast %149 : vector<12x1x8xf32> to vector<12x8x8xf32>
    %151 = arith.addf %147, %150 : vector<12x8x8xf32>
    %152 = vector.extract_strided_slice %151 {offsets = [0, 0, 0], sizes = [4, 8, 8], strides = [1, 1, 1]} : vector<12x8x8xf32> to vector<4x8x8xf32>
    %cst_78 = arith.constant 0.353553385 : f32
    %153 = vector.broadcast %cst_78 : f32 to vector<4x8x8xf32>
    %154 = arith.mulf %152, %153 : vector<4x8x8xf32>
    %155 = vector.extract_strided_slice %151 {offsets = [4, 0, 0], sizes = [4, 8, 8], strides = [1, 1, 1]} : vector<12x8x8xf32> to vector<4x8x8xf32>
    %156 = vector.extract_strided_slice %151 {offsets = [8, 0, 0], sizes = [4, 8, 8], strides = [1, 1, 1]} : vector<12x8x8xf32> to vector<4x8x8xf32>
    %157 = arith.truncf %154 : vector<4x8x8xf32> to vector<4x8x8xbf16>
    %158 = arith.truncf %155 : vector<4x8x8xf32> to vector<4x8x8xbf16>
    "tpu.trace_start"() <{level = 10 : i32, message = "hqd,hkd->hqk"}> : () -> ()
    %cst_79 = arith.constant dense<0.000000e+00> : vector<4x8x8xf32>
    %159 = tpu.matmul %157, %158, %cst_79 {dimension_numbers = #tpu.dot_dimension_numbers<[2], [2], [1], [1], [0, 0, 0, 1, 1, 1], [0], [0]>} : vector<4x8x8xbf16>, vector<4x8x8xbf16>, vector<4x8x8xf32> -> vector<4x8x8xf32>
    "tpu.trace_stop"() : () -> ()
    %160 = vector.shape_cast %20 : vector<8x8xf32> to vector<1x8x8xf32>
    %161 = vector.broadcast %160 : vector<1x8x8xf32> to vector<4x8x8xf32>
    %162 = arith.addf %159, %161 : vector<4x8x8xf32>
    %cst_80 = arith.constant dense<0xFF800000> : vector<4x8xf32>
    %163 = vector.multi_reduction <maximumf>, %162, %cst_80 [2] : vector<4x8x8xf32> to vector<4x8xf32>
    %164 = vector.shape_cast %163 : vector<4x8xf32> to vector<4x8x1xf32>
    %165 = vector.broadcast %164 : vector<4x8x1xf32> to vector<4x8x8xf32>
    %166 = arith.subf %162, %165 : vector<4x8x8xf32>
    %167 = math.exp %166 : vector<4x8x8xf32>
    %cst_81 = arith.constant dense<0.000000e+00> : vector<4x8xf32>
    %168 = vector.multi_reduction <add>, %167, %cst_81 [2] : vector<4x8x8xf32> to vector<4x8xf32>
    %169 = vector.shape_cast %168 : vector<4x8xf32> to vector<4x8x1xf32>
    %170 = tpu.reciprocal %169 {approx = true} : vector<4x8x1xf32> -> vector<4x8x1xf32>
    %171 = vector.broadcast %170 : vector<4x8x1xf32> to vector<4x8x8xf32>
    %172 = arith.mulf %167, %171 : vector<4x8x8xf32>
    %173 = arith.truncf %172 : vector<4x8x8xf32> to vector<4x8x8xbf16>
    %174 = arith.truncf %156 : vector<4x8x8xf32> to vector<4x8x8xbf16>
    "tpu.trace_start"() <{level = 10 : i32, message = "hqk,hkd->hqd"}> : () -> ()
    %cst_82 = arith.constant dense<0.000000e+00> : vector<4x8x8xf32>
    %175 = tpu.matmul %173, %174, %cst_82 {dimension_numbers = #tpu.dot_dimension_numbers<[2], [1], [1], [2], [0, 0, 0, 1, 1, 2], [0], [0]>} : vector<4x8x8xbf16>, vector<4x8x8xbf16>, vector<4x8x8xf32> -> vector<4x8x8xf32>
    "tpu.trace_stop"() : () -> ()
    %176 = arith.truncf %175 : vector<4x8x8xf32> to vector<4x8x8xbf16>
    %c1_83 = arith.constant 1 : index
    %c0_84 = arith.constant 0 : index
    %c0_85 = arith.constant 0 : index
    %c0_86 = arith.constant 0 : index
    %177 = vector.load %arg7[%c1_83, %c0_84, %c0_85, %c0_86] : memref<2x4x8x32xbf16, #tpu.memory_space<vmem>>, vector<1x4x8x32xbf16>
    %178 = vector.shape_cast %177 : vector<1x4x8x32xbf16> to vector<4x8x32xbf16>
    "tpu.trace_start"() <{level = 10 : i32, message = "hsd,hdn->hsn"}> : () -> ()
    %cst_87 = arith.constant dense<0.000000e+00> : vector<4x8x32xf32>
    %179 = tpu.matmul %176, %178, %cst_87 {dimension_numbers = #tpu.dot_dimension_numbers<[2], [1], [1], [2], [0, 0, 0, 1, 1, 2], [0], [0]>} : vector<4x8x8xbf16>, vector<4x8x32xbf16>, vector<4x8x32xf32> -> vector<4x8x32xf32>
    "tpu.trace_stop"() : () -> ()
    %cst_88 = arith.constant dense<0.000000e+00> : vector<8x32xf32>
    %180 = vector.multi_reduction <add>, %179, %cst_88 [0] : vector<4x8x32xf32> to vector<8x32xf32>
    %c1_89 = arith.constant 1 : index
    %c0_90 = arith.constant 0 : index
    %c0_91 = arith.constant 0 : index
    %181 = vector.load %arg8[%c1_89, %c0_90, %c0_91] : memref<2x1x32xf32, #tpu.memory_space<vmem>>, vector<1x1x32xf32>
    %182 = vector.shape_cast %181 : vector<1x1x32xf32> to vector<1x32xf32>
    %183 = vector.broadcast %182 : vector<1x32xf32> to vector<8x32xf32>
    %184 = arith.addf %180, %183 : vector<8x32xf32>
    %185 = arith.addf %140, %184 : vector<8x32xf32>
    %c1_92 = arith.constant 1 : index
    %c0_93 = arith.constant 0 : index
    %c0_94 = arith.constant 0 : index
    %186 = vector.load %arg13[%c1_92, %c0_93, %c0_94] : memref<2x1x32xf32, #tpu.memory_space<vmem>>, vector<1x1x32xf32>
    %187 = vector.shape_cast %186 : vector<1x1x32xf32> to vector<1x32xf32>
    %c1_95 = arith.constant 1 : index
    %c0_96 = arith.constant 0 : index
    %c0_97 = arith.constant 0 : index
    %188 = vector.load %arg14[%c1_95, %c0_96, %c0_97] : memref<2x1x32xf32, #tpu.memory_space<vmem>>, vector<1x1x32xf32>
    %189 = vector.shape_cast %188 : vector<1x1x32xf32> to vector<1x32xf32>
    %cst_98 = arith.constant dense<0.000000e+00> : vector<8xf32>
    %190 = vector.multi_reduction <add>, %185, %cst_98 [1] : vector<8x32xf32> to vector<8xf32>
    %191 = vector.shape_cast %190 : vector<8xf32> to vector<8x1xf32>
    %cst_99 = arith.constant 3.200000e+01 : f32
    %192 = vector.broadcast %cst_99 : f32 to vector<8x1xf32>
    %193 = arith.divf %191, %192 : vector<8x1xf32>
    %194 = vector.broadcast %193 : vector<8x1xf32> to vector<8x32xf32>
    %195 = arith.subf %185, %194 : vector<8x32xf32>
    %196 = arith.mulf %195, %195 : vector<8x32xf32>
    %cst_100 = arith.constant dense<0.000000e+00> : vector<8xf32>
    %197 = vector.multi_reduction <add>, %196, %cst_100 [1] : vector<8x32xf32> to vector<8xf32>
    %198 = vector.shape_cast %197 : vector<8xf32> to vector<8x1xf32>
    %cst_101 = arith.constant 3.200000e+01 : f32
    %199 = vector.broadcast %cst_101 : f32 to vector<8x1xf32>
    %200 = arith.divf %198, %199 : vector<8x1xf32>
    %201 = vector.broadcast %193 : vector<8x1xf32> to vector<8x32xf32>
    %202 = arith.subf %185, %201 : vector<8x32xf32>
    %cst_102 = arith.constant 9.99999974E-6 : f32
    %203 = vector.broadcast %cst_102 : f32 to vector<8x1xf32>
    %204 = arith.addf %200, %203 : vector<8x1xf32>
    %205 = math.rsqrt %204 : vector<8x1xf32>
    %206 = vector.broadcast %205 : vector<8x1xf32> to vector<8x32xf32>
    %207 = arith.mulf %202, %206 : vector<8x32xf32>
    %208 = vector.broadcast %187 : vector<1x32xf32> to vector<8x32xf32>
    %209 = arith.mulf %207, %208 : vector<8x32xf32>
    %210 = vector.broadcast %189 : vector<1x32xf32> to vector<8x32xf32>
    %211 = arith.addf %209, %210 : vector<8x32xf32>
    %212 = arith.truncf %211 : vector<8x32xf32> to vector<8x32xbf16>
    %c1_103 = arith.constant 1 : index
    %c0_104 = arith.constant 0 : index
    %c0_105 = arith.constant 0 : index
    %213 = vector.load %arg9[%c1_103, %c0_104, %c0_105] : memref<2x32x32xbf16, #tpu.memory_space<vmem>>, vector<1x32x32xbf16>
    %214 = vector.shape_cast %213 : vector<1x32x32xbf16> to vector<32x32xbf16>
    %cst_106 = arith.constant dense<0.000000e+00> : vector<8x32xf32>
    %215 = tpu.matmul %212, %214, %cst_106 {dimension_numbers = #tpu.dot_dimension_numbers<[1], [0], [0], [1], [0, 0, 1, 1], [], []>} : vector<8x32xbf16>, vector<32x32xbf16>, vector<8x32xf32> -> vector<8x32xf32>
    %c1_107 = arith.constant 1 : index
    %c0_108 = arith.constant 0 : index
    %c0_109 = arith.constant 0 : index
    %216 = vector.load %arg10[%c1_107, %c0_108, %c0_109] : memref<2x1x32xf32, #tpu.memory_space<vmem>>, vector<1x1x32xf32>
    %217 = vector.shape_cast %216 : vector<1x1x32xf32> to vector<1x32xf32>
    %218 = vector.broadcast %217 : vector<1x32xf32> to vector<8x32xf32>
    %219 = arith.addf %215, %218 : vector<8x32xf32>
    %220 = arith.negf %219 : vector<8x32xf32>
    %221 = math.exp %220 : vector<8x32xf32>
    %cst_110 = arith.constant 1.000000e+00 : f32
    %222 = vector.broadcast %cst_110 : f32 to vector<8x32xf32>
    %223 = arith.addf %222, %221 : vector<8x32xf32>
    %224 = arith.divf %222, %223 : vector<8x32xf32>
    %225 = arith.mulf %219, %224 : vector<8x32xf32>
    %226 = arith.truncf %225 : vector<8x32xf32> to vector<8x32xbf16>
    %c1_111 = arith.constant 1 : index
    %c0_112 = arith.constant 0 : index
    %c0_113 = arith.constant 0 : index
    %227 = vector.load %arg11[%c1_111, %c0_112, %c0_113] : memref<2x32x32xbf16, #tpu.memory_space<vmem>>, vector<1x32x32xbf16>
    %228 = vector.shape_cast %227 : vector<1x32x32xbf16> to vector<32x32xbf16>
    %cst_114 = arith.constant dense<0.000000e+00> : vector<8x32xf32>
    %229 = tpu.matmul %226, %228, %cst_114 {dimension_numbers = #tpu.dot_dimension_numbers<[1], [0], [0], [1], [0, 0, 1, 1], [], []>} : vector<8x32xbf16>, vector<32x32xbf16>, vector<8x32xf32> -> vector<8x32xf32>
    %c1_115 = arith.constant 1 : index
    %c0_116 = arith.constant 0 : index
    %c0_117 = arith.constant 0 : index
    %230 = vector.load %arg12[%c1_115, %c0_116, %c0_117] : memref<2x1x32xf32, #tpu.memory_space<vmem>>, vector<1x1x32xf32>
    %231 = vector.shape_cast %230 : vector<1x1x32xf32> to vector<1x32xf32>
    %232 = vector.broadcast %231 : vector<1x32xf32> to vector<8x32xf32>
    %233 = arith.addf %229, %232 : vector<8x32xf32>
    %234 = arith.addf %211, %233 : vector<8x32xf32>
    %c1_118 = arith.constant 1 : index
    %c0_119 = arith.constant 0 : index
    %c0_120 = arith.constant 0 : index
    %235 = vector.load %arg15[%c1_118, %c0_119, %c0_120] : memref<2x1x32xf32, #tpu.memory_space<vmem>>, vector<1x1x32xf32>
    %236 = vector.shape_cast %235 : vector<1x1x32xf32> to vector<1x32xf32>
    %c1_121 = arith.constant 1 : index
    %c0_122 = arith.constant 0 : index
    %c0_123 = arith.constant 0 : index
    %237 = vector.load %arg16[%c1_121, %c0_122, %c0_123] : memref<2x1x32xf32, #tpu.memory_space<vmem>>, vector<1x1x32xf32>
    %238 = vector.shape_cast %237 : vector<1x1x32xf32> to vector<1x32xf32>
    %cst_124 = arith.constant dense<0.000000e+00> : vector<8xf32>
    %239 = vector.multi_reduction <add>, %234, %cst_124 [1] : vector<8x32xf32> to vector<8xf32>
    %240 = vector.shape_cast %239 : vector<8xf32> to vector<8x1xf32>
    %cst_125 = arith.constant 3.200000e+01 : f32
    %241 = vector.broadcast %cst_125 : f32 to vector<8x1xf32>
    %242 = arith.divf %240, %241 : vector<8x1xf32>
    %243 = vector.broadcast %242 : vector<8x1xf32> to vector<8x32xf32>
    %244 = arith.subf %234, %243 : vector<8x32xf32>
    %245 = arith.mulf %244, %244 : vector<8x32xf32>
    %cst_126 = arith.constant dense<0.000000e+00> : vector<8xf32>
    %246 = vector.multi_reduction <add>, %245, %cst_126 [1] : vector<8x32xf32> to vector<8xf32>
    %247 = vector.shape_cast %246 : vector<8xf32> to vector<8x1xf32>
    %cst_127 = arith.constant 3.200000e+01 : f32
    %248 = vector.broadcast %cst_127 : f32 to vector<8x1xf32>
    %249 = arith.divf %247, %248 : vector<8x1xf32>
    %250 = vector.broadcast %242 : vector<8x1xf32> to vector<8x32xf32>
    %251 = arith.subf %234, %250 : vector<8x32xf32>
    %cst_128 = arith.constant 9.99999974E-6 : f32
    %252 = vector.broadcast %cst_128 : f32 to vector<8x1xf32>
    %253 = arith.addf %249, %252 : vector<8x1xf32>
    %254 = math.rsqrt %253 : vector<8x1xf32>
    %255 = vector.broadcast %254 : vector<8x1xf32> to vector<8x32xf32>
    %256 = arith.mulf %251, %255 : vector<8x32xf32>
    %257 = vector.broadcast %236 : vector<1x32xf32> to vector<8x32xf32>
    %258 = arith.mulf %256, %257 : vector<8x32xf32>
    %259 = vector.broadcast %238 : vector<1x32xf32> to vector<8x32xf32>
    %260 = arith.addf %258, %259 : vector<8x32xf32>
    %261 = arith.negf %260 : vector<8x32xf32>
    %262 = math.exp %261 : vector<8x32xf32>
    %cst_129 = arith.constant 1.000000e+00 : f32
    %263 = vector.broadcast %cst_129 : f32 to vector<8x32xf32>
    %264 = arith.addf %263, %262 : vector<8x32xf32>
    %265 = arith.divf %263, %264 : vector<8x32xf32>
    %266 = arith.mulf %260, %265 : vector<8x32xf32>
    %267 = arith.truncf %266 : vector<8x32xf32> to vector<8x32xbf16>
    %c0_130 = arith.constant 0 : index
    %c0_131 = arith.constant 0 : index
    %268 = vector.load %arg17[%c0_130, %c0_131] : memref<32x128xbf16, #tpu.memory_space<vmem>>, vector<32x128xbf16>
    %cst_132 = arith.constant dense<0.000000e+00> : vector<8x128xf32>
    %269 = tpu.matmul %267, %268, %cst_132 {dimension_numbers = #tpu.dot_dimension_numbers<[1], [0], [0], [1], [0, 0, 1, 1], [], []>} : vector<8x32xbf16>, vector<32x128xbf16>, vector<8x128xf32> -> vector<8x128xf32>
    %c0_133 = arith.constant 0 : index
    %c0_134 = arith.constant 0 : index
    %270 = vector.load %arg18[%c0_133, %c0_134] : memref<1x128xf32, #tpu.memory_space<vmem>>, vector<1x128xf32>
    %271 = vector.broadcast %270 : vector<1x128xf32> to vector<8x128xf32>
    %272 = arith.addf %269, %271 : vector<8x128xf32>
    %c0_135 = arith.constant 0 : index
    %c0_136 = arith.constant 0 : index
    %273 = vector.load %arg19[%c0_135, %c0_136] : memref<8x128xf32, #tpu.memory_space<vmem>>, vector<8x128xf32>
    tpu.vector_store %arg19[%c0_135, %c0_136], %272 {strides = array<i32>} : memref<8x128xf32, #tpu.memory_space<vmem>>, vector<8x128xf32>,
    return
  }
  func.func @transform_0(%arg0: i32) -> (i32, i32) {
    %c0_i32 = arith.constant 0 : i32
    %c0_i32_0 = arith.constant 0 : i32
    %c0_i32_1 = arith.constant 0 : i32
    return %c0_i32, %c0_i32_0 : i32, i32
  }
  func.func @transform_1(%arg0: i32) -> (i32, i32) {
    %c0_i32 = arith.constant 0 : i32
    %c0_i32_0 = arith.constant 0 : i32
    %c0_i32_1 = arith.constant 0 : i32
    return %c0_i32, %c0_i32_0 : i32, i32
  }
  func.func @transform_2(%arg0: i32) -> (i32, i32) {
    %c0_i32 = arith.constant 0 : i32
    %c0_i32_0 = arith.constant 0 : i32
    %c0_i32_1 = arith.constant 0 : i32
    return %c0_i32, %c0_i32_0 : i32, i32
  }
  func.func @transform_3(%arg0: i32) -> (i32, i32) {
    %c0_i32 = arith.constant 0 : i32
    %c0_i32_0 = arith.constant 0 : i32
    %c0_i32_1 = arith.constant 0 : i32
    return %c0_i32, %c0_i32_0 : i32, i32
  }
  func.func @transform_4(%arg0: i32) -> (i32, i32, i32, i32) {
    %c0_i32 = arith.constant 0 : i32
    %c0_i32_0 = arith.constant 0 : i32
    %c0_i32_1 = arith.constant 0 : i32
    %c0_i32_2 = arith.constant 0 : i32
    %c0_i32_3 = arith.constant 0 : i32
    return %c0_i32, %c0_i32_0, %c0_i32_1, %c0_i32_2 : i32, i32, i32, i32
  }
  func.func @transform_5(%arg0: i32) -> (i32, i32, i32, i32) {
    %c0_i32 = arith.constant 0 : i32
    %c0_i32_0 = arith.constant 0 : i32
    %c0_i32_1 = arith.constant 0 : i32
    %c0_i32_2 = arith.constant 0 : i32
    %c0_i32_3 = arith.constant 0 : i32
    return %c0_i32, %c0_i32_0, %c0_i32_1, %c0_i32_2 : i32, i32, i32, i32
  }
  func.func @transform_6(%arg0: i32) -> (i32, i32, i32, i32) {
    %c0_i32 = arith.constant 0 : i32
    %c0_i32_0 = arith.constant 0 : i32
    %c0_i32_1 = arith.constant 0 : i32
    %c0_i32_2 = arith.constant 0 : i32
    %c0_i32_3 = arith.constant 0 : i32
    return %c0_i32, %c0_i32_0, %c0_i32_1, %c0_i32_2 : i32, i32, i32, i32
  }
  func.func @transform_7(%arg0: i32) -> (i32, i32, i32) {
    %c0_i32 = arith.constant 0 : i32
    %c0_i32_0 = arith.constant 0 : i32
    %c0_i32_1 = arith.constant 0 : i32
    %c0_i32_2 = arith.constant 0 : i32
    return %c0_i32, %c0_i32_0, %c0_i32_1 : i32, i32, i32
  }
  func.func @transform_8(%arg0: i32) -> (i32, i32, i32) {
    %c0_i32 = arith.constant 0 : i32
    %c0_i32_0 = arith.constant 0 : i32
    %c0_i32_1 = arith.constant 0 : i32
    %c0_i32_2 = arith.constant 0 : i32
    return %c0_i32, %c0_i32_0, %c0_i32_1 : i32, i32, i32
  }
  func.func @transform_9(%arg0: i32) -> (i32, i32, i32) {
    %c0_i32 = arith.constant 0 : i32
    %c0_i32_0 = arith.constant 0 : i32
    %c0_i32_1 = arith.constant 0 : i32
    %c0_i32_2 = arith.constant 0 : i32
    return %c0_i32, %c0_i32_0, %c0_i32_1 : i32, i32, i32
  }
  func.func @transform_10(%arg0: i32) -> (i32, i32, i32) {
    %c0_i32 = arith.constant 0 : i32
    %c0_i32_0 = arith.constant 0 : i32
    %c0_i32_1 = arith.constant 0 : i32
    %c0_i32_2 = arith.constant 0 : i32
    return %c0_i32, %c0_i32_0, %c0_i32_1 : i32, i32, i32
  }
  func.func @transform_11(%arg0: i32) -> (i32, i32, i32) {
    %c0_i32 = arith.constant 0 : i32
    %c0_i32_0 = arith.constant 0 : i32
    %c0_i32_1 = arith.constant 0 : i32
    %c0_i32_2 = arith.constant 0 : i32
    return %c0_i32, %c0_i32_0, %c0_i32_1 : i32, i32, i32
  }
  func.func @transform_12(%arg0: i32) -> (i32, i32, i32) {
    %c0_i32 = arith.constant 0 : i32
    %c0_i32_0 = arith.constant 0 : i32
    %c0_i32_1 = arith.constant 0 : i32
    %c0_i32_2 = arith.constant 0 : i32
    return %c0_i32, %c0_i32_0, %c0_i32_1 : i32, i32, i32
  }
  func.func @transform_13(%arg0: i32) -> (i32, i32, i32) {
    %c0_i32 = arith.constant 0 : i32
    %c0_i32_0 = arith.constant 0 : i32
    %c0_i32_1 = arith.constant 0 : i32
    %c0_i32_2 = arith.constant 0 : i32
    return %c0_i32, %c0_i32_0, %c0_i32_1 : i32, i32, i32
  }
  func.func @transform_14(%arg0: i32) -> (i32, i32, i32) {
    %c0_i32 = arith.constant 0 : i32
    %c0_i32_0 = arith.constant 0 : i32
    %c0_i32_1 = arith.constant 0 : i32
    %c0_i32_2 = arith.constant 0 : i32
    return %c0_i32, %c0_i32_0, %c0_i32_1 : i32, i32, i32
  }
  func.func @transform_15(%arg0: i32) -> (i32, i32, i32) {
    %c0_i32 = arith.constant 0 : i32
    %c0_i32_0 = arith.constant 0 : i32
    %c0_i32_1 = arith.constant 0 : i32
    %c0_i32_2 = arith.constant 0 : i32
    return %c0_i32, %c0_i32_0, %c0_i32_1 : i32, i32, i32
  }
  func.func @transform_16(%arg0: i32) -> (i32, i32) {
    %c0_i32 = arith.constant 0 : i32
    %c0_i32_0 = arith.constant 0 : i32
    %c0_i32_1 = arith.constant 0 : i32
    return %c0_i32, %c0_i32_0 : i32, i32
  }
  func.func @transform_17(%arg0: i32) -> (i32, i32) {
    %c0_i32 = arith.constant 0 : i32
    %c0_i32_0 = arith.constant 0 : i32
    %c0_i32_1 = arith.constant 0 : i32
    return %c0_i32, %c0_i32_0 : i32, i32
  }
  func.func @transform_18(%arg0: i32) -> (i32, i32) {
    %c0_i32 = arith.constant 0 : i32
    %c0_i32_0 = arith.constant 0 : i32
    %c0_i32_1 = arith.constant 0 : i32
    return %c0_i32, %c0_i32_0 : i32, i32
  }
}

</mosaic_0001>

<llo_original>
// kernel: tpu_custom_call.1
$region0: #{tpu_custom_call.1}
  #allocation0 [shape = 'u32[]', space=smem, size = 0x4, offset = 0x4, fixed_abs, tag = 'smem constant byte address 0x4 - core index']
  #allocation1 [shape = 'u32[144,128]{1,0:T(1,128)}', space=vmem, size = 0x12000, scoped, tag = 'internal scratch']
  %s0 = inlined_call_operand.vmem [shape: f32[8,16], index: 0, kind: input, shape index: {}]
  %s1 = inlined_call_operand.vmem [shape: f32[8,32], index: 1, kind: input, shape index: {}]
  %s2 = inlined_call_operand.vmem [shape: bf16[16,32], index: 2, kind: input, shape index: {}]
  %s3 = inlined_call_operand.vmem [shape: f32[1,32], index: 3, kind: input, shape index: {}]
  %s4 = inlined_call_operand.vmem [shape: bf16[2,12,32,8], index: 4, kind: input, shape index: {}]
  %s5 = inlined_call_operand.vmem [shape: f32[2,12,1,8], index: 5, kind: input, shape index: {}]
  %s6 = inlined_call_operand.vmem [shape: bf16[2,4,8,32], index: 6, kind: input, shape index: {}]
  %s7 = inlined_call_operand.vmem [shape: f32[2,1,32], index: 7, kind: input, shape index: {}]
  %s8 = inlined_call_operand.vmem [shape: bf16[2,32,32], index: 8, kind: input, shape index: {}]
  %s9 = inlined_call_operand.vmem [shape: f32[2,1,32], index: 9, kind: input, shape index: {}]
  %s10 = inlined_call_operand.vmem [shape: bf16[2,32,32], index: 10, kind: input, shape index: {}]
  %s11 = inlined_call_operand.vmem [shape: f32[2,1,32], index: 11, kind: input, shape index: {}]
  %s12 = inlined_call_operand.vmem [shape: f32[2,1,32], index: 12, kind: input, shape index: {}]
  %s13 = inlined_call_operand.vmem [shape: f32[2,1,32], index: 13, kind: input, shape index: {}]
  %s14 = inlined_call_operand.vmem [shape: f32[2,1,32], index: 14, kind: input, shape index: {}]
  %s15 = inlined_call_operand.vmem [shape: f32[2,1,32], index: 15, kind: input, shape index: {}]
  %s16 = inlined_call_operand.vmem [shape: bf16[32,128], index: 16, kind: input, shape index: {}]
  %s17 = inlined_call_operand.vmem [shape: f32[1,128], index: 17, kind: input, shape index: {}]
  %s18 = inlined_call_operand.hbm [shape: f32[8,128], index: 18, kind: output, shape index: {}]
  %s19 = sld [smem:[#allocation0]]
  $region82: #{tpu_custom_call.1} parent=0
    _
  %s21 = ssub.s32 1, %s19
  %s22 = scalar_select 0, %s21, %s19
  $region1: #{tpu_custom_call.1} parent=0
    #allocation2 [shape = 'u8[4096]{0}', space=vmem, size = 0x1000, scoped, tag = 'output window, operand 0, single buffered']
    #allocation3 [shape = 's32[1]{0}', space=sflag, size = 0x4, scoped, tag = 'scoped memory for tpu_custom_call.1']
    %23 = vsyncpa [#allocation3], 0
    // Predicated region
    $region2: #{tpu_custom_call.1} parent=1 // pred_check
      _
    $region3: #{tpu_custom_call.1} parent=1 // pred_check_branch
      %25 = sbr.rel (0) target = $region5
    $region4: #{tpu_custom_call.1} parent=1 // pred_region
      _
    $region5: #{tpu_custom_call.1} parent=1 // pred_fallthru
      _
    // Predicated region
    $region6: #{tpu_custom_call.1} parent=1 // pred_check
      _
    $region7: #{tpu_custom_call.1} parent=1 // pred_check_branch
      %27 = sbr.rel (0) target = $region9
    $region8: #{tpu_custom_call.1} parent=1 // pred_region
      _
    $region9: #{tpu_custom_call.1} parent=1 // pred_fallthru
      _
    // Predicated region
    $region10: #{tpu_custom_call.1} parent=1 // pred_check
      _
    $region11: #{tpu_custom_call.1} parent=1 // pred_check_branch
      %29 = sbr.rel (0) target = $region13
    $region12: #{tpu_custom_call.1} parent=1 // pred_region
      _
    $region13: #{tpu_custom_call.1} parent=1 // pred_fallthru
      _
    // Predicated region
    $region14: #{tpu_custom_call.1} parent=1 // pred_check
      _
    $region15: #{tpu_custom_call.1} parent=1 // pred_check_branch
      %31 = sbr.rel (0) target = $region17
    $region16: #{tpu_custom_call.1} parent=1 // pred_region
      _
    $region17: #{tpu_custom_call.1} parent=1 // pred_fallthru
      _
    // Predicated region
    $region18: #{tpu_custom_call.1} parent=1 // pred_check
      _
    $region19: #{tpu_custom_call.1} parent=1 // pred_check_branch
      %33 = sbr.rel (0) target = $region21
    $region20: #{tpu_custom_call.1} parent=1 // pred_region
      _
    $region21: #{tpu_custom_call.1} parent=1 // pred_fallthru
      _
    // Predicated region
    $region22: #{tpu_custom_call.1} parent=1 // pred_check
      _
    $region23: #{tpu_custom_call.1} parent=1 // pred_check_branch
      %35 = sbr.rel (0) target = $region25
    $region24: #{tpu_custom_call.1} parent=1 // pred_region
      _
    $region25: #{tpu_custom_call.1} parent=1 // pred_fallthru
      _
    // Predicated region
    $region26: #{tpu_custom_call.1} parent=1 // pred_check
      _
    $region27: #{tpu_custom_call.1} parent=1 // pred_check_branch
      %37 = sbr.rel (0) target = $region29
    $region28: #{tpu_custom_call.1} parent=1 // pred_region
      _
    $region29: #{tpu_custom_call.1} parent=1 // pred_fallthru
      _
    // Predicated region
    $region30: #{tpu_custom_call.1} parent=1 // pred_check
      _
    $region31: #{tpu_custom_call.1} parent=1 // pred_check_branch
      %39 = sbr.rel (0) target = $region33
    $region32: #{tpu_custom_call.1} parent=1 // pred_region
      _
    $region33: #{tpu_custom_call.1} parent=1 // pred_fallthru
      _
    // Predicated region
    $region34: #{tpu_custom_call.1} parent=1 // pred_check
      _
    $region35: #{tpu_custom_call.1} parent=1 // pred_check_branch
      %41 = sbr.rel (0) target = $region37
    $region36: #{tpu_custom_call.1} parent=1 // pred_region
      _
    $region37: #{tpu_custom_call.1} parent=1 // pred_fallthru
      _
    // Predicated region
    $region38: #{tpu_custom_call.1} parent=1 // pred_check
      _
    $region39: #{tpu_custom_call.1} parent=1 // pred_check_branch
      %43 = sbr.rel (0) target = $region41
    $region40: #{tpu_custom_call.1} parent=1 // pred_region
      _
    $region41: #{tpu_custom_call.1} parent=1 // pred_fallthru
      _
    // Predicated region
    $region42: #{tpu_custom_call.1} parent=1 // pred_check
      _
    $region43: #{tpu_custom_call.1} parent=1 // pred_check_branch
      %45 = sbr.rel (0) target = $region45
    $region44: #{tpu_custom_call.1} parent=1 // pred_region
      _
    $region45: #{tpu_custom_call.1} parent=1 // pred_fallthru
      _
    // Predicated region
    $region46: #{tpu_custom_call.1} parent=1 // pred_check
      _
    $region47: #{tpu_custom_call.1} parent=1 // pred_check_branch
      %47 = sbr.rel (0) target = $region49
    $region48: #{tpu_custom_call.1} parent=1 // pred_region
      _
    $region49: #{tpu_custom_call.1} parent=1 // pred_fallthru
      _
    // Predicated region
    $region50: #{tpu_custom_call.1} parent=1 // pred_check
      _
    $region51: #{tpu_custom_call.1} parent=1 // pred_check_branch
      %49 = sbr.rel (0) target = $region53
    $region52: #{tpu_custom_call.1} parent=1 // pred_region
      _
    $region53: #{tpu_custom_call.1} parent=1 // pred_fallthru
      _
    // Predicated region
    $region54: #{tpu_custom_call.1} parent=1 // pred_check
      _
    $region55: #{tpu_custom_call.1} parent=1 // pred_check_branch
      %51 = sbr.rel (0) target = $region57
    $region56: #{tpu_custom_call.1} parent=1 // pred_region
      _
    $region57: #{tpu_custom_call.1} parent=1 // pred_fallthru
      _
    // Predicated region
    $region58: #{tpu_custom_call.1} parent=1 // pred_check
      _
    $region59: #{tpu_custom_call.1} parent=1 // pred_check_branch
      %53 = sbr.rel (0) target = $region61
    $region60: #{tpu_custom_call.1} parent=1 // pred_region
      _
    $region61: #{tpu_custom_call.1} parent=1 // pred_fallthru
      _
    // Predicated region
    $region62: #{tpu_custom_call.1} parent=1 // pred_check
      _
    $region63: #{tpu_custom_call.1} parent=1 // pred_check_branch
      %55 = sbr.rel (0) target = $region65
    $region64: #{tpu_custom_call.1} parent=1 // pred_region
      _
    $region65: #{tpu_custom_call.1} parent=1 // pred_fallthru
      _
    // Predicated region
    $region66: #{tpu_custom_call.1} parent=1 // pred_check
      _
    $region67: #{tpu_custom_call.1} parent=1 // pred_check_branch
      %57 = sbr.rel (0) target = $region69
    $region68: #{tpu_custom_call.1} parent=1 // pred_region
      _
    $region69: #{tpu_custom_call.1} parent=1 // pred_fallthru
      _
    // Predicated region
    $region70: #{tpu_custom_call.1} parent=1 // pred_check
      _
    $region71: #{tpu_custom_call.1} parent=1 // pred_check_branch
      %59 = sbr.rel (0) target = $region73
    $region72: #{tpu_custom_call.1} parent=1 // pred_region
      _
    $region73: #{tpu_custom_call.1} parent=1 // pred_fallthru
      _
    %v61 = vld [vmem:[%s0] sm:$0xff]
    %v62 = vpack.c.bf16 %v61, %v61
    %v63 = vld [vmem:[%s2] sm:$0xf]
    %v64 = vld [vmem:[%s2 + $0x4] sm:$0xf]
    %v65 = vld [vmem:[%s3] sm:$0x1]
    %v67 = vlaneseq
    %v68 = vshrl.u32 %v67, 7
    %v69 = vsub.s32 0, %v68
    %v70 = vrot.slane %v65, %v69
    %v74 = vunpack.c.l.b16 %v63
    %v75 = vunpack.c.l.b16 %v64
    %v76 = vpack.c.b16 %v75, %v74
    %vm78 = vcmask 130048
    %v80 = vsel %vm78, %v62, 0
    %82 = vmatprep.subr.bf16.mxu0 0
    %83 = vmatpush1.bf16.msra.mxu0 %v76
    %84 = vmatprep.subr.bf16.mxu0 0
    %85 = vmatpush1.bf16.msra.mxu0 0
    %86 = vmatprep.subr.bf16.mxu0 0
    %87 = vmatpush1.bf16.msra.mxu0 0
    %88 = vmatprep.subr.bf16.mxu0 0
    %89 = vmatpush1.bf16.msra.mxu0 0
    %90 = vmatprep.subr.bf16.mxu0 0
    %91 = vmatpush1.bf16.msra.mxu0 0
    %92 = vmatprep.subr.bf16.mxu0 0
    %93 = vmatpush1.bf16.msra.mxu0 0
    %94 = vmatprep.subr.bf16.mxu0 0
    %95 = vmatpush1.bf16.msra.mxu0 0
    %96 = vmatprep.subr.bf16.mxu0 0
    %97 = vmatpush1.bf16.msra.mxu0 0
    %98 = vmatprep.subr.bf16.mxu0 0
    %99 = vmatpush1.bf16.msra.mxu0 0
    %100 = vmatprep.subr.bf16.mxu0 0
    %101 = vmatpush1.bf16.msra.mxu0 0
    %102 = vmatprep.subr.bf16.mxu0 0
    %103 = vmatpush1.bf16.msra.mxu0 0
    %104 = vmatprep.subr.bf16.mxu0 0
    %105 = vmatpush1.bf16.msra.mxu0 0
    %106 = vmatprep.subr.bf16.mxu0 0
    %107 = vmatpush1.bf16.msra.mxu0 0
    %108 = vmatprep.subr.bf16.mxu0 0
    %109 = vmatpush1.bf16.msra.mxu0 0
    %110 = vmatprep.subr.bf16.mxu0 0
    %111 = vmatpush1.bf16.msra.mxu0 0
    %112 = vmatprep.subr.bf16.mxu0 0
    %113 = vmatpush1.bf16.msra.mxu0 0
    %114 = vmatprep.mubr.bf16.mxu0 0
    %115 = vmatmul.mubr.bf16.gmra.mrb[0].mxu0 %v80
    %v116 = vpop.f32.mrb[0].mxu0
    %v117 = vadd.f32 %v70, %v116
    %v118 = vpop.f32.mrb[0].mxu0
    %v119 = vpop.f32.mrb[0].mxu0
    %v120 = vpop.f32.mrb[0].mxu0
    %121 = vdwg.mxu0
    %v122 = vxor.u32 %v117, 2147483648
    %v123 = vmul.f32 %v122, 1.442695
    %v124 = vpow.pop %v123
    %v125 = vadd.f32 %v124, 1.0
    %v126 = vrcp.pop %v125
    %v127 = vmul.f32 1.0, %v126
    %v128 = vmul.f32 %v117, %v127
    %v129 = vld [vmem:[%s1] sm:$0xff]
    %v130 = vadd.f32 %v128, %v129
    %v131 = vlaneseq
    %v132 = vshrl.u32 %v131, 7
    %v133 = vlaneseq
    %v134 = vand.u32 %v133, 127
    %vm135 = vcmp.gt.s32.totalorder %v134, %v132
    %v136 = vsel %vm135, -1e+30, 0.0
    %v137 = vpack.c.bf16 %v130, %v130
    %v138 = vld [vmem:[%s4] sm:$0xf]
    %v139 = vld [vmem:[%s4 + $0x4] sm:$0xf]
    %v140 = vld [vmem:[%s4 + $0x8] sm:$0xf]
    %v141 = vld [vmem:[%s4 + $0xc] sm:$0xf]
    %v142 = vld [vmem:[%s4 + $0x10] sm:$0xf]
    %v143 = vld [vmem:[%s4 + $0x14] sm:$0xf]
    %v144 = vld [vmem:[%s4 + $0x18] sm:$0xf]
    %v145 = vld [vmem:[%s4 + $0x1c] sm:$0xf]
    %v146 = vld [vmem:[%s4 + $0x20] sm:$0xf]
    %v147 = vld [vmem:[%s4 + $0x24] sm:$0xf]
    %v148 = vld [vmem:[%s4 + $0x28] sm:$0xf]
    %v149 = vld [vmem:[%s4 + $0x2c] sm:$0xf]
    %v150 = vld [vmem:[%s4 + $0x30] sm:$0xf]
    %v151 = vld [vmem:[%s4 + $0x34] sm:$0xf]
    %v152 = vld [vmem:[%s4 + $0x38] sm:$0xf]
    %v153 = vld [vmem:[%s4 + $0x3c] sm:$0xf]
    %v154 = vld [vmem:[%s4 + $0x40] sm:$0xf]
    %v155 = vld [vmem:[%s4 + $0x44] sm:$0xf]
    %v156 = vld [vmem:[%s4 + $0x48] sm:$0xf]
    %v157 = vld [vmem:[%s4 + $0x4c] sm:$0xf]
    %v158 = vld [vmem:[%s4 + $0x50] sm:$0xf]
    %v159 = vld [vmem:[%s4 + $0x54] sm:$0xf]
    %v160 = vld [vmem:[%s4 + $0x58] sm:$0xf]
    %v161 = vld [vmem:[%s4 + $0x5c] sm:$0xf]
    %v162 = vld [vmem:[%s4 + $0x60] sm:$0xf]
    %v163 = vld [vmem:[%s4 + $0x64] sm:$0xf]
    %v164 = vld [vmem:[%s4 + $0x68] sm:$0xf]
    %v165 = vld [vmem:[%s4 + $0x6c] sm:$0xf]
    %v166 = vld [vmem:[%s4 + $0x70] sm:$0xf]
    %v167 = vld [vmem:[%s4 + $0x74] sm:$0xf]
    %v168 = vld [vmem:[%s4 + $0x78] sm:$0xf]
    %v169 = vld [vmem:[%s4 + $0x7c] sm:$0xf]
    %v170 = vld [vmem:[%s4 + $0x80] sm:$0xf]
    %v171 = vld [vmem:[%s4 + $0x84] sm:$0xf]
    %v172 = vld [vmem:[%s4 + $0x88] sm:$0xf]
    %v173 = vld [vmem:[%s4 + $0x8c] sm:$0xf]
    %v174 = vld [vmem:[%s4 + $0x90] sm:$0xf]
    %v175 = vld [vmem:[%s4 + $0x94] sm:$0xf]
    %v176 = vld [vmem:[%s4 + $0x98] sm:$0xf]
    %v177 = vld [vmem:[%s4 + $0x9c] sm:$0xf]
    %v178 = vld [vmem:[%s4 + $0xa0] sm:$0xf]
    %v179 = vld [vmem:[%s4 + $0xa4] sm:$0xf]
    %v180 = vld [vmem:[%s4 + $0xa8] sm:$0xf]
    %v181 = vld [vmem:[%s4 + $0xac] sm:$0xf]
    %v182 = vld [vmem:[%s4 + $0xb0] sm:$0xf]
    %v183 = vld [vmem:[%s4 + $0xb4] sm:$0xf]
    %v184 = vld [vmem:[%s4 + $0xb8] sm:$0xf]
    %v185 = vld [vmem:[%s4 + $0xbc] sm:$0xf]
    %v186 = vld [vmem:[%s5] sm:$0x1]
    %v187 = vld [vmem:[%s5 + $0x1] sm:$0x1]
    %v188 = vld [vmem:[%s5 + $0x2] sm:$0x1]
    %v189 = vld [vmem:[%s5 + $0x3] sm:$0x1]
    %v190 = vld [vmem:[%s5 + $0x4] sm:$0x1]
    %v191 = vld [vmem:[%s5 + $0x5] sm:$0x1]
    %v192 = vld [vmem:[%s5 + $0x6] sm:$0x1]
    %v193 = vld [vmem:[%s5 + $0x7] sm:$0x1]
    %v194 = vld [vmem:[%s5 + $0x8] sm:$0x1]
    %v195 = vld [vmem:[%s5 + $0x9] sm:$0x1]
    %v196 = vld [vmem:[%s5 + $0xa] sm:$0x1]
    %v197 = vld [vmem:[%s5 + $0xb] sm:$0x1]
    %v210 = vlaneseq
    %v211 = vshrl.u32 %v210, 7
    %v212 = vsub.s32 0, %v211
    %v213 = vrot.slane %v186, %v212
    %v214 = vlaneseq
    %v215 = vshrl.u32 %v214, 7
    %v216 = vsub.s32 0, %v215
    %v217 = vrot.slane %v187, %v216
    %v218 = vlaneseq
    %v219 = vshrl.u32 %v218, 7
    %v220 = vsub.s32 0, %v219
    %v221 = vrot.slane %v188, %v220
    %v222 = vlaneseq
    %v223 = vshrl.u32 %v222, 7
    %v224 = vsub.s32 0, %v223
    %v225 = vrot.slane %v189, %v224
    %v226 = vlaneseq
    %v227 = vshrl.u32 %v226, 7
    %v228 = vsub.s32 0, %v227
    %v229 = vrot.slane %v190, %v228
    %v230 = vlaneseq
    %v231 = vshrl.u32 %v230, 7
    %v232 = vsub.s32 0, %v231
    %v233 = vrot.slane %v191, %v232
    %v234 = vlaneseq
    %v235 = vshrl.u32 %v234, 7
    %v236 = vsub.s32 0, %v235
    %v237 = vrot.slane %v192, %v236
    %v238 = vlaneseq
    %v239 = vshrl.u32 %v238, 7
    %v240 = vsub.s32 0, %v239
    %v241 = vrot.slane %v193, %v240
    %v242 = vlaneseq
    %v243 = vshrl.u32 %v242, 7
    %v244 = vsub.s32 0, %v243
    %v245 = vrot.slane %v194, %v244
    %v246 = vlaneseq
    %v247 = vshrl.u32 %v246, 7
    %v248 = vsub.s32 0, %v247
    %v249 = vrot.slane %v195, %v248
    %v250 = vlaneseq
    %v251 = vshrl.u32 %v250, 7
    %v252 = vsub.s32 0, %v251
    %v253 = vrot.slane %v196, %v252
    %v254 = vlaneseq
    %v255 = vshrl.u32 %v254, 7
    %v256 = vsub.s32 0, %v255
    %v257 = vrot.slane %v197, %v256
    %v274 = vunpack.c.l.b16 %v138
    %v275 = vunpack.c.l.b16 %v139
    %v276 = vunpack.c.l.b16 %v140
    %v277 = vunpack.c.l.b16 %v141
    %v278 = vpack.c.b16 %v275, %v274
    %v279 = vpack.c.b16 %v277, %v276
    %vm282 = vcmask 261120
    %v284 = vsel %vm282, %v137, 0
    %286 = vmatprep.subr.bf16.mxu0 0
    %287 = vmatpush1.bf16.msra.mxu0 %v278
    %288 = vmatprep.subr.bf16.mxu0 0
    %289 = vmatpush1.bf16.msra.mxu0 %v279
    %290 = vmatprep.subr.bf16.mxu0 0
    %291 = vmatpush1.bf16.msra.mxu0 0
    %292 = vmatprep.subr.bf16.mxu0 0
    %293 = vmatpush1.bf16.msra.mxu0 0
    %294 = vmatprep.subr.bf16.mxu0 0
    %295 = vmatpush1.bf16.msra.mxu0 0
    %296 = vmatprep.subr.bf16.mxu0 0
    %297 = vmatpush1.bf16.msra.mxu0 0
    %298 = vmatprep.subr.bf16.mxu0 0
    %299 = vmatpush1.bf16.msra.mxu0 0
    %300 = vmatprep.subr.bf16.mxu0 0
    %301 = vmatpush1.bf16.msra.mxu0 0
    %302 = vmatprep.subr.bf16.mxu0 0
    %303 = vmatpush1.bf16.msra.mxu0 0
    %304 = vmatprep.subr.bf16.mxu0 0
    %305 = vmatpush1.bf16.msra.mxu0 0
    %306 = vmatprep.subr.bf16.mxu0 0
    %307 = vmatpush1.bf16.msra.mxu0 0
    %308 = vmatprep.subr.bf16.mxu0 0
    %309 = vmatpush1.bf16.msra.mxu0 0
    %310 = vmatprep.subr.bf16.mxu0 0
    %311 = vmatpush1.bf16.msra.mxu0 0
    %312 = vmatprep.subr.bf16.mxu0 0
    %313 = vmatpush1.bf16.msra.mxu0 0
    %314 = vmatprep.subr.bf16.mxu0 0
    %315 = vmatpush1.bf16.msra.mxu0 0
    %316 = vmatprep.subr.bf16.mxu0 0
    %317 = vmatpush1.bf16.msra.mxu0 0
    %318 = vmatprep.mubr.bf16.mxu0 0
    %319 = vmatmul.mubr.bf16.gmra.mrb[0].mxu0 %v284
    %v320 = vpop.f32.mrb[0].mxu0
    %v321 = vadd.f32 %v213, %v320
    %v322 = vpop.f32.mrb[0].mxu0
    %v323 = vpop.f32.mrb[0].mxu0
    %v324 = vpop.f32.mrb[0].mxu0
    %325 = vdwg.mxu0
    %v330 = vunpack.c.l.b16 %v142
    %v331 = vunpack.c.l.b16 %v143
    %v332 = vunpack.c.l.b16 %v144
    %v333 = vunpack.c.l.b16 %v145
    %v334 = vpack.c.b16 %v331, %v330
    %v335 = vpack.c.b16 %v333, %v332
    %338 = vmatprep.subr.bf16.mxu0 0
    %339 = vmatpush1.bf16.msra.mxu0 %v334
    %340 = vmatprep.subr.bf16.mxu0 0
    %341 = vmatpush1.bf16.msra.mxu0 %v335
    %342 = vmatprep.subr.bf16.mxu0 0
    %343 = vmatpush1.bf16.msra.mxu0 0
    %344 = vmatprep.subr.bf16.mxu0 0
    %345 = vmatpush1.bf16.msra.mxu0 0
    %346 = vmatprep.subr.bf16.mxu0 0
    %347 = vmatpush1.bf16.msra.mxu0 0
    %348 = vmatprep.subr.bf16.mxu0 0
    %349 = vmatpush1.bf16.msra.mxu0 0
    %350 = vmatprep.subr.bf16.mxu0 0
    %351 = vmatpush1.bf16.msra.mxu0 0
    %352 = vmatprep.subr.bf16.mxu0 0
    %353 = vmatpush1.bf16.msra.mxu0 0
    %354 = vmatprep.subr.bf16.mxu0 0
    %355 = vmatpush1.bf16.msra.mxu0 0
    %356 = vmatprep.subr.bf16.mxu0 0
    %357 = vmatpush1.bf16.msra.mxu0 0
    %358 = vmatprep.subr.bf16.mxu0 0
    %359 = vmatpush1.bf16.msra.mxu0 0
    %360 = vmatprep.subr.bf16.mxu0 0
    %361 = vmatpush1.bf16.msra.mxu0 0
    %362 = vmatprep.subr.bf16.mxu0 0
    %363 = vmatpush1.bf16.msra.mxu0 0
    %364 = vmatprep.subr.bf16.mxu0 0
    %365 = vmatpush1.bf16.msra.mxu0 0
    %366 = vmatprep.subr.bf16.mxu0 0
    %367 = vmatpush1.bf16.msra.mxu0 0
    %368 = vmatprep.subr.bf16.mxu0 0
    %369 = vmatpush1.bf16.msra.mxu0 0
    %370 = vmatprep.mubr.bf16.mxu0 0
    %371 = vmatmul.mubr.bf16.gmra.mrb[0].mxu0 %v284
    %v372 = vpop.f32.mrb[0].mxu0
    %v373 = vadd.f32 %v217, %v372
    %v374 = vpop.f32.mrb[0].mxu0
    %v375 = vpop.f32.mrb[0].mxu0
    %v376 = vpop.f32.mrb[0].mxu0
    %377 = vdwg.mxu0
    %v382 = vunpack.c.l.b16 %v146
    %v383 = vunpack.c.l.b16 %v147
    %v384 = vunpack.c.l.b16 %v148
    %v385 = vunpack.c.l.b16 %v149
    %v386 = vpack.c.b16 %v383, %v382
    %v387 = vpack.c.b16 %v385, %v384
    %390 = vmatprep.subr.bf16.mxu0 0
    %391 = vmatpush1.bf16.msra.mxu0 %v386
    %392 = vmatprep.subr.bf16.mxu0 0
    %393 = vmatpush1.bf16.msra.mxu0 %v387
    %394 = vmatprep.subr.bf16.mxu0 0
    %395 = vmatpush1.bf16.msra.mxu0 0
    %396 = vmatprep.subr.bf16.mxu0 0
    %397 = vmatpush1.bf16.msra.mxu0 0
    %398 = vmatprep.subr.bf16.mxu0 0
    %399 = vmatpush1.bf16.msra.mxu0 0
    %400 = vmatprep.subr.bf16.mxu0 0
    %401 = vmatpush1.bf16.msra.mxu0 0
    %402 = vmatprep.subr.bf16.mxu0 0
    %403 = vmatpush1.bf16.msra.mxu0 0
    %404 = vmatprep.subr.bf16.mxu0 0
    %405 = vmatpush1.bf16.msra.mxu0 0
    %406 = vmatprep.subr.bf16.mxu0 0
    %407 = vmatpush1.bf16.msra.mxu0 0
    %408 = vmatprep.subr.bf16.mxu0 0
    %409 = vmatpush1.bf16.msra.mxu0 0
    %410 = vmatprep.subr.bf16.mxu0 0
    %411 = vmatpush1.bf16.msra.mxu0 0
    %412 = vmatprep.subr.bf16.mxu0 0
    %413 = vmatpush1.bf16.msra.mxu0 0
    %414 = vmatprep.subr.bf16.mxu0 0
    %415 = vmatpush1.bf16.msra.mxu0 0
    %416 = vmatprep.subr.bf16.mxu0 0
    %417 = vmatpush1.bf16.msra.mxu0 0
    %418 = vmatprep.subr.bf16.mxu0 0
    %419 = vmatpush1.bf16.msra.mxu0 0
    %420 = vmatprep.subr.bf16.mxu0 0
    %421 = vmatpush1.bf16.msra.mxu0 0
    %422 = vmatprep.mubr.bf16.mxu0 0
    %423 = vmatmul.mubr.bf16.gmra.mrb[0].mxu0 %v284
    %v424 = vpop.f32.mrb[0].mxu0
    %v425 = vadd.f32 %v221, %v424
    %v426 = vpop.f32.mrb[0].mxu0
    %v427 = vpop.f32.mrb[0].mxu0
    %v428 = vpop.f32.mrb[0].mxu0
    %429 = vdwg.mxu0
    %v434 = vunpack.c.l.b16 %v150
    %v435 = vunpack.c.l.b16 %v151
    %v436 = vunpack.c.l.b16 %v152
    %v437 = vunpack.c.l.b16 %v153
    %v438 = vpack.c.b16 %v435, %v434
    %v439 = vpack.c.b16 %v437, %v436
    %442 = vmatprep.subr.bf16.mxu0 0
    %443 = vmatpush1.bf16.msra.mxu0 %v438
    %444 = vmatprep.subr.bf16.mxu0 0
    %445 = vmatpush1.bf16.msra.mxu0 %v439
    %446 = vmatprep.subr.bf16.mxu0 0
    %447 = vmatpush1.bf16.msra.mxu0 0
    %448 = vmatprep.subr.bf16.mxu0 0
    %449 = vmatpush1.bf16.msra.mxu0 0
    %450 = vmatprep.subr.bf16.mxu0 0
    %451 = vmatpush1.bf16.msra.mxu0 0
    %452 = vmatprep.subr.bf16.mxu0 0
    %453 = vmatpush1.bf16.msra.mxu0 0
    %454 = vmatprep.subr.bf16.mxu0 0
    %455 = vmatpush1.bf16.msra.mxu0 0
    %456 = vmatprep.subr.bf16.mxu0 0
    %457 = vmatpush1.bf16.msra.mxu0 0
    %458 = vmatprep.subr.bf16.mxu0 0
    %459 = vmatpush1.bf16.msra.mxu0 0
    %460 = vmatprep.subr.bf16.mxu0 0
    %461 = vmatpush1.bf16.msra.mxu0 0
    %462 = vmatprep.subr.bf16.mxu0 0
    %463 = vmatpush1.bf16.msra.mxu0 0
    %464 = vmatprep.subr.bf16.mxu0 0
    %465 = vmatpush1.bf16.msra.mxu0 0
    %466 = vmatprep.subr.bf16.mxu0 0
    %467 = vmatpush1.bf16.msra.mxu0 0
    %468 = vmatprep.subr.bf16.mxu0 0
    %469 = vmatpush1.bf16.msra.mxu0 0
    %470 = vmatprep.subr.bf16.mxu0 0
    %471 = vmatpush1.bf16.msra.mxu0 0
    %472 = vmatprep.subr.bf16.mxu0 0
    %473 = vmatpush1.bf16.msra.mxu0 0
    %474 = vmatprep.mubr.bf16.mxu0 0
    %475 = vmatmul.mubr.bf16.gmra.mrb[0].mxu0 %v284
    %v476 = vpop.f32.mrb[0].mxu0
    %v477 = vadd.f32 %v225, %v476
    %v478 = vpop.f32.mrb[0].mxu0
    %v479 = vpop.f32.mrb[0].mxu0
    %v480 = vpop.f32.mrb[0].mxu0
    %481 = vdwg.mxu0
    %v486 = vunpack.c.l.b16 %v154
    %v487 = vunpack.c.l.b16 %v155
    %v488 = vunpack.c.l.b16 %v156
    %v489 = vunpack.c.l.b16 %v157
    %v490 = vpack.c.b16 %v487, %v486
    %v491 = vpack.c.b16 %v489, %v488
    %494 = vmatprep.subr.bf16.mxu0 0
    %495 = vmatpush1.bf16.msra.mxu0 %v490
    %496 = vmatprep.subr.bf16.mxu0 0
    %497 = vmatpush1.bf16.msra.mxu0 %v491
    %498 = vmatprep.subr.bf16.mxu0 0
    %499 = vmatpush1.bf16.msra.mxu0 0
    %500 = vmatprep.subr.bf16.mxu0 0
    %501 = vmatpush1.bf16.msra.mxu0 0
    %502 = vmatprep.subr.bf16.mxu0 0
    %503 = vmatpush1.bf16.msra.mxu0 0
    %504 = vmatprep.subr.bf16.mxu0 0
    %505 = vmatpush1.bf16.msra.mxu0 0
    %506 = vmatprep.subr.bf16.mxu0 0
    %507 = vmatpush1.bf16.msra.mxu0 0
    %508 = vmatprep.subr.bf16.mxu0 0
    %509 = vmatpush1.bf16.msra.mxu0 0
    %510 = vmatprep.subr.bf16.mxu0 0
    %511 = vmatpush1.bf16.msra.mxu0 0
    %512 = vmatprep.subr.bf16.mxu0 0
    %513 = vmatpush1.bf16.msra.mxu0 0
    %514 = vmatprep.subr.bf16.mxu0 0
    %515 = vmatpush1.bf16.msra.mxu0 0
    %516 = vmatprep.subr.bf16.mxu0 0
    %517 = vmatpush1.bf16.msra.mxu0 0
    %518 = vmatprep.subr.bf16.mxu0 0
    %519 = vmatpush1.bf16.msra.mxu0 0
    %520 = vmatprep.subr.bf16.mxu0 0
    %521 = vmatpush1.bf16.msra.mxu0 0
    %522 = vmatprep.subr.bf16.mxu0 0
    %523 = vmatpush1.bf16.msra.mxu0 0
    %524 = vmatprep.subr.bf16.mxu0 0
    %525 = vmatpush1.bf16.msra.mxu0 0
    %526 = vmatprep.mubr.bf16.mxu0 0
    %527 = vmatmul.mubr.bf16.gmra.mrb[0].mxu0 %v284
    %v528 = vpop.f32.mrb[0].mxu0
    %v529 = vadd.f32 %v229, %v528
    %v530 = vpop.f32.mrb[0].mxu0
    %v531 = vpop.f32.mrb[0].mxu0
    %v532 = vpop.f32.mrb[0].mxu0
    %533 = vdwg.mxu0
    %v538 = vunpack.c.l.b16 %v158
    %v539 = vunpack.c.l.b16 %v159
    %v540 = vunpack.c.l.b16 %v160
    %v541 = vunpack.c.l.b16 %v161
    %v542 = vpack.c.b16 %v539, %v538
    %v543 = vpack.c.b16 %v541, %v540
    %546 = vmatprep.subr.bf16.mxu0 0
    %547 = vmatpush1.bf16.msra.mxu0 %v542
    %548 = vmatprep.subr.bf16.mxu0 0
    %549 = vmatpush1.bf16.msra.mxu0 %v543
    %550 = vmatprep.subr.bf16.mxu0 0
    %551 = vmatpush1.bf16.msra.mxu0 0
    %552 = vmatprep.subr.bf16.mxu0 0
    %553 = vmatpush1.bf16.msra.mxu0 0
    %554 = vmatprep.subr.bf16.mxu0 0
    %555 = vmatpush1.bf16.msra.mxu0 0
    %556 = vmatprep.subr.bf16.mxu0 0
    %557 = vmatpush1.bf16.msra.mxu0 0
    %558 = vmatprep.subr.bf16.mxu0 0
    %559 = vmatpush1.bf16.msra.mxu0 0
    %560 = vmatprep.subr.bf16.mxu0 0
    %561 = vmatpush1.bf16.msra.mxu0 0
    %562 = vmatprep.subr.bf16.mxu0 0
    %563 = vmatpush1.bf16.msra.mxu0 0
    %564 = vmatprep.subr.bf16.mxu0 0
    %565 = vmatpush1.bf16.msra.mxu0 0
    %566 = vmatprep.subr.bf16.mxu0 0
    %567 = vmatpush1.bf16.msra.mxu0 0
    %568 = vmatprep.subr.bf16.mxu0 0
    %569 = vmatpush1.bf16.msra.mxu0 0
    %570 = vmatprep.subr.bf16.mxu0 0
    %571 = vmatpush1.bf16.msra.mxu0 0
    %572 = vmatprep.subr.bf16.mxu0 0
    %573 = vmatpush1.bf16.msra.mxu0 0
    %574 = vmatprep.subr.bf16.mxu0 0
    %575 = vmatpush1.bf16.msra.mxu0 0
    %576 = vmatprep.subr.bf16.mxu0 0
    %577 = vmatpush1.bf16.msra.mxu0 0
    %578 = vmatprep.mubr.bf16.mxu0 0
    %579 = vmatmul.mubr.bf16.gmra.mrb[0].mxu0 %v284
    %v580 = vpop.f32.mrb[0].mxu0
    %v581 = vadd.f32 %v233, %v580
    %v582 = vpop.f32.mrb[0].mxu0
    %v583 = vpop.f32.mrb[0].mxu0
    %v584 = vpop.f32.mrb[0].mxu0
    %585 = vdwg.mxu0
    %v590 = vunpack.c.l.b16 %v162
    %v591 = vunpack.c.l.b16 %v163
    %v592 = vunpack.c.l.b16 %v164
    %v593 = vunpack.c.l.b16 %v165
    %v594 = vpack.c.b16 %v591, %v590
    %v595 = vpack.c.b16 %v593, %v592
    %598 = vmatprep.subr.bf16.mxu0 0
    %599 = vmatpush1.bf16.msra.mxu0 %v594
    %600 = vmatprep.subr.bf16.mxu0 0
    %601 = vmatpush1.bf16.msra.mxu0 %v595
    %602 = vmatprep.subr.bf16.mxu0 0
    %603 = vmatpush1.bf16.msra.mxu0 0
    %604 = vmatprep.subr.bf16.mxu0 0
    %605 = vmatpush1.bf16.msra.mxu0 0
    %606 = vmatprep.subr.bf16.mxu0 0
    %607 = vmatpush1.bf16.msra.mxu0 0
    %608 = vmatprep.subr.bf16.mxu0 0
    %609 = vmatpush1.bf16.msra.mxu0 0
    %610 = vmatprep.subr.bf16.mxu0 0
    %611 = vmatpush1.bf16.msra.mxu0 0
    %612 = vmatprep.subr.bf16.mxu0 0
    %613 = vmatpush1.bf16.msra.mxu0 0
    %614 = vmatprep.subr.bf16.mxu0 0
    %615 = vmatpush1.bf16.msra.mxu0 0
    %616 = vmatprep.subr.bf16.mxu0 0
    %617 = vmatpush1.bf16.msra.mxu0 0
    %618 = vmatprep.subr.bf16.mxu0 0
    %619 = vmatpush1.bf16.msra.mxu0 0
    %620 = vmatprep.subr.bf16.mxu0 0
    %621 = vmatpush1.bf16.msra.mxu0 0
    %622 = vmatprep.subr.bf16.mxu0 0
    %623 = vmatpush1.bf16.msra.mxu0 0
    %624 = vmatprep.subr.bf16.mxu0 0
    %625 = vmatpush1.bf16.msra.mxu0 0
    %626 = vmatprep.subr.bf16.mxu0 0
    %627 = vmatpush1.bf16.msra.mxu0 0
    %628 = vmatprep.subr.bf16.mxu0 0
    %629 = vmatpush1.bf16.msra.mxu0 0
    %630 = vmatprep.mubr.bf16.mxu0 0
    %631 = vmatmul.mubr.bf16.gmra.mrb[0].mxu0 %v284
    %v632 = vpop.f32.mrb[0].mxu0
    %v633 = vadd.f32 %v237, %v632
    %v634 = vpop.f32.mrb[0].mxu0
    %v635 = vpop.f32.mrb[0].mxu0
    %v636 = vpop.f32.mrb[0].mxu0
    %637 = vdwg.mxu0
    %v642 = vunpack.c.l.b16 %v166
    %v643 = vunpack.c.l.b16 %v167
    %v644 = vunpack.c.l.b16 %v168
    %v645 = vunpack.c.l.b16 %v169
    %v646 = vpack.c.b16 %v643, %v642
    %v647 = vpack.c.b16 %v645, %v644
    %650 = vmatprep.subr.bf16.mxu0 0
    %651 = vmatpush1.bf16.msra.mxu0 %v646
    %652 = vmatprep.subr.bf16.mxu0 0
    %653 = vmatpush1.bf16.msra.mxu0 %v647
    %654 = vmatprep.subr.bf16.mxu0 0
    %655 = vmatpush1.bf16.msra.mxu0 0
    %656 = vmatprep.subr.bf16.mxu0 0
    %657 = vmatpush1.bf16.msra.mxu0 0
    %658 = vmatprep.subr.bf16.mxu0 0
    %659 = vmatpush1.bf16.msra.mxu0 0
    %660 = vmatprep.subr.bf16.mxu0 0
    %661 = vmatpush1.bf16.msra.mxu0 0
    %662 = vmatprep.subr.bf16.mxu0 0
    %663 = vmatpush1.bf16.msra.mxu0 0
    %664 = vmatprep.subr.bf16.mxu0 0
    %665 = vmatpush1.bf16.msra.mxu0 0
    %666 = vmatprep.subr.bf16.mxu0 0
    %667 = vmatpush1.bf16.msra.mxu0 0
    %668 = vmatprep.subr.bf16.mxu0 0
    %669 = vmatpush1.bf16.msra.mxu0 0
    %670 = vmatprep.subr.bf16.mxu0 0
    %671 = vmatpush1.bf16.msra.mxu0 0
    %672 = vmatprep.subr.bf16.mxu0 0
    %673 = vmatpush1.bf16.msra.mxu0 0
    %674 = vmatprep.subr.bf16.mxu0 0
    %675 = vmatpush1.bf16.msra.mxu0 0
    %676 = vmatprep.subr.bf16.mxu0 0
    %677 = vmatpush1.bf16.msra.mxu0 0
    %678 = vmatprep.subr.bf16.mxu0 0
    %679 = vmatpush1.bf16.msra.mxu0 0
    %680 = vmatprep.subr.bf16.mxu0 0
    %681 = vmatpush1.bf16.msra.mxu0 0
    %682 = vmatprep.mubr.bf16.mxu0 0
    %683 = vmatmul.mubr.bf16.gmra.mrb[0].mxu0 %v284
    %v684 = vpop.f32.mrb[0].mxu0
    %v685 = vadd.f32 %v241, %v684
    %v686 = vpop.f32.mrb[0].mxu0
    %v687 = vpop.f32.mrb[0].mxu0
    %v688 = vpop.f32.mrb[0].mxu0
    %689 = vdwg.mxu0
    %v694 = vunpack.c.l.b16 %v170
    %v695 = vunpack.c.l.b16 %v171
    %v696 = vunpack.c.l.b16 %v172
    %v697 = vunpack.c.l.b16 %v173
    %v698 = vpack.c.b16 %v695, %v694
    %v699 = vpack.c.b16 %v697, %v696
    %702 = vmatprep.subr.bf16.mxu0 0
    %703 = vmatpush1.bf16.msra.mxu0 %v698
    %704 = vmatprep.subr.bf16.mxu0 0
    %705 = vmatpush1.bf16.msra.mxu0 %v699
    %706 = vmatprep.subr.bf16.mxu0 0
    %707 = vmatpush1.bf16.msra.mxu0 0
    %708 = vmatprep.subr.bf16.mxu0 0
    %709 = vmatpush1.bf16.msra.mxu0 0
    %710 = vmatprep.subr.bf16.mxu0 0
    %711 = vmatpush1.bf16.msra.mxu0 0
    %712 = vmatprep.subr.bf16.mxu0 0
    %713 = vmatpush1.bf16.msra.mxu0 0
    %714 = vmatprep.subr.bf16.mxu0 0
    %715 = vmatpush1.bf16.msra.mxu0 0
    %716 = vmatprep.subr.bf16.mxu0 0
    %717 = vmatpush1.bf16.msra.mxu0 0
    %718 = vmatprep.subr.bf16.mxu0 0
    %719 = vmatpush1.bf16.msra.mxu0 0
    %720 = vmatprep.subr.bf16.mxu0 0
    %721 = vmatpush1.bf16.msra.mxu0 0
    %722 = vmatprep.subr.bf16.mxu0 0
    %723 = vmatpush1.bf16.msra.mxu0 0
    %724 = vmatprep.subr.bf16.mxu0 0
    %725 = vmatpush1.bf16.msra.mxu0 0
    %726 = vmatprep.subr.bf16.mxu0 0
    %727 = vmatpush1.bf16.msra.mxu0 0
    %728 = vmatprep.subr.bf16.mxu0 0
    %729 = vmatpush1.bf16.msra.mxu0 0
    %730 = vmatprep.subr.bf16.mxu0 0
    %731 = vmatpush1.bf16.msra.mxu0 0
    %732 = vmatprep.subr.bf16.mxu0 0
    %733 = vmatpush1.bf16.msra.mxu0 0
    %734 = vmatprep.mubr.bf16.mxu0 0
    %735 = vmatmul.mubr.bf16.gmra.mrb[0].mxu0 %v284
    %v736 = vpop.f32.mrb[0].mxu0
    %v737 = vadd.f32 %v245, %v736
    %v738 = vpop.f32.mrb[0].mxu0
    %v739 = vpop.f32.mrb[0].mxu0
    %v740 = vpop.f32.mrb[0].mxu0
    %741 = vdwg.mxu0
    %v746 = vunpack.c.l.b16 %v174
    %v747 = vunpack.c.l.b16 %v175
    %v748 = vunpack.c.l.b16 %v176
    %v749 = vunpack.c.l.b16 %v177
    %v750 = vpack.c.b16 %v747, %v746
    %v751 = vpack.c.b16 %v749, %v748
    %754 = vmatprep.subr.bf16.mxu0 0
    %755 = vmatpush1.bf16.msra.mxu0 %v750
    %756 = vmatprep.subr.bf16.mxu0 0
    %757 = vmatpush1.bf16.msra.mxu0 %v751
    %758 = vmatprep.subr.bf16.mxu0 0
    %759 = vmatpush1.bf16.msra.mxu0 0
    %760 = vmatprep.subr.bf16.mxu0 0
    %761 = vmatpush1.bf16.msra.mxu0 0
    %762 = vmatprep.subr.bf16.mxu0 0
    %763 = vmatpush1.bf16.msra.mxu0 0
    %764 = vmatprep.subr.bf16.mxu0 0
    %765 = vmatpush1.bf16.msra.mxu0 0
    %766 = vmatprep.subr.bf16.mxu0 0
    %767 = vmatpush1.bf16.msra.mxu0 0
    %768 = vmatprep.subr.bf16.mxu0 0
    %769 = vmatpush1.bf16.msra.mxu0 0
    %770 = vmatprep.subr.bf16.mxu0 0
    %771 = vmatpush1.bf16.msra.mxu0 0
    %772 = vmatprep.subr.bf16.mxu0 0
    %773 = vmatpush1.bf16.msra.mxu0 0
    %774 = vmatprep.subr.bf16.mxu0 0
    %775 = vmatpush1.bf16.msra.mxu0 0
    %776 = vmatprep.subr.bf16.mxu0 0
    %777 = vmatpush1.bf16.msra.mxu0 0
    %778 = vmatprep.subr.bf16.mxu0 0
    %779 = vmatpush1.bf16.msra.mxu0 0
    %780 = vmatprep.subr.bf16.mxu0 0
    %781 = vmatpush1.bf16.msra.mxu0 0
    %782 = vmatprep.subr.bf16.mxu0 0
    %783 = vmatpush1.bf16.msra.mxu0 0
    %784 = vmatprep.subr.bf16.mxu0 0
    %785 = vmatpush1.bf16.msra.mxu0 0
    %786 = vmatprep.mubr.bf16.mxu0 0
    %787 = vmatmul.mubr.bf16.gmra.mrb[0].mxu0 %v284
    %v788 = vpop.f32.mrb[0].mxu0
    %v789 = vadd.f32 %v249, %v788
    %v790 = vpop.f32.mrb[0].mxu0
    %v791 = vpop.f32.mrb[0].mxu0
    %v792 = vpop.f32.mrb[0].mxu0
    %793 = vdwg.mxu0
    %v798 = vunpack.c.l.b16 %v178
    %v799 = vunpack.c.l.b16 %v179
    %v800 = vunpack.c.l.b16 %v180
    %v801 = vunpack.c.l.b16 %v181
    %v802 = vpack.c.b16 %v799, %v798
    %v803 = vpack.c.b16 %v801, %v800
    %806 = vmatprep.subr.bf16.mxu0 0
    %807 = vmatpush1.bf16.msra.mxu0 %v802
    %808 = vmatprep.subr.bf16.mxu0 0
    %809 = vmatpush1.bf16.msra.mxu0 %v803
    %810 = vmatprep.subr.bf16.mxu0 0
    %811 = vmatpush1.bf16.msra.mxu0 0
    %812 = vmatprep.subr.bf16.mxu0 0
    %813 = vmatpush1.bf16.msra.mxu0 0
    %814 = vmatprep.subr.bf16.mxu0 0
    %815 = vmatpush1.bf16.msra.mxu0 0
    %816 = vmatprep.subr.bf16.mxu0 0
    %817 = vmatpush1.bf16.msra.mxu0 0
    %818 = vmatprep.subr.bf16.mxu0 0
    %819 = vmatpush1.bf16.msra.mxu0 0
    %820 = vmatprep.subr.bf16.mxu0 0
    %821 = vmatpush1.bf16.msra.mxu0 0
    %822 = vmatprep.subr.bf16.mxu0 0
    %823 = vmatpush1.bf16.msra.mxu0 0
    %824 = vmatprep.subr.bf16.mxu0 0
    %825 = vmatpush1.bf16.msra.mxu0 0
    %826 = vmatprep.subr.bf16.mxu0 0
    %827 = vmatpush1.bf16.msra.mxu0 0
    %828 = vmatprep.subr.bf16.mxu0 0
    %829 = vmatpush1.bf16.msra.mxu0 0
    %830 = vmatprep.subr.bf16.mxu0 0
    %831 = vmatpush1.bf16.msra.mxu0 0
    %832 = vmatprep.subr.bf16.mxu0 0
    %833 = vmatpush1.bf16.msra.mxu0 0
    %834 = vmatprep.subr.bf16.mxu0 0
    %835 = vmatpush1.bf16.msra.mxu0 0
    %836 = vmatprep.subr.bf16.mxu0 0
    %837 = vmatpush1.bf16.msra.mxu0 0
    %838 = vmatprep.mubr.bf16.mxu0 0
    %839 = vmatmul.mubr.bf16.gmra.mrb[0].mxu0 %v284
    %v840 = vpop.f32.mrb[0].mxu0
    %v841 = vadd.f32 %v253, %v840
    %v842 = vpop.f32.mrb[0].mxu0
    %v843 = vpop.f32.mrb[0].mxu0
    %v844 = vpop.f32.mrb[0].mxu0
    %845 = vdwg.mxu0
    %v850 = vunpack.c.l.b16 %v182
    %v851 = vunpack.c.l.b16 %v183
    %v852 = vunpack.c.l.b16 %v184
    %v853 = vunpack.c.l.b16 %v185
    %v854 = vpack.c.b16 %v851, %v850
    %v855 = vpack.c.b16 %v853, %v852
    %858 = vmatprep.subr.bf16.mxu0 0
    %859 = vmatpush1.bf16.msra.mxu0 %v854
    %860 = vmatprep.subr.bf16.mxu0 0
    %861 = vmatpush1.bf16.msra.mxu0 %v855
    %862 = vmatprep.subr.bf16.mxu0 0
    %863 = vmatpush1.bf16.msra.mxu0 0
    %864 = vmatprep.subr.bf16.mxu0 0
    %865 = vmatpush1.bf16.msra.mxu0 0
    %866 = vmatprep.subr.bf16.mxu0 0
    %867 = vmatpush1.bf16.msra.mxu0 0
    %868 = vmatprep.subr.bf16.mxu0 0
    %869 = vmatpush1.bf16.msra.mxu0 0
    %870 = vmatprep.subr.bf16.mxu0 0
    %871 = vmatpush1.bf16.msra.mxu0 0
    %872 = vmatprep.subr.bf16.mxu0 0
    %873 = vmatpush1.bf16.msra.mxu0 0
    %874 = vmatprep.subr.bf16.mxu0 0
    %875 = vmatpush1.bf16.msra.mxu0 0
    %876 = vmatprep.subr.bf16.mxu0 0
    %877 = vmatpush1.bf16.msra.mxu0 0
    %878 = vmatprep.subr.bf16.mxu0 0
    %879 = vmatpush1.bf16.msra.mxu0 0
    %880 = vmatprep.subr.bf16.mxu0 0
    %881 = vmatpush1.bf16.msra.mxu0 0
    %882 = vmatprep.subr.bf16.mxu0 0
    %883 = vmatpush1.bf16.msra.mxu0 0
    %884 = vmatprep.subr.bf16.mxu0 0
    %885 = vmatpush1.bf16.msra.mxu0 0
    %886 = vmatprep.subr.bf16.mxu0 0
    %887 = vmatpush1.bf16.msra.mxu0 0
    %888 = vmatprep.subr.bf16.mxu0 0
    %889 = vmatpush1.bf16.msra.mxu0 0
    %890 = vmatprep.mubr.bf16.mxu0 0
    %891 = vmatmul.mubr.bf16.gmra.mrb[0].mxu0 %v284
    %v892 = vpop.f32.mrb[0].mxu0
    %v893 = vadd.f32 %v257, %v892
    %v894 = vpop.f32.mrb[0].mxu0
    %v895 = vpop.f32.mrb[0].mxu0
    %v896 = vpop.f32.mrb[0].mxu0
    %897 = vdwg.mxu0
    %v898 = vmul.f32 %v321, 0.35355338
    %v899 = vmul.f32 %v373, 0.35355338
    %v900 = vmul.f32 %v425, 0.35355338
    %v901 = vmul.f32 %v477, 0.35355338
    %v902 = vpack.c.bf16 %v898, %v898
    %v903 = vpack.c.bf16 %v899, %v899
    %v904 = vpack.c.bf16 %v900, %v900
    %v905 = vpack.c.bf16 %v901, %v901
    %v906 = vpack.c.bf16 %v529, %v529
    %v907 = vpack.c.bf16 %v581, %v581
    %v908 = vpack.c.bf16 %v633, %v633
    %v909 = vpack.c.bf16 %v685, %v685
    %vm910 = vcmask 64512
    %v912 = vsel %vm910, %v902, 0
    %v915 = vsel %vm910, %v906, 0
    %917 = vmatprep.subr.bf16.mxu0 0
    %918 = vmatpush1.bf16.xpose.msra.mxu0 %v915
    %919 = vmatprep.subr.bf16.mxu0 0
    %920 = vmatpush1.bf16.xpose.msra.mxu0 0
    %921 = vmatprep.subr.bf16.mxu0 0
    %922 = vmatpush1.bf16.xpose.msra.mxu0 0
    %923 = vmatprep.subr.bf16.mxu0 0
    %924 = vmatpush1.bf16.xpose.msra.mxu0 0
    %925 = vmatprep.subr.bf16.mxu0 0
    %926 = vmatpush1.bf16.xpose.msra.mxu0 0
    %927 = vmatprep.subr.bf16.mxu0 0
    %928 = vmatpush1.bf16.xpose.msra.mxu0 0
    %929 = vmatprep.subr.bf16.mxu0 0
    %930 = vmatpush1.bf16.xpose.msra.mxu0 0
    %931 = vmatprep.subr.bf16.mxu0 0
    %932 = vmatpush1.bf16.xpose.msra.mxu0 0
    %933 = vmatprep.subr.bf16.mxu0 0
    %934 = vmatpush1.bf16.xpose.msra.mxu0 0
    %935 = vmatprep.subr.bf16.mxu0 0
    %936 = vmatpush1.bf16.xpose.msra.mxu0 0
    %937 = vmatprep.subr.bf16.mxu0 0
    %938 = vmatpush1.bf16.xpose.msra.mxu0 0
    %939 = vmatprep.subr.bf16.mxu0 0
    %940 = vmatpush1.bf16.xpose.msra.mxu0 0
    %941 = vmatprep.subr.bf16.mxu0 0
    %942 = vmatpush1.bf16.xpose.msra.mxu0 0
    %943 = vmatprep.subr.bf16.mxu0 0
    %944 = vmatpush1.bf16.xpose.msra.mxu0 0
    %945 = vmatprep.subr.bf16.mxu0 0
    %946 = vmatpush1.bf16.xpose.msra.mxu0 0
    %947 = vmatprep.subr.bf16.mxu0 0
    %948 = vmatpush1.bf16.xpose.msra.mxu0 0
    %949 = vmatprep.mubr.bf16.mxu0 0
    %950 = vmatmul.mubr.bf16.gmra.mrb[0].mxu0 %v912
    %v951 = vpop.f32.mrb[0].mxu0
    %v952 = vadd.f32 %v136, %v951
    %v953 = vpop.f32.mrb[0].mxu0
    %v954 = vpop.f32.mrb[0].mxu0
    %v955 = vpop.f32.mrb[0].mxu0
    %956 = vdwg.mxu0
    %v958 = vsel %vm910, %v903, 0
    %v961 = vsel %vm910, %v907, 0
    %963 = vmatprep.subr.bf16.mxu0 0
    %964 = vmatpush1.bf16.xpose.msra.mxu0 %v961
    %965 = vmatprep.subr.bf16.mxu0 0
    %966 = vmatpush1.bf16.xpose.msra.mxu0 0
    %967 = vmatprep.subr.bf16.mxu0 0
    %968 = vmatpush1.bf16.xpose.msra.mxu0 0
    %969 = vmatprep.subr.bf16.mxu0 0
    %970 = vmatpush1.bf16.xpose.msra.mxu0 0
    %971 = vmatprep.subr.bf16.mxu0 0
    %972 = vmatpush1.bf16.xpose.msra.mxu0 0
    %973 = vmatprep.subr.bf16.mxu0 0
    %974 = vmatpush1.bf16.xpose.msra.mxu0 0
    %975 = vmatprep.subr.bf16.mxu0 0
    %976 = vmatpush1.bf16.xpose.msra.mxu0 0
    %977 = vmatprep.subr.bf16.mxu0 0
    %978 = vmatpush1.bf16.xpose.msra.mxu0 0
    %979 = vmatprep.subr.bf16.mxu0 0
    %980 = vmatpush1.bf16.xpose.msra.mxu0 0
    %981 = vmatprep.subr.bf16.mxu0 0
    %982 = vmatpush1.bf16.xpose.msra.mxu0 0
    %983 = vmatprep.subr.bf16.mxu0 0
    %984 = vmatpush1.bf16.xpose.msra.mxu0 0
    %985 = vmatprep.subr.bf16.mxu0 0
    %986 = vmatpush1.bf16.xpose.msra.mxu0 0
    %987 = vmatprep.subr.bf16.mxu0 0
    %988 = vmatpush1.bf16.xpose.msra.mxu0 0
    %989 = vmatprep.subr.bf16.mxu0 0
    %990 = vmatpush1.bf16.xpose.msra.mxu0 0
    %991 = vmatprep.subr.bf16.mxu0 0
    %992 = vmatpush1.bf16.xpose.msra.mxu0 0
    %993 = vmatprep.subr.bf16.mxu0 0
    %994 = vmatpush1.bf16.xpose.msra.mxu0 0
    %995 = vmatprep.mubr.bf16.mxu0 0
    %996 = vmatmul.mubr.bf16.gmra.mrb[0].mxu0 %v958
    %v997 = vpop.f32.mrb[0].mxu0
    %v998 = vadd.f32 %v136, %v997
    %v999 = vpop.f32.mrb[0].mxu0
    %v1000 = vpop.f32.mrb[0].mxu0
    %v1001 = vpop.f32.mrb[0].mxu0
    %1002 = vdwg.mxu0
    %v1004 = vsel %vm910, %v904, 0
    %v1007 = vsel %vm910, %v908, 0
    %1009 = vmatprep.subr.bf16.mxu0 0
    %1010 = vmatpush1.bf16.xpose.msra.mxu0 %v1007
    %1011 = vmatprep.subr.bf16.mxu0 0
    %1012 = vmatpush1.bf16.xpose.msra.mxu0 0
    %1013 = vmatprep.subr.bf16.mxu0 0
    %1014 = vmatpush1.bf16.xpose.msra.mxu0 0
    %1015 = vmatprep.subr.bf16.mxu0 0
    %1016 = vmatpush1.bf16.xpose.msra.mxu0 0
    %1017 = vmatprep.subr.bf16.mxu0 0
    %1018 = vmatpush1.bf16.xpose.msra.mxu0 0
    %1019 = vmatprep.subr.bf16.mxu0 0
    %1020 = vmatpush1.bf16.xpose.msra.mxu0 0
    %1021 = vmatprep.subr.bf16.mxu0 0
    %1022 = vmatpush1.bf16.xpose.msra.mxu0 0
    %1023 = vmatprep.subr.bf16.mxu0 0
    %1024 = vmatpush1.bf16.xpose.msra.mxu0 0
    %1025 = vmatprep.subr.bf16.mxu0 0
    %1026 = vmatpush1.bf16.xpose.msra.mxu0 0
    %1027 = vmatprep.subr.bf16.mxu0 0
    %1028 = vmatpush1.bf16.xpose.msra.mxu0 0
    %1029 = vmatprep.subr.bf16.mxu0 0
    %1030 = vmatpush1.bf16.xpose.msra.mxu0 0
    %1031 = vmatprep.subr.bf16.mxu0 0
    %1032 = vmatpush1.bf16.xpose.msra.mxu0 0
    %1033 = vmatprep.subr.bf16.mxu0 0
    %1034 = vmatpush1.bf16.xpose.msra.mxu0 0
    %1035 = vmatprep.subr.bf16.mxu0 0
    %1036 = vmatpush1.bf16.xpose.msra.mxu0 0
    %1037 = vmatprep.subr.bf16.mxu0 0
    %1038 = vmatpush1.bf16.xpose.msra.mxu0 0
    %1039 = vmatprep.subr.bf16.mxu0 0
    %1040 = vmatpush1.bf16.xpose.msra.mxu0 0
    %1041 = vmatprep.mubr.bf16.mxu0 0
    %1042 = vmatmul.mubr.bf16.gmra.mrb[0].mxu0 %v1004
    %v1043 = vpop.f32.mrb[0].mxu0
    %v1044 = vadd.f32 %v136, %v1043
    %v1045 = vpop.f32.mrb[0].mxu0
    %v1046 = vpop.f32.mrb[0].mxu0
    %v1047 = vpop.f32.mrb[0].mxu0
    %1048 = vdwg.mxu0
    %v1050 = vsel %vm910, %v905, 0
    %v1053 = vsel %vm910, %v909, 0
    %1055 = vmatprep.subr.bf16.mxu0 0
    %1056 = vmatpush1.bf16.xpose.msra.mxu0 %v1053
    %1057 = vmatprep.subr.bf16.mxu0 0
    %1058 = vmatpush1.bf16.xpose.msra.mxu0 0
    %1059 = vmatprep.subr.bf16.mxu0 0
    %1060 = vmatpush1.bf16.xpose.msra.mxu0 0
    %1061 = vmatprep.subr.bf16.mxu0 0
    %1062 = vmatpush1.bf16.xpose.msra.mxu0 0
    %1063 = vmatprep.subr.bf16.mxu0 0
    %1064 = vmatpush1.bf16.xpose.msra.mxu0 0
    %1065 = vmatprep.subr.bf16.mxu0 0
    %1066 = vmatpush1.bf16.xpose.msra.mxu0 0
    %1067 = vmatprep.subr.bf16.mxu0 0
    %1068 = vmatpush1.bf16.xpose.msra.mxu0 0
    %1069 = vmatprep.subr.bf16.mxu0 0
    %1070 = vmatpush1.bf16.xpose.msra.mxu0 0
    %1071 = vmatprep.subr.bf16.mxu0 0
    %1072 = vmatpush1.bf16.xpose.msra.mxu0 0
    %1073 = vmatprep.subr.bf16.mxu0 0
    %1074 = vmatpush1.bf16.xpose.msra.mxu0 0
    %1075 = vmatprep.subr.bf16.mxu0 0
    %1076 = vmatpush1.bf16.xpose.msra.mxu0 0
    %1077 = vmatprep.subr.bf16.mxu0 0
    %1078 = vmatpush1.bf16.xpose.msra.mxu0 0
    %1079 = vmatprep.subr.bf16.mxu0 0
    %1080 = vmatpush1.bf16.xpose.msra.mxu0 0
    %1081 = vmatprep.subr.bf16.mxu0 0
    %1082 = vmatpush1.bf16.xpose.msra.mxu0 0
    %1083 = vmatprep.subr.bf16.mxu0 0
    %1084 = vmatpush1.bf16.xpose.msra.mxu0 0
    %1085 = vmatprep.subr.bf16.mxu0 0
    %1086 = vmatpush1.bf16.xpose.msra.mxu0 0
    %1087 = vmatprep.mubr.bf16.mxu0 0
    %1088 = vmatmul.mubr.bf16.gmra.mrb[0].mxu0 %v1050
    %v1089 = vpop.f32.mrb[0].mxu0
    %v1090 = vadd.f32 %v136, %v1089
    %v1091 = vpop.f32.mrb[0].mxu0
    %v1092 = vpop.f32.mrb[0].mxu0
    %v1093 = vpop.f32.mrb[0].mxu0
    %1094 = vdwg.mxu0
    %v1095 = vsel %vm910, %v952, -inf
    %1096 = vmax.xlane.f32.xlu0 %v1095
    %v1097 = vpop.xlane.xlu0 %1096
    %v1098 = vsel %vm910, %v998, -inf
    %1099 = vmax.xlane.f32.xlu0 %v1098
    %v1100 = vpop.xlane.xlu0 %1099
    %v1101 = vsel %vm910, %v1044, -inf
    %1102 = vmax.xlane.f32.xlu0 %v1101
    %v1103 = vpop.xlane.xlu0 %1102
    %v1104 = vsel %vm910, %v1090, -inf
    %1105 = vmax.xlane.f32.xlu0 %v1104
    %v1106 = vpop.xlane.xlu0 %1105
    %v1107 = vsub.f32 %v952, %v1097
    %v1108 = vsub.f32 %v998, %v1100
    %v1109 = vsub.f32 %v1044, %v1103
    %v1110 = vsub.f32 %v1090, %v1106
    %v1111 = vmul.f32 %v1107, 1.442695
    %v1112 = vpow.pop %v1111
    %v1113 = vmul.f32 %v1108, 1.442695
    %v1114 = vpow.pop %v1113
    %v1115 = vmul.f32 %v1109, 1.442695
    %v1116 = vpow.pop %v1115
    %v1117 = vmul.f32 %v1110, 1.442695
    %v1118 = vpow.pop %v1117
    %v1119 = vsel %vm910, %v1112, 0.0
    %1120 = vadd.xlane.f32.xlu0 %v1119
    %v1121 = vpop.xlane.xlu0 %1120
    %v1122 = vsel %vm910, %v1114, 0.0
    %1123 = vadd.xlane.f32.xlu0 %v1122
    %v1124 = vpop.xlane.xlu0 %1123
    %v1125 = vsel %vm910, %v1116, 0.0
    %1126 = vadd.xlane.f32.xlu0 %v1125
    %v1127 = vpop.xlane.xlu0 %1126
    %v1128 = vsel %vm910, %v1118, 0.0
    %1129 = vadd.xlane.f32.xlu0 %v1128
    %v1130 = vpop.xlane.xlu0 %1129
    %v1131 = vrcp.pop %v1121
    %v1132 = vrcp.pop %v1124
    %v1133 = vrcp.pop %v1127
    %v1134 = vrcp.pop %v1130
    %v1135 = vmul.f32 %v1112, %v1131
    %v1136 = vmul.f32 %v1114, %v1132
    %v1137 = vmul.f32 %v1116, %v1133
    %v1138 = vmul.f32 %v1118, %v1134
    %v1139 = vpack.c.bf16 %v1135, %v1135
    %v1140 = vpack.c.bf16 %v1136, %v1136
    %v1141 = vpack.c.bf16 %v1137, %v1137
    %v1142 = vpack.c.bf16 %v1138, %v1138
    %v1143 = vpack.c.bf16 %v737, %v737
    %v1144 = vpack.c.bf16 %v789, %v789
    %v1145 = vpack.c.bf16 %v841, %v841
    %v1146 = vpack.c.bf16 %v893, %v893
    %v1148 = vsel %vm910, %v1139, 0
    %vm1150 = vcmask 1043456
    %v1152 = vsel %vm1150, %v1143, 0
    %1154 = vmatprep.subr.bf16.mxu0 0
    %1155 = vmatpush1.bf16.msra.mxu0 %v1152
    %1156 = vmatprep.subr.bf16.mxu0 0
    %1157 = vmatpush1.bf16.msra.mxu0 0
    %1158 = vmatprep.subr.bf16.mxu0 0
    %1159 = vmatpush1.bf16.msra.mxu0 0
    %1160 = vmatprep.subr.bf16.mxu0 0
    %1161 = vmatpush1.bf16.msra.mxu0 0
    %1162 = vmatprep.subr.bf16.mxu0 0
    %1163 = vmatpush1.bf16.msra.mxu0 0
    %1164 = vmatprep.subr.bf16.mxu0 0
    %1165 = vmatpush1.bf16.msra.mxu0 0
    %1166 = vmatprep.subr.bf16.mxu0 0
    %1167 = vmatpush1.bf16.msra.mxu0 0
    %1168 = vmatprep.subr.bf16.mxu0 0
    %1169 = vmatpush1.bf16.msra.mxu0 0
    %1170 = vmatprep.subr.bf16.mxu0 0
    %1171 = vmatpush1.bf16.msra.mxu0 0
    %1172 = vmatprep.subr.bf16.mxu0 0
    %1173 = vmatpush1.bf16.msra.mxu0 0
    %1174 = vmatprep.subr.bf16.mxu0 0
    %1175 = vmatpush1.bf16.msra.mxu0 0
    %1176 = vmatprep.subr.bf16.mxu0 0
    %1177 = vmatpush1.bf16.msra.mxu0 0
    %1178 = vmatprep.subr.bf16.mxu0 0
    %1179 = vmatpush1.bf16.msra.mxu0 0
    %1180 = vmatprep.subr.bf16.mxu0 0
    %1181 = vmatpush1.bf16.msra.mxu0 0
    %1182 = vmatprep.subr.bf16.mxu0 0
    %1183 = vmatpush1.bf16.msra.mxu0 0
    %1184 = vmatprep.subr.bf16.mxu0 0
    %1185 = vmatpush1.bf16.msra.mxu0 0
    %1186 = vmatprep.mubr.bf16.mxu0 0
    %1187 = vmatmul.mubr.bf16.gmra.mrb[0].mxu0 %v1148
    %v1188 = vpop.f32.mrb[0].mxu0
    %v1189 = vadd.f32 0.0, %v1188
    %v1190 = vpop.f32.mrb[0].mxu0
    %v1191 = vpop.f32.mrb[0].mxu0
    %v1192 = vpop.f32.mrb[0].mxu0
    %1193 = vdwg.mxu0
    %v1195 = vsel %vm910, %v1140, 0
    %v1198 = vsel %vm1150, %v1144, 0
    %1200 = vmatprep.subr.bf16.mxu0 0
    %1201 = vmatpush1.bf16.msra.mxu0 %v1198
    %1202 = vmatprep.subr.bf16.mxu0 0
    %1203 = vmatpush1.bf16.msra.mxu0 0
    %1204 = vmatprep.subr.bf16.mxu0 0
    %1205 = vmatpush1.bf16.msra.mxu0 0
    %1206 = vmatprep.subr.bf16.mxu0 0
    %1207 = vmatpush1.bf16.msra.mxu0 0
    %1208 = vmatprep.subr.bf16.mxu0 0
    %1209 = vmatpush1.bf16.msra.mxu0 0
    %1210 = vmatprep.subr.bf16.mxu0 0
    %1211 = vmatpush1.bf16.msra.mxu0 0
    %1212 = vmatprep.subr.bf16.mxu0 0
    %1213 = vmatpush1.bf16.msra.mxu0 0
    %1214 = vmatprep.subr.bf16.mxu0 0
    %1215 = vmatpush1.bf16.msra.mxu0 0
    %1216 = vmatprep.subr.bf16.mxu0 0
    %1217 = vmatpush1.bf16.msra.mxu0 0
    %1218 = vmatprep.subr.bf16.mxu0 0
    %1219 = vmatpush1.bf16.msra.mxu0 0
    %1220 = vmatprep.subr.bf16.mxu0 0
    %1221 = vmatpush1.bf16.msra.mxu0 0
    %1222 = vmatprep.subr.bf16.mxu0 0
    %1223 = vmatpush1.bf16.msra.mxu0 0
    %1224 = vmatprep.subr.bf16.mxu0 0
    %1225 = vmatpush1.bf16.msra.mxu0 0
    %1226 = vmatprep.subr.bf16.mxu0 0
    %1227 = vmatpush1.bf16.msra.mxu0 0
    %1228 = vmatprep.subr.bf16.mxu0 0
    %1229 = vmatpush1.bf16.msra.mxu0 0
    %1230 = vmatprep.subr.bf16.mxu0 0
    %1231 = vmatpush1.bf16.msra.mxu0 0
    %1232 = vmatprep.mubr.bf16.mxu0 0
    %1233 = vmatmul.mubr.bf16.gmra.mrb[0].mxu0 %v1195
    %v1234 = vpop.f32.mrb[0].mxu0
    %v1235 = vadd.f32 0.0, %v1234
    %v1236 = vpop.f32.mrb[0].mxu0
    %v1237 = vpop.f32.mrb[0].mxu0
    %v1238 = vpop.f32.mrb[0].mxu0
    %1239 = vdwg.mxu0
    %v1241 = vsel %vm910, %v1141, 0
    %v1244 = vsel %vm1150, %v1145, 0
    %1246 = vmatprep.subr.bf16.mxu0 0
    %1247 = vmatpush1.bf16.msra.mxu0 %v1244
    %1248 = vmatprep.subr.bf16.mxu0 0
    %1249 = vmatpush1.bf16.msra.mxu0 0
    %1250 = vmatprep.subr.bf16.mxu0 0
    %1251 = vmatpush1.bf16.msra.mxu0 0
    %1252 = vmatprep.subr.bf16.mxu0 0
    %1253 = vmatpush1.bf16.msra.mxu0 0
    %1254 = vmatprep.subr.bf16.mxu0 0
    %1255 = vmatpush1.bf16.msra.mxu0 0
    %1256 = vmatprep.subr.bf16.mxu0 0
    %1257 = vmatpush1.bf16.msra.mxu0 0
    %1258 = vmatprep.subr.bf16.mxu0 0
    %1259 = vmatpush1.bf16.msra.mxu0 0
    %1260 = vmatprep.subr.bf16.mxu0 0
    %1261 = vmatpush1.bf16.msra.mxu0 0
    %1262 = vmatprep.subr.bf16.mxu0 0
    %1263 = vmatpush1.bf16.msra.mxu0 0
    %1264 = vmatprep.subr.bf16.mxu0 0
    %1265 = vmatpush1.bf16.msra.mxu0 0
    %1266 = vmatprep.subr.bf16.mxu0 0
    %1267 = vmatpush1.bf16.msra.mxu0 0
    %1268 = vmatprep.subr.bf16.mxu0 0
    %1269 = vmatpush1.bf16.msra.mxu0 0
    %1270 = vmatprep.subr.bf16.mxu0 0
    %1271 = vmatpush1.bf16.msra.mxu0 0
    %1272 = vmatprep.subr.bf16.mxu0 0
    %1273 = vmatpush1.bf16.msra.mxu0 0
    %1274 = vmatprep.subr.bf16.mxu0 0
    %1275 = vmatpush1.bf16.msra.mxu0 0
    %1276 = vmatprep.subr.bf16.mxu0 0
    %1277 = vmatpush1.bf16.msra.mxu0 0
    %1278 = vmatprep.mubr.bf16.mxu0 0
    %1279 = vmatmul.mubr.bf16.gmra.mrb[0].mxu0 %v1241
    %v1280 = vpop.f32.mrb[0].mxu0
    %v1281 = vadd.f32 0.0, %v1280
    %v1282 = vpop.f32.mrb[0].mxu0
    %v1283 = vpop.f32.mrb[0].mxu0
    %v1284 = vpop.f32.mrb[0].mxu0
    %1285 = vdwg.mxu0
    %v1287 = vsel %vm910, %v1142, 0
    %v1290 = vsel %vm1150, %v1146, 0
    %1292 = vmatprep.subr.bf16.mxu0 0
    %1293 = vmatpush1.bf16.msra.mxu0 %v1290
    %1294 = vmatprep.subr.bf16.mxu0 0
    %1295 = vmatpush1.bf16.msra.mxu0 0
    %1296 = vmatprep.subr.bf16.mxu0 0
    %1297 = vmatpush1.bf16.msra.mxu0 0
    %1298 = vmatprep.subr.bf16.mxu0 0
    %1299 = vmatpush1.bf16.msra.mxu0 0
    %1300 = vmatprep.subr.bf16.mxu0 0
    %1301 = vmatpush1.bf16.msra.mxu0 0
    %1302 = vmatprep.subr.bf16.mxu0 0
    %1303 = vmatpush1.bf16.msra.mxu0 0
    %1304 = vmatprep.subr.bf16.mxu0 0
    %1305 = vmatpush1.bf16.msra.mxu0 0
    %1306 = vmatprep.subr.bf16.mxu0 0
    %1307 = vmatpush1.bf16.msra.mxu0 0
    %1308 = vmatprep.subr.bf16.mxu0 0
    %1309 = vmatpush1.bf16.msra.mxu0 0
    %1310 = vmatprep.subr.bf16.mxu0 0
    %1311 = vmatpush1.bf16.msra.mxu0 0
    %1312 = vmatprep.subr.bf16.mxu0 0
    %1313 = vmatpush1.bf16.msra.mxu0 0
    %1314 = vmatprep.subr.bf16.mxu0 0
    %1315 = vmatpush1.bf16.msra.mxu0 0
    %1316 = vmatprep.subr.bf16.mxu0 0
    %1317 = vmatpush1.bf16.msra.mxu0 0
    %1318 = vmatprep.subr.bf16.mxu0 0
    %1319 = vmatpush1.bf16.msra.mxu0 0
    %1320 = vmatprep.subr.bf16.mxu0 0
    %1321 = vmatpush1.bf16.msra.mxu0 0
    %1322 = vmatprep.subr.bf16.mxu0 0
    %1323 = vmatpush1.bf16.msra.mxu0 0
    %1324 = vmatprep.mubr.bf16.mxu0 0
    %1325 = vmatmul.mubr.bf16.gmra.mrb[0].mxu0 %v1287
    %v1326 = vpop.f32.mrb[0].mxu0
    %v1327 = vadd.f32 0.0, %v1326
    %v1328 = vpop.f32.mrb[0].mxu0
    %v1329 = vpop.f32.mrb[0].mxu0
    %v1330 = vpop.f32.mrb[0].mxu0
    %1331 = vdwg.mxu0
    %v1332 = vpack.c.bf16 %v1189, %v1189
    %v1333 = vpack.c.bf16 %v1235, %v1235
    %v1334 = vpack.c.bf16 %v1281, %v1281
    %v1335 = vpack.c.bf16 %v1327, %v1327
    %v1336 = vld [vmem:[%s6] sm:$0xf]
    %v1337 = vld [vmem:[%s6 + $0x4] sm:$0xf]
    %v1338 = vld [vmem:[%s6 + $0x8] sm:$0xf]
    %v1339 = vld [vmem:[%s6 + $0xc] sm:$0xf]
    %v1341 = vsel %vm910, %v1332, 0
    %v1344 = vsel %vm1150, %v1336, 0
    %1346 = vmatprep.subr.bf16.mxu0 0
    %1347 = vmatpush1.bf16.msra.mxu0 %v1344
    %1348 = vmatprep.subr.bf16.mxu0 0
    %1349 = vmatpush1.bf16.msra.mxu0 0
    %1350 = vmatprep.subr.bf16.mxu0 0
    %1351 = vmatpush1.bf16.msra.mxu0 0
    %1352 = vmatprep.subr.bf16.mxu0 0
    %1353 = vmatpush1.bf16.msra.mxu0 0
    %1354 = vmatprep.subr.bf16.mxu0 0
    %1355 = vmatpush1.bf16.msra.mxu0 0
    %1356 = vmatprep.subr.bf16.mxu0 0
    %1357 = vmatpush1.bf16.msra.mxu0 0
    %1358 = vmatprep.subr.bf16.mxu0 0
    %1359 = vmatpush1.bf16.msra.mxu0 0
    %1360 = vmatprep.subr.bf16.mxu0 0
    %1361 = vmatpush1.bf16.msra.mxu0 0
    %1362 = vmatprep.subr.bf16.mxu0 0
    %1363 = vmatpush1.bf16.msra.mxu0 0
    %1364 = vmatprep.subr.bf16.mxu0 0
    %1365 = vmatpush1.bf16.msra.mxu0 0
    %1366 = vmatprep.subr.bf16.mxu0 0
    %1367 = vmatpush1.bf16.msra.mxu0 0
    %1368 = vmatprep.subr.bf16.mxu0 0
    %1369 = vmatpush1.bf16.msra.mxu0 0
    %1370 = vmatprep.subr.bf16.mxu0 0
    %1371 = vmatpush1.bf16.msra.mxu0 0
    %1372 = vmatprep.subr.bf16.mxu0 0
    %1373 = vmatpush1.bf16.msra.mxu0 0
    %1374 = vmatprep.subr.bf16.mxu0 0
    %1375 = vmatpush1.bf16.msra.mxu0 0
    %1376 = vmatprep.subr.bf16.mxu0 0
    %1377 = vmatpush1.bf16.msra.mxu0 0
    %1378 = vmatprep.mubr.bf16.mxu0 0
    %1379 = vmatmul.mubr.bf16.gmra.mrb[0].mxu0 %v1341
    %v1380 = vpop.f32.mrb[0].mxu0
    %v1381 = vadd.f32 0.0, %v1380
    %v1382 = vpop.f32.mrb[0].mxu0
    %v1383 = vpop.f32.mrb[0].mxu0
    %v1384 = vpop.f32.mrb[0].mxu0
    %1385 = vdwg.mxu0
    %v1387 = vsel %vm910, %v1333, 0
    %v1390 = vsel %vm1150, %v1337, 0
    %1392 = vmatprep.subr.bf16.mxu0 0
    %1393 = vmatpush1.bf16.msra.mxu0 %v1390
    %1394 = vmatprep.subr.bf16.mxu0 0
    %1395 = vmatpush1.bf16.msra.mxu0 0
    %1396 = vmatprep.subr.bf16.mxu0 0
    %1397 = vmatpush1.bf16.msra.mxu0 0
    %1398 = vmatprep.subr.bf16.mxu0 0
    %1399 = vmatpush1.bf16.msra.mxu0 0
    %1400 = vmatprep.subr.bf16.mxu0 0
    %1401 = vmatpush1.bf16.msra.mxu0 0
    %1402 = vmatprep.subr.bf16.mxu0 0
    %1403 = vmatpush1.bf16.msra.mxu0 0
    %1404 = vmatprep.subr.bf16.mxu0 0
    %1405 = vmatpush1.bf16.msra.mxu0 0
    %1406 = vmatprep.subr.bf16.mxu0 0
    %1407 = vmatpush1.bf16.msra.mxu0 0
    %1408 = vmatprep.subr.bf16.mxu0 0
    %1409 = vmatpush1.bf16.msra.mxu0 0
    %1410 = vmatprep.subr.bf16.mxu0 0
    %1411 = vmatpush1.bf16.msra.mxu0 0
    %1412 = vmatprep.subr.bf16.mxu0 0
    %1413 = vmatpush1.bf16.msra.mxu0 0
    %1414 = vmatprep.subr.bf16.mxu0 0
    %1415 = vmatpush1.bf16.msra.mxu0 0
    %1416 = vmatprep.subr.bf16.mxu0 0
    %1417 = vmatpush1.bf16.msra.mxu0 0
    %1418 = vmatprep.subr.bf16.mxu0 0
    %1419 = vmatpush1.bf16.msra.mxu0 0
    %1420 = vmatprep.subr.bf16.mxu0 0
    %1421 = vmatpush1.bf16.msra.mxu0 0
    %1422 = vmatprep.subr.bf16.mxu0 0
    %1423 = vmatpush1.bf16.msra.mxu0 0
    %1424 = vmatprep.mubr.bf16.mxu0 0
    %1425 = vmatmul.mubr.bf16.gmra.mrb[0].mxu0 %v1387
    %v1426 = vpop.f32.mrb[0].mxu0
    %v1427 = vadd.f32 0.0, %v1426
    %v1428 = vpop.f32.mrb[0].mxu0
    %v1429 = vpop.f32.mrb[0].mxu0
    %v1430 = vpop.f32.mrb[0].mxu0
    %1431 = vdwg.mxu0
    %v1433 = vsel %vm910, %v1334, 0
    %v1436 = vsel %vm1150, %v1338, 0
    %1438 = vmatprep.subr.bf16.mxu0 0
    %1439 = vmatpush1.bf16.msra.mxu0 %v1436
    %1440 = vmatprep.subr.bf16.mxu0 0
    %1441 = vmatpush1.bf16.msra.mxu0 0
    %1442 = vmatprep.subr.bf16.mxu0 0
    %1443 = vmatpush1.bf16.msra.mxu0 0
    %1444 = vmatprep.subr.bf16.mxu0 0
    %1445 = vmatpush1.bf16.msra.mxu0 0
    %1446 = vmatprep.subr.bf16.mxu0 0
    %1447 = vmatpush1.bf16.msra.mxu0 0
    %1448 = vmatprep.subr.bf16.mxu0 0
    %1449 = vmatpush1.bf16.msra.mxu0 0
    %1450 = vmatprep.subr.bf16.mxu0 0
    %1451 = vmatpush1.bf16.msra.mxu0 0
    %1452 = vmatprep.subr.bf16.mxu0 0
    %1453 = vmatpush1.bf16.msra.mxu0 0
    %1454 = vmatprep.subr.bf16.mxu0 0
    %1455 = vmatpush1.bf16.msra.mxu0 0
    %1456 = vmatprep.subr.bf16.mxu0 0
    %1457 = vmatpush1.bf16.msra.mxu0 0
    %1458 = vmatprep.subr.bf16.mxu0 0
    %1459 = vmatpush1.bf16.msra.mxu0 0
    %1460 = vmatprep.subr.bf16.mxu0 0
    %1461 = vmatpush1.bf16.msra.mxu0 0
    %1462 = vmatprep.subr.bf16.mxu0 0
    %1463 = vmatpush1.bf16.msra.mxu0 0
    %1464 = vmatprep.subr.bf16.mxu0 0
    %1465 = vmatpush1.bf16.msra.mxu0 0
    %1466 = vmatprep.subr.bf16.mxu0 0
    %1467 = vmatpush1.bf16.msra.mxu0 0
    %1468 = vmatprep.subr.bf16.mxu0 0
    %1469 = vmatpush1.bf16.msra.mxu0 0
    %1470 = vmatprep.mubr.bf16.mxu0 0
    %1471 = vmatmul.mubr.bf16.gmra.mrb[0].mxu0 %v1433
    %v1472 = vpop.f32.mrb[0].mxu0
    %v1473 = vadd.f32 0.0, %v1472
    %v1474 = vpop.f32.mrb[0].mxu0
    %v1475 = vpop.f32.mrb[0].mxu0
    %v1476 = vpop.f32.mrb[0].mxu0
    %1477 = vdwg.mxu0
    %v1479 = vsel %vm910, %v1335, 0
    %v1482 = vsel %vm1150, %v1339, 0
    %1484 = vmatprep.subr.bf16.mxu0 0
    %1485 = vmatpush1.bf16.msra.mxu0 %v1482
    %1486 = vmatprep.subr.bf16.mxu0 0
    %1487 = vmatpush1.bf16.msra.mxu0 0
    %1488 = vmatprep.subr.bf16.mxu0 0
    %1489 = vmatpush1.bf16.msra.mxu0 0
    %1490 = vmatprep.subr.bf16.mxu0 0
    %1491 = vmatpush1.bf16.msra.mxu0 0
    %1492 = vmatprep.subr.bf16.mxu0 0
    %1493 = vmatpush1.bf16.msra.mxu0 0
    %1494 = vmatprep.subr.bf16.mxu0 0
    %1495 = vmatpush1.bf16.msra.mxu0 0
    %1496 = vmatprep.subr.bf16.mxu0 0
    %1497 = vmatpush1.bf16.msra.mxu0 0
    %1498 = vmatprep.subr.bf16.mxu0 0
    %1499 = vmatpush1.bf16.msra.mxu0 0
    %1500 = vmatprep.subr.bf16.mxu0 0
    %1501 = vmatpush1.bf16.msra.mxu0 0
    %1502 = vmatprep.subr.bf16.mxu0 0
    %1503 = vmatpush1.bf16.msra.mxu0 0
    %1504 = vmatprep.subr.bf16.mxu0 0
    %1505 = vmatpush1.bf16.msra.mxu0 0
    %1506 = vmatprep.subr.bf16.mxu0 0
    %1507 = vmatpush1.bf16.msra.mxu0 0
    %1508 = vmatprep.subr.bf16.mxu0 0
    %1509 = vmatpush1.bf16.msra.mxu0 0
    %1510 = vmatprep.subr.bf16.mxu0 0
    %1511 = vmatpush1.bf16.msra.mxu0 0
    %1512 = vmatprep.subr.bf16.mxu0 0
    %1513 = vmatpush1.bf16.msra.mxu0 0
    %1514 = vmatprep.subr.bf16.mxu0 0
    %1515 = vmatpush1.bf16.msra.mxu0 0
    %1516 = vmatprep.mubr.bf16.mxu0 0
    %1517 = vmatmul.mubr.bf16.gmra.mrb[0].mxu0 %v1479
    %v1518 = vpop.f32.mrb[0].mxu0
    %v1519 = vadd.f32 0.0, %v1518
    %v1520 = vpop.f32.mrb[0].mxu0
    %v1521 = vpop.f32.mrb[0].mxu0
    %v1522 = vpop.f32.mrb[0].mxu0
    %1523 = vdwg.mxu0
    %v1524 = vsel %vm282, %v1381, 0.0
    %v1525 = vsel %vm282, %v1427, 0.0
    %v1526 = vadd.f32 %v1524, %v1525
    %v1527 = vsel %vm282, %v1473, 0.0
    %v1528 = vadd.f32 %v1526, %v1527
    %v1529 = vsel %vm282, %v1519, 0.0
    %v1530 = vadd.f32 %v1528, %v1529
    %v1531 = vld [vmem:[%s7] sm:$0x1]
    %v1533 = vlaneseq
    %v1534 = vshrl.u32 %v1533, 7
    %v1535 = vsub.s32 0, %v1534
    %v1536 = vrot.slane %v1531, %v1535
    %v1538 = vadd.f32 %v1530, %v1536
    %v1539 = vadd.f32 %v130, %v1538
    %v1540 = vld [vmem:[%s12] sm:$0x1]
    %v1541 = vld [vmem:[%s13] sm:$0x1]
    %v1542 = vsel %vm282, %v1539, 0.0
    %1543 = vadd.xlane.f32.xlu0 %v1542
    %v1544 = vpop.xlane.xlu0 %1543
    %v1545 = vrcp.pop 32.0
    %v1546 = vmul.f32 %v1544, %v1545
    %v1547 = vsub.f32 %v1539, %v1546
    %v1548 = vmul.f32 %v1547, %v1547
    %v1549 = vsel %vm282, %v1548, 0.0
    %1550 = vadd.xlane.f32.xlu0 %v1549
    %v1551 = vpop.xlane.xlu0 %1550
    %v1552 = vmul.f32 %v1551, %v1545
    %v1553 = vadd.f32 %v1552, 1e-05
    %v1554 = vrsqrt.pop %v1553
    %v1555 = vmul.f32 %v1547, %v1554
    %v1557 = vlaneseq
    %v1558 = vshrl.u32 %v1557, 7
    %v1559 = vsub.s32 0, %v1558
    %v1560 = vrot.slane %v1540, %v1559
    %v1562 = vmul.f32 %v1555, %v1560
    %v1564 = vlaneseq
    %v1565 = vshrl.u32 %v1564, 7
    %v1566 = vsub.s32 0, %v1565
    %v1567 = vrot.slane %v1541, %v1566
    %v1569 = vadd.f32 %v1562, %v1567
    %v1570 = vpack.c.bf16 %v1569, %v1569
    %v1571 = vld [vmem:[%s8] sm:$0xf]
    %v1572 = vld [vmem:[%s8 + $0x4] sm:$0xf]
    %v1573 = vld [vmem:[%s8 + $0x8] sm:$0xf]
    %v1574 = vld [vmem:[%s8 + $0xc] sm:$0xf]
    %v1575 = vld [vmem:[%s9] sm:$0x1]
    %v1577 = vlaneseq
    %v1578 = vshrl.u32 %v1577, 7
    %v1579 = vsub.s32 0, %v1578
    %v1580 = vrot.slane %v1575, %v1579
    %v1586 = vunpack.c.l.b16 %v1571
    %v1587 = vunpack.c.l.b16 %v1572
    %v1588 = vunpack.c.l.b16 %v1573
    %v1589 = vunpack.c.l.b16 %v1574
    %v1590 = vpack.c.b16 %v1587, %v1586
    %v1591 = vpack.c.b16 %v1589, %v1588
    %v1595 = vsel %vm282, %v1570, 0
    %1597 = vmatprep.subr.bf16.mxu0 0
    %1598 = vmatpush1.bf16.msra.mxu0 %v1590
    %1599 = vmatprep.subr.bf16.mxu0 0
    %1600 = vmatpush1.bf16.msra.mxu0 %v1591
    %1601 = vmatprep.subr.bf16.mxu0 0
    %1602 = vmatpush1.bf16.msra.mxu0 0
    %1603 = vmatprep.subr.bf16.mxu0 0
    %1604 = vmatpush1.bf16.msra.mxu0 0
    %1605 = vmatprep.subr.bf16.mxu0 0
    %1606 = vmatpush1.bf16.msra.mxu0 0
    %1607 = vmatprep.subr.bf16.mxu0 0
    %1608 = vmatpush1.bf16.msra.mxu0 0
    %1609 = vmatprep.subr.bf16.mxu0 0
    %1610 = vmatpush1.bf16.msra.mxu0 0
    %1611 = vmatprep.subr.bf16.mxu0 0
    %1612 = vmatpush1.bf16.msra.mxu0 0
    %1613 = vmatprep.subr.bf16.mxu0 0
    %1614 = vmatpush1.bf16.msra.mxu0 0
    %1615 = vmatprep.subr.bf16.mxu0 0
    %1616 = vmatpush1.bf16.msra.mxu0 0
    %1617 = vmatprep.subr.bf16.mxu0 0
    %1618 = vmatpush1.bf16.msra.mxu0 0
    %1619 = vmatprep.subr.bf16.mxu0 0
    %1620 = vmatpush1.bf16.msra.mxu0 0
    %1621 = vmatprep.subr.bf16.mxu0 0
    %1622 = vmatpush1.bf16.msra.mxu0 0
    %1623 = vmatprep.subr.bf16.mxu0 0
    %1624 = vmatpush1.bf16.msra.mxu0 0
    %1625 = vmatprep.subr.bf16.mxu0 0
    %1626 = vmatpush1.bf16.msra.mxu0 0
    %1627 = vmatprep.subr.bf16.mxu0 0
    %1628 = vmatpush1.bf16.msra.mxu0 0
    %1629 = vmatprep.mubr.bf16.mxu0 0
    %1630 = vmatmul.mubr.bf16.gmra.mrb[0].mxu0 %v1595
    %v1631 = vpop.f32.mrb[0].mxu0
    %v1632 = vadd.f32 %v1580, %v1631
    %v1633 = vpop.f32.mrb[0].mxu0
    %v1634 = vpop.f32.mrb[0].mxu0
    %v1635 = vpop.f32.mrb[0].mxu0
    %1636 = vdwg.mxu0
    %v1637 = vxor.u32 %v1632, 2147483648
    %v1638 = vmul.f32 %v1637, 1.442695
    %v1639 = vpow.pop %v1638
    %v1640 = vadd.f32 %v1639, 1.0
    %v1641 = vrcp.pop %v1640
    %v1642 = vmul.f32 1.0, %v1641
    %v1643 = vmul.f32 %v1632, %v1642
    %v1644 = vpack.c.bf16 %v1643, %v1643
    %v1645 = vld [vmem:[%s10] sm:$0xf]
    %v1646 = vld [vmem:[%s10 + $0x4] sm:$0xf]
    %v1647 = vld [vmem:[%s10 + $0x8] sm:$0xf]
    %v1648 = vld [vmem:[%s10 + $0xc] sm:$0xf]
    %v1649 = vld [vmem:[%s11] sm:$0x1]
    %v1651 = vlaneseq
    %v1652 = vshrl.u32 %v1651, 7
    %v1653 = vsub.s32 0, %v1652
    %v1654 = vrot.slane %v1649, %v1653
    %v1660 = vunpack.c.l.b16 %v1645
    %v1661 = vunpack.c.l.b16 %v1646
    %v1662 = vunpack.c.l.b16 %v1647
    %v1663 = vunpack.c.l.b16 %v1648
    %v1664 = vpack.c.b16 %v1661, %v1660
    %v1665 = vpack.c.b16 %v1663, %v1662
    %v1669 = vsel %vm282, %v1644, 0
    %1671 = vmatprep.subr.bf16.mxu0 0
    %1672 = vmatpush1.bf16.msra.mxu0 %v1664
    %1673 = vmatprep.subr.bf16.mxu0 0
    %1674 = vmatpush1.bf16.msra.mxu0 %v1665
    %1675 = vmatprep.subr.bf16.mxu0 0
    %1676 = vmatpush1.bf16.msra.mxu0 0
    %1677 = vmatprep.subr.bf16.mxu0 0
    %1678 = vmatpush1.bf16.msra.mxu0 0
    %1679 = vmatprep.subr.bf16.mxu0 0
    %1680 = vmatpush1.bf16.msra.mxu0 0
    %1681 = vmatprep.subr.bf16.mxu0 0
    %1682 = vmatpush1.bf16.msra.mxu0 0
    %1683 = vmatprep.subr.bf16.mxu0 0
    %1684 = vmatpush1.bf16.msra.mxu0 0
    %1685 = vmatprep.subr.bf16.mxu0 0
    %1686 = vmatpush1.bf16.msra.mxu0 0
    %1687 = vmatprep.subr.bf16.mxu0 0
    %1688 = vmatpush1.bf16.msra.mxu0 0
    %1689 = vmatprep.subr.bf16.mxu0 0
    %1690 = vmatpush1.bf16.msra.mxu0 0
    %1691 = vmatprep.subr.bf16.mxu0 0
    %1692 = vmatpush1.bf16.msra.mxu0 0
    %1693 = vmatprep.subr.bf16.mxu0 0
    %1694 = vmatpush1.bf16.msra.mxu0 0
    %1695 = vmatprep.subr.bf16.mxu0 0
    %1696 = vmatpush1.bf16.msra.mxu0 0
    %1697 = vmatprep.subr.bf16.mxu0 0
    %1698 = vmatpush1.bf16.msra.mxu0 0
    %1699 = vmatprep.subr.bf16.mxu0 0
    %1700 = vmatpush1.bf16.msra.mxu0 0
    %1701 = vmatprep.subr.bf16.mxu0 0
    %1702 = vmatpush1.bf16.msra.mxu0 0
    %1703 = vmatprep.mubr.bf16.mxu0 0
    %1704 = vmatmul.mubr.bf16.gmra.mrb[0].mxu0 %v1669
    %v1705 = vpop.f32.mrb[0].mxu0
    %v1706 = vadd.f32 %v1654, %v1705
    %v1707 = vpop.f32.mrb[0].mxu0
    %v1708 = vpop.f32.mrb[0].mxu0
    %v1709 = vpop.f32.mrb[0].mxu0
    %1710 = vdwg.mxu0
    %v1711 = vadd.f32 %v1569, %v1706
    %v1712 = vld [vmem:[%s14] sm:$0x1]
    %v1713 = vld [vmem:[%s15] sm:$0x1]
    %v1714 = vsel %vm282, %v1711, 0.0
    %1715 = vadd.xlane.f32.xlu0 %v1714
    %v1716 = vpop.xlane.xlu0 %1715
    %v1717 = vmul.f32 %v1716, %v1545
    %v1718 = vsub.f32 %v1711, %v1717
    %v1719 = vmul.f32 %v1718, %v1718
    %v1720 = vsel %vm282, %v1719, 0.0
    %1721 = vadd.xlane.f32.xlu0 %v1720
    %v1722 = vpop.xlane.xlu0 %1721
    %v1723 = vmul.f32 %v1722, %v1545
    %v1724 = vadd.f32 %v1723, 1e-05
    %v1725 = vrsqrt.pop %v1724
    %v1726 = vmul.f32 %v1718, %v1725
    %v1728 = vlaneseq
    %v1729 = vshrl.u32 %v1728, 7
    %v1730 = vsub.s32 0, %v1729
    %v1731 = vrot.slane %v1712, %v1730
    %v1733 = vmul.f32 %v1726, %v1731
    %v1735 = vlaneseq
    %v1736 = vshrl.u32 %v1735, 7
    %v1737 = vsub.s32 0, %v1736
    %v1738 = vrot.slane %v1713, %v1737
    %v1740 = vadd.f32 %v1733, %v1738
    %v1741 = vpack.c.bf16 %v1740, %v1740
    %s1742 = scalar_lea.vmem %s4, 192
    %v1743 = vld [vmem:[%s1742] sm:$0xf]
    %v1744 = vld [vmem:[%s1742 + $0x4] sm:$0xf]
    %v1745 = vld [vmem:[%s1742 + $0x8] sm:$0xf]
    %v1746 = vld [vmem:[%s1742 + $0xc] sm:$0xf]
    %v1747 = vld [vmem:[%s1742 + $0x10] sm:$0xf]
    %v1748 = vld [vmem:[%s1742 + $0x14] sm:$0xf]
    %v1749 = vld [vmem:[%s1742 + $0x18] sm:$0xf]
    %v1750 = vld [vmem:[%s1742 + $0x1c] sm:$0xf]
    %v1751 = vld [vmem:[%s1742 + $0x20] sm:$0xf]
    %v1752 = vld [vmem:[%s1742 + $0x24] sm:$0xf]
    %v1753 = vld [vmem:[%s1742 + $0x28] sm:$0xf]
    %v1754 = vld [vmem:[%s1742 + $0x2c] sm:$0xf]
    %v1755 = vld [vmem:[%s1742 + $0x30] sm:$0xf]
    %v1756 = vld [vmem:[%s1742 + $0x34] sm:$0xf]
    %v1757 = vld [vmem:[%s1742 + $0x38] sm:$0xf]
    %v1758 = vld [vmem:[%s1742 + $0x3c] sm:$0xf]
    %v1759 = vld [vmem:[%s1742 + $0x40] sm:$0xf]
    %v1760 = vld [vmem:[%s1742 + $0x44] sm:$0xf]
    %v1761 = vld [vmem:[%s1742 + $0x48] sm:$0xf]
    %v1762 = vld [vmem:[%s1742 + $0x4c] sm:$0xf]
    %v1763 = vld [vmem:[%s1742 + $0x50] sm:$0xf]
    %v1764 = vld [vmem:[%s1742 + $0x54] sm:$0xf]
    %v1765 = vld [vmem:[%s1742 + $0x58] sm:$0xf]
    %v1766 = vld [vmem:[%s1742 + $0x5c] sm:$0xf]
    %v1767 = vld [vmem:[%s1742 + $0x60] sm:$0xf]
    %v1768 = vld [vmem:[%s1742 + $0x64] sm:$0xf]
    %v1769 = vld [vmem:[%s1742 + $0x68] sm:$0xf]
    %v1770 = vld [vmem:[%s1742 + $0x6c] sm:$0xf]
    %v1771 = vld [vmem:[%s1742 + $0x70] sm:$0xf]
    %v1772 = vld [vmem:[%s1742 + $0x74] sm:$0xf]
    %v1773 = vld [vmem:[%s1742 + $0x78] sm:$0xf]
    %v1774 = vld [vmem:[%s1742 + $0x7c] sm:$0xf]
    %v1775 = vld [vmem:[%s1742 + $0x80] sm:$0xf]
    %v1776 = vld [vmem:[%s1742 + $0x84] sm:$0xf]
    %v1777 = vld [vmem:[%s1742 + $0x88] sm:$0xf]
    %v1778 = vld [vmem:[%s1742 + $0x8c] sm:$0xf]
    %v1779 = vld [vmem:[%s1742 + $0x90] sm:$0xf]
    %v1780 = vld [vmem:[%s1742 + $0x94] sm:$0xf]
    %v1781 = vld [vmem:[%s1742 + $0x98] sm:$0xf]
    %v1782 = vld [vmem:[%s1742 + $0x9c] sm:$0xf]
    %v1783 = vld [vmem:[%s1742 + $0xa0] sm:$0xf]
    %v1784 = vld [vmem:[%s1742 + $0xa4] sm:$0xf]
    %v1785 = vld [vmem:[%s1742 + $0xa8] sm:$0xf]
    %v1786 = vld [vmem:[%s1742 + $0xac] sm:$0xf]
    %v1787 = vld [vmem:[%s1742 + $0xb0] sm:$0xf]
    %v1788 = vld [vmem:[%s1742 + $0xb4] sm:$0xf]
    %v1789 = vld [vmem:[%s1742 + $0xb8] sm:$0xf]
    %v1790 = vld [vmem:[%s1742 + $0xbc] sm:$0xf]
    %s1791 = scalar_lea.vmem %s5, 12
    %v1792 = vld [vmem:[%s1791] sm:$0x1]
    %v1793 = vld [vmem:[%s1791 + $0x1] sm:$0x1]
    %v1794 = vld [vmem:[%s1791 + $0x2] sm:$0x1]
    %v1795 = vld [vmem:[%s1791 + $0x3] sm:$0x1]
    %v1796 = vld [vmem:[%s1791 + $0x4] sm:$0x1]
    %v1797 = vld [vmem:[%s1791 + $0x5] sm:$0x1]
    %v1798 = vld [vmem:[%s1791 + $0x6] sm:$0x1]
    %v1799 = vld [vmem:[%s1791 + $0x7] sm:$0x1]
    %v1800 = vld [vmem:[%s1791 + $0x8] sm:$0x1]
    %v1801 = vld [vmem:[%s1791 + $0x9] sm:$0x1]
    %v1802 = vld [vmem:[%s1791 + $0xa] sm:$0x1]
    %v1803 = vld [vmem:[%s1791 + $0xb] sm:$0x1]
    %v1816 = vlaneseq
    %v1817 = vshrl.u32 %v1816, 7
    %v1818 = vsub.s32 0, %v1817
    %v1819 = vrot.slane %v1792, %v1818
    %v1820 = vlaneseq
    %v1821 = vshrl.u32 %v1820, 7
    %v1822 = vsub.s32 0, %v1821
    %v1823 = vrot.slane %v1793, %v1822
    %v1824 = vlaneseq
    %v1825 = vshrl.u32 %v1824, 7
    %v1826 = vsub.s32 0, %v1825
    %v1827 = vrot.slane %v1794, %v1826
    %v1828 = vlaneseq
    %v1829 = vshrl.u32 %v1828, 7
    %v1830 = vsub.s32 0, %v1829
    %v1831 = vrot.slane %v1795, %v1830
    %v1832 = vlaneseq
    %v1833 = vshrl.u32 %v1832, 7
    %v1834 = vsub.s32 0, %v1833
    %v1835 = vrot.slane %v1796, %v1834
    %v1836 = vlaneseq
    %v1837 = vshrl.u32 %v1836, 7
    %v1838 = vsub.s32 0, %v1837
    %v1839 = vrot.slane %v1797, %v1838
    %v1840 = vlaneseq
    %v1841 = vshrl.u32 %v1840, 7
    %v1842 = vsub.s32 0, %v1841
    %v1843 = vrot.slane %v1798, %v1842
    %v1844 = vlaneseq
    %v1845 = vshrl.u32 %v1844, 7
    %v1846 = vsub.s32 0, %v1845
    %v1847 = vrot.slane %v1799, %v1846
    %v1848 = vlaneseq
    %v1849 = vshrl.u32 %v1848, 7
    %v1850 = vsub.s32 0, %v1849
    %v1851 = vrot.slane %v1800, %v1850
    %v1852 = vlaneseq
    %v1853 = vshrl.u32 %v1852, 7
    %v1854 = vsub.s32 0, %v1853
    %v1855 = vrot.slane %v1801, %v1854
    %v1856 = vlaneseq
    %v1857 = vshrl.u32 %v1856, 7
    %v1858 = vsub.s32 0, %v1857
    %v1859 = vrot.slane %v1802, %v1858
    %v1860 = vlaneseq
    %v1861 = vshrl.u32 %v1860, 7
    %v1862 = vsub.s32 0, %v1861
    %v1863 = vrot.slane %v1803, %v1862
    %v1880 = vunpack.c.l.b16 %v1743
    %v1881 = vunpack.c.l.b16 %v1744
    %v1882 = vunpack.c.l.b16 %v1745
    %v1883 = vunpack.c.l.b16 %v1746
    %v1884 = vpack.c.b16 %v1881, %v1880
    %v1885 = vpack.c.b16 %v1883, %v1882
    %v1889 = vsel %vm282, %v1741, 0
    %1891 = vmatprep.subr.bf16.mxu0 0
    %1892 = vmatpush1.bf16.msra.mxu0 %v1884
    %1893 = vmatprep.subr.bf16.mxu0 0
    %1894 = vmatpush1.bf16.msra.mxu0 %v1885
    %1895 = vmatprep.subr.bf16.mxu0 0
    %1896 = vmatpush1.bf16.msra.mxu0 0
    %1897 = vmatprep.subr.bf16.mxu0 0
    %1898 = vmatpush1.bf16.msra.mxu0 0
    %1899 = vmatprep.subr.bf16.mxu0 0
    %1900 = vmatpush1.bf16.msra.mxu0 0
    %1901 = vmatprep.subr.bf16.mxu0 0
    %1902 = vmatpush1.bf16.msra.mxu0 0
    %1903 = vmatprep.subr.bf16.mxu0 0
    %1904 = vmatpush1.bf16.msra.mxu0 0
    %1905 = vmatprep.subr.bf16.mxu0 0
    %1906 = vmatpush1.bf16.msra.mxu0 0
    %1907 = vmatprep.subr.bf16.mxu0 0
    %1908 = vmatpush1.bf16.msra.mxu0 0
    %1909 = vmatprep.subr.bf16.mxu0 0
    %1910 = vmatpush1.bf16.msra.mxu0 0
    %1911 = vmatprep.subr.bf16.mxu0 0
    %1912 = vmatpush1.bf16.msra.mxu0 0
    %1913 = vmatprep.subr.bf16.mxu0 0
    %1914 = vmatpush1.bf16.msra.mxu0 0
    %1915 = vmatprep.subr.bf16.mxu0 0
    %1916 = vmatpush1.bf16.msra.mxu0 0
    %1917 = vmatprep.subr.bf16.mxu0 0
    %1918 = vmatpush1.bf16.msra.mxu0 0
    %1919 = vmatprep.subr.bf16.mxu0 0
    %1920 = vmatpush1.bf16.msra.mxu0 0
    %1921 = vmatprep.subr.bf16.mxu0 0
    %1922 = vmatpush1.bf16.msra.mxu0 0
    %1923 = vmatprep.mubr.bf16.mxu0 0
    %1924 = vmatmul.mubr.bf16.gmra.mrb[0].mxu0 %v1889
    %v1925 = vpop.f32.mrb[0].mxu0
    %v1926 = vadd.f32 %v1819, %v1925
    %v1927 = vpop.f32.mrb[0].mxu0
    %v1928 = vpop.f32.mrb[0].mxu0
    %v1929 = vpop.f32.mrb[0].mxu0
    %1930 = vdwg.mxu0
    %v1935 = vunpack.c.l.b16 %v1747
    %v1936 = vunpack.c.l.b16 %v1748
    %v1937 = vunpack.c.l.b16 %v1749
    %v1938 = vunpack.c.l.b16 %v1750
    %v1939 = vpack.c.b16 %v1936, %v1935
    %v1940 = vpack.c.b16 %v1938, %v1937
    %1943 = vmatprep.subr.bf16.mxu0 0
    %1944 = vmatpush1.bf16.msra.mxu0 %v1939
    %1945 = vmatprep.subr.bf16.mxu0 0
    %1946 = vmatpush1.bf16.msra.mxu0 %v1940
    %1947 = vmatprep.subr.bf16.mxu0 0
    %1948 = vmatpush1.bf16.msra.mxu0 0
    %1949 = vmatprep.subr.bf16.mxu0 0
    %1950 = vmatpush1.bf16.msra.mxu0 0
    %1951 = vmatprep.subr.bf16.mxu0 0
    %1952 = vmatpush1.bf16.msra.mxu0 0
    %1953 = vmatprep.subr.bf16.mxu0 0
    %1954 = vmatpush1.bf16.msra.mxu0 0
    %1955 = vmatprep.subr.bf16.mxu0 0
    %1956 = vmatpush1.bf16.msra.mxu0 0
    %1957 = vmatprep.subr.bf16.mxu0 0
    %1958 = vmatpush1.bf16.msra.mxu0 0
    %1959 = vmatprep.subr.bf16.mxu0 0
    %1960 = vmatpush1.bf16.msra.mxu0 0
    %1961 = vmatprep.subr.bf16.mxu0 0
    %1962 = vmatpush1.bf16.msra.mxu0 0
    %1963 = vmatprep.subr.bf16.mxu0 0
    %1964 = vmatpush1.bf16.msra.mxu0 0
    %1965 = vmatprep.subr.bf16.mxu0 0
    %1966 = vmatpush1.bf16.msra.mxu0 0
    %1967 = vmatprep.subr.bf16.mxu0 0
    %1968 = vmatpush1.bf16.msra.mxu0 0
    %1969 = vmatprep.subr.bf16.mxu0 0
    %1970 = vmatpush1.bf16.msra.mxu0 0
    %1971 = vmatprep.subr.bf16.mxu0 0
    %1972 = vmatpush1.bf16.msra.mxu0 0
    %1973 = vmatprep.subr.bf16.mxu0 0
    %1974 = vmatpush1.bf16.msra.mxu0 0
    %1975 = vmatprep.mubr.bf16.mxu0 0
    %1976 = vmatmul.mubr.bf16.gmra.mrb[0].mxu0 %v1889
    %v1977 = vpop.f32.mrb[0].mxu0
    %v1978 = vadd.f32 %v1823, %v1977
    %v1979 = vpop.f32.mrb[0].mxu0
    %v1980 = vpop.f32.mrb[0].mxu0
    %v1981 = vpop.f32.mrb[0].mxu0
    %1982 = vdwg.mxu0
    %v1987 = vunpack.c.l.b16 %v1751
    %v1988 = vunpack.c.l.b16 %v1752
    %v1989 = vunpack.c.l.b16 %v1753
    %v1990 = vunpack.c.l.b16 %v1754
    %v1991 = vpack.c.b16 %v1988, %v1987
    %v1992 = vpack.c.b16 %v1990, %v1989
    %1995 = vmatprep.subr.bf16.mxu0 0
    %1996 = vmatpush1.bf16.msra.mxu0 %v1991
    %1997 = vmatprep.subr.bf16.mxu0 0
    %1998 = vmatpush1.bf16.msra.mxu0 %v1992
    %1999 = vmatprep.subr.bf16.mxu0 0
    %2000 = vmatpush1.bf16.msra.mxu0 0
    %2001 = vmatprep.subr.bf16.mxu0 0
    %2002 = vmatpush1.bf16.msra.mxu0 0
    %2003 = vmatprep.subr.bf16.mxu0 0
    %2004 = vmatpush1.bf16.msra.mxu0 0
    %2005 = vmatprep.subr.bf16.mxu0 0
    %2006 = vmatpush1.bf16.msra.mxu0 0
    %2007 = vmatprep.subr.bf16.mxu0 0
    %2008 = vmatpush1.bf16.msra.mxu0 0
    %2009 = vmatprep.subr.bf16.mxu0 0
    %2010 = vmatpush1.bf16.msra.mxu0 0
    %2011 = vmatprep.subr.bf16.mxu0 0
    %2012 = vmatpush1.bf16.msra.mxu0 0
    %2013 = vmatprep.subr.bf16.mxu0 0
    %2014 = vmatpush1.bf16.msra.mxu0 0
    %2015 = vmatprep.subr.bf16.mxu0 0
    %2016 = vmatpush1.bf16.msra.mxu0 0
    %2017 = vmatprep.subr.bf16.mxu0 0
    %2018 = vmatpush1.bf16.msra.mxu0 0
    %2019 = vmatprep.subr.bf16.mxu0 0
    %2020 = vmatpush1.bf16.msra.mxu0 0
    %2021 = vmatprep.subr.bf16.mxu0 0
    %2022 = vmatpush1.bf16.msra.mxu0 0
    %2023 = vmatprep.subr.bf16.mxu0 0
    %2024 = vmatpush1.bf16.msra.mxu0 0
    %2025 = vmatprep.subr.bf16.mxu0 0
    %2026 = vmatpush1.bf16.msra.mxu0 0
    %2027 = vmatprep.mubr.bf16.mxu0 0
    %2028 = vmatmul.mubr.bf16.gmra.mrb[0].mxu0 %v1889
    %v2029 = vpop.f32.mrb[0].mxu0
    %v2030 = vadd.f32 %v1827, %v2029
    %v2031 = vpop.f32.mrb[0].mxu0
    %v2032 = vpop.f32.mrb[0].mxu0
    %v2033 = vpop.f32.mrb[0].mxu0
    %2034 = vdwg.mxu0
    %v2039 = vunpack.c.l.b16 %v1755
    %v2040 = vunpack.c.l.b16 %v1756
    %v2041 = vunpack.c.l.b16 %v1757
    %v2042 = vunpack.c.l.b16 %v1758
    %v2043 = vpack.c.b16 %v2040, %v2039
    %v2044 = vpack.c.b16 %v2042, %v2041
    %2047 = vmatprep.subr.bf16.mxu0 0
    %2048 = vmatpush1.bf16.msra.mxu0 %v2043
    %2049 = vmatprep.subr.bf16.mxu0 0
    %2050 = vmatpush1.bf16.msra.mxu0 %v2044
    %2051 = vmatprep.subr.bf16.mxu0 0
    %2052 = vmatpush1.bf16.msra.mxu0 0
    %2053 = vmatprep.subr.bf16.mxu0 0
    %2054 = vmatpush1.bf16.msra.mxu0 0
    %2055 = vmatprep.subr.bf16.mxu0 0
    %2056 = vmatpush1.bf16.msra.mxu0 0
    %2057 = vmatprep.subr.bf16.mxu0 0
    %2058 = vmatpush1.bf16.msra.mxu0 0
    %2059 = vmatprep.subr.bf16.mxu0 0
    %2060 = vmatpush1.bf16.msra.mxu0 0
    %2061 = vmatprep.subr.bf16.mxu0 0
    %2062 = vmatpush1.bf16.msra.mxu0 0
    %2063 = vmatprep.subr.bf16.mxu0 0
    %2064 = vmatpush1.bf16.msra.mxu0 0
    %2065 = vmatprep.subr.bf16.mxu0 0
    %2066 = vmatpush1.bf16.msra.mxu0 0
    %2067 = vmatprep.subr.bf16.mxu0 0
    %2068 = vmatpush1.bf16.msra.mxu0 0
    %2069 = vmatprep.subr.bf16.mxu0 0
    %2070 = vmatpush1.bf16.msra.mxu0 0
    %2071 = vmatprep.subr.bf16.mxu0 0
    %2072 = vmatpush1.bf16.msra.mxu0 0
    %2073 = vmatprep.subr.bf16.mxu0 0
    %2074 = vmatpush1.bf16.msra.mxu0 0
    %2075 = vmatprep.subr.bf16.mxu0 0
    %2076 = vmatpush1.bf16.msra.mxu0 0
    %2077 = vmatprep.subr.bf16.mxu0 0
    %2078 = vmatpush1.bf16.msra.mxu0 0
    %2079 = vmatprep.mubr.bf16.mxu0 0
    %2080 = vmatmul.mubr.bf16.gmra.mrb[0].mxu0 %v1889
    %v2081 = vpop.f32.mrb[0].mxu0
    %v2082 = vadd.f32 %v1831, %v2081
    %v2083 = vpop.f32.mrb[0].mxu0
    %v2084 = vpop.f32.mrb[0].mxu0
    %v2085 = vpop.f32.mrb[0].mxu0
    %2086 = vdwg.mxu0
    %v2091 = vunpack.c.l.b16 %v1759
    %v2092 = vunpack.c.l.b16 %v1760
    %v2093 = vunpack.c.l.b16 %v1761
    %v2094 = vunpack.c.l.b16 %v1762
    %v2095 = vpack.c.b16 %v2092, %v2091
    %v2096 = vpack.c.b16 %v2094, %v2093
    %2099 = vmatprep.subr.bf16.mxu0 0
    %2100 = vmatpush1.bf16.msra.mxu0 %v2095
    %2101 = vmatprep.subr.bf16.mxu0 0
    %2102 = vmatpush1.bf16.msra.mxu0 %v2096
    %2103 = vmatprep.subr.bf16.mxu0 0
    %2104 = vmatpush1.bf16.msra.mxu0 0
    %2105 = vmatprep.subr.bf16.mxu0 0
    %2106 = vmatpush1.bf16.msra.mxu0 0
    %2107 = vmatprep.subr.bf16.mxu0 0
    %2108 = vmatpush1.bf16.msra.mxu0 0
    %2109 = vmatprep.subr.bf16.mxu0 0
    %2110 = vmatpush1.bf16.msra.mxu0 0
    %2111 = vmatprep.subr.bf16.mxu0 0
    %2112 = vmatpush1.bf16.msra.mxu0 0
    %2113 = vmatprep.subr.bf16.mxu0 0
    %2114 = vmatpush1.bf16.msra.mxu0 0
    %2115 = vmatprep.subr.bf16.mxu0 0
    %2116 = vmatpush1.bf16.msra.mxu0 0
    %2117 = vmatprep.subr.bf16.mxu0 0
    %2118 = vmatpush1.bf16.msra.mxu0 0
    %2119 = vmatprep.subr.bf16.mxu0 0
    %2120 = vmatpush1.bf16.msra.mxu0 0
    %2121 = vmatprep.subr.bf16.mxu0 0
    %2122 = vmatpush1.bf16.msra.mxu0 0
    %2123 = vmatprep.subr.bf16.mxu0 0
    %2124 = vmatpush1.bf16.msra.mxu0 0
    %2125 = vmatprep.subr.bf16.mxu0 0
    %2126 = vmatpush1.bf16.msra.mxu0 0
    %2127 = vmatprep.subr.bf16.mxu0 0
    %2128 = vmatpush1.bf16.msra.mxu0 0
    %2129 = vmatprep.subr.bf16.mxu0 0
    %2130 = vmatpush1.bf16.msra.mxu0 0
    %2131 = vmatprep.mubr.bf16.mxu0 0
    %2132 = vmatmul.mubr.bf16.gmra.mrb[0].mxu0 %v1889
    %v2133 = vpop.f32.mrb[0].mxu0
    %v2134 = vadd.f32 %v1835, %v2133
    %v2135 = vpop.f32.mrb[0].mxu0
    %v2136 = vpop.f32.mrb[0].mxu0
    %v2137 = vpop.f32.mrb[0].mxu0
    %2138 = vdwg.mxu0
    %v2143 = vunpack.c.l.b16 %v1763
    %v2144 = vunpack.c.l.b16 %v1764
    %v2145 = vunpack.c.l.b16 %v1765
    %v2146 = vunpack.c.l.b16 %v1766
    %v2147 = vpack.c.b16 %v2144, %v2143
    %v2148 = vpack.c.b16 %v2146, %v2145
    %2151 = vmatprep.subr.bf16.mxu0 0
    %2152 = vmatpush1.bf16.msra.mxu0 %v2147
    %2153 = vmatprep.subr.bf16.mxu0 0
    %2154 = vmatpush1.bf16.msra.mxu0 %v2148
    %2155 = vmatprep.subr.bf16.mxu0 0
    %2156 = vmatpush1.bf16.msra.mxu0 0
    %2157 = vmatprep.subr.bf16.mxu0 0
    %2158 = vmatpush1.bf16.msra.mxu0 0
    %2159 = vmatprep.subr.bf16.mxu0 0
    %2160 = vmatpush1.bf16.msra.mxu0 0
    %2161 = vmatprep.subr.bf16.mxu0 0
    %2162 = vmatpush1.bf16.msra.mxu0 0
    %2163 = vmatprep.subr.bf16.mxu0 0
    %2164 = vmatpush1.bf16.msra.mxu0 0
    %2165 = vmatprep.subr.bf16.mxu0 0
    %2166 = vmatpush1.bf16.msra.mxu0 0
    %2167 = vmatprep.subr.bf16.mxu0 0
    %2168 = vmatpush1.bf16.msra.mxu0 0
    %2169 = vmatprep.subr.bf16.mxu0 0
    %2170 = vmatpush1.bf16.msra.mxu0 0
    %2171 = vmatprep.subr.bf16.mxu0 0
    %2172 = vmatpush1.bf16.msra.mxu0 0
    %2173 = vmatprep.subr.bf16.mxu0 0
    %2174 = vmatpush1.bf16.msra.mxu0 0
    %2175 = vmatprep.subr.bf16.mxu0 0
    %2176 = vmatpush1.bf16.msra.mxu0 0
    %2177 = vmatprep.subr.bf16.mxu0 0
    %2178 = vmatpush1.bf16.msra.mxu0 0
    %2179 = vmatprep.subr.bf16.mxu0 0
    %2180 = vmatpush1.bf16.msra.mxu0 0
    %2181 = vmatprep.subr.bf16.mxu0 0
    %2182 = vmatpush1.bf16.msra.mxu0 0
    %2183 = vmatprep.mubr.bf16.mxu0 0
    %2184 = vmatmul.mubr.bf16.gmra.mrb[0].mxu0 %v1889
    %v2185 = vpop.f32.mrb[0].mxu0
    %v2186 = vadd.f32 %v1839, %v2185
    %v2187 = vpop.f32.mrb[0].mxu0
    %v2188 = vpop.f32.mrb[0].mxu0
    %v2189 = vpop.f32.mrb[0].mxu0
    %2190 = vdwg.mxu0
    %v2195 = vunpack.c.l.b16 %v1767
    %v2196 = vunpack.c.l.b16 %v1768
    %v2197 = vunpack.c.l.b16 %v1769
    %v2198 = vunpack.c.l.b16 %v1770
    %v2199 = vpack.c.b16 %v2196, %v2195
    %v2200 = vpack.c.b16 %v2198, %v2197
    %2203 = vmatprep.subr.bf16.mxu0 0
    %2204 = vmatpush1.bf16.msra.mxu0 %v2199
    %2205 = vmatprep.subr.bf16.mxu0 0
    %2206 = vmatpush1.bf16.msra.mxu0 %v2200
    %2207 = vmatprep.subr.bf16.mxu0 0
    %2208 = vmatpush1.bf16.msra.mxu0 0
    %2209 = vmatprep.subr.bf16.mxu0 0
    %2210 = vmatpush1.bf16.msra.mxu0 0
    %2211 = vmatprep.subr.bf16.mxu0 0
    %2212 = vmatpush1.bf16.msra.mxu0 0
    %2213 = vmatprep.subr.bf16.mxu0 0
    %2214 = vmatpush1.bf16.msra.mxu0 0
    %2215 = vmatprep.subr.bf16.mxu0 0
    %2216 = vmatpush1.bf16.msra.mxu0 0
    %2217 = vmatprep.subr.bf16.mxu0 0
    %2218 = vmatpush1.bf16.msra.mxu0 0
    %2219 = vmatprep.subr.bf16.mxu0 0
    %2220 = vmatpush1.bf16.msra.mxu0 0
    %2221 = vmatprep.subr.bf16.mxu0 0
    %2222 = vmatpush1.bf16.msra.mxu0 0
    %2223 = vmatprep.subr.bf16.mxu0 0
    %2224 = vmatpush1.bf16.msra.mxu0 0
    %2225 = vmatprep.subr.bf16.mxu0 0
    %2226 = vmatpush1.bf16.msra.mxu0 0
    %2227 = vmatprep.subr.bf16.mxu0 0
    %2228 = vmatpush1.bf16.msra.mxu0 0
    %2229 = vmatprep.subr.bf16.mxu0 0
    %2230 = vmatpush1.bf16.msra.mxu0 0
    %2231 = vmatprep.subr.bf16.mxu0 0
    %2232 = vmatpush1.bf16.msra.mxu0 0
    %2233 = vmatprep.subr.bf16.mxu0 0
    %2234 = vmatpush1.bf16.msra.mxu0 0
    %2235 = vmatprep.mubr.bf16.mxu0 0
    %2236 = vmatmul.mubr.bf16.gmra.mrb[0].mxu0 %v1889
    %v2237 = vpop.f32.mrb[0].mxu0
    %v2238 = vadd.f32 %v1843, %v2237
    %v2239 = vpop.f32.mrb[0].mxu0
    %v2240 = vpop.f32.mrb[0].mxu0
    %v2241 = vpop.f32.mrb[0].mxu0
    %2242 = vdwg.mxu0
    %v2247 = vunpack.c.l.b16 %v1771
    %v2248 = vunpack.c.l.b16 %v1772
    %v2249 = vunpack.c.l.b16 %v1773
    %v2250 = vunpack.c.l.b16 %v1774
    %v2251 = vpack.c.b16 %v2248, %v2247
    %v2252 = vpack.c.b16 %v2250, %v2249
    %2255 = vmatprep.subr.bf16.mxu0 0
    %2256 = vmatpush1.bf16.msra.mxu0 %v2251
    %2257 = vmatprep.subr.bf16.mxu0 0
    %2258 = vmatpush1.bf16.msra.mxu0 %v2252
    %2259 = vmatprep.subr.bf16.mxu0 0
    %2260 = vmatpush1.bf16.msra.mxu0 0
    %2261 = vmatprep.subr.bf16.mxu0 0
    %2262 = vmatpush1.bf16.msra.mxu0 0
    %2263 = vmatprep.subr.bf16.mxu0 0
    %2264 = vmatpush1.bf16.msra.mxu0 0
    %2265 = vmatprep.subr.bf16.mxu0 0
    %2266 = vmatpush1.bf16.msra.mxu0 0
    %2267 = vmatprep.subr.bf16.mxu0 0
    %2268 = vmatpush1.bf16.msra.mxu0 0
    %2269 = vmatprep.subr.bf16.mxu0 0
    %2270 = vmatpush1.bf16.msra.mxu0 0
    %2271 = vmatprep.subr.bf16.mxu0 0
    %2272 = vmatpush1.bf16.msra.mxu0 0
    %2273 = vmatprep.subr.bf16.mxu0 0
    %2274 = vmatpush1.bf16.msra.mxu0 0
    %2275 = vmatprep.subr.bf16.mxu0 0
    %2276 = vmatpush1.bf16.msra.mxu0 0
    %2277 = vmatprep.subr.bf16.mxu0 0
    %2278 = vmatpush1.bf16.msra.mxu0 0
    %2279 = vmatprep.subr.bf16.mxu0 0
    %2280 = vmatpush1.bf16.msra.mxu0 0
    %2281 = vmatprep.subr.bf16.mxu0 0
    %2282 = vmatpush1.bf16.msra.mxu0 0
    %2283 = vmatprep.subr.bf16.mxu0 0
    %2284 = vmatpush1.bf16.msra.mxu0 0
    %2285 = vmatprep.subr.bf16.mxu0 0
    %2286 = vmatpush1.bf16.msra.mxu0 0
    %2287 = vmatprep.mubr.bf16.mxu0 0
    %2288 = vmatmul.mubr.bf16.gmra.mrb[0].mxu0 %v1889
    %v2289 = vpop.f32.mrb[0].mxu0
    %v2290 = vadd.f32 %v1847, %v2289
    %v2291 = vpop.f32.mrb[0].mxu0
    %v2292 = vpop.f32.mrb[0].mxu0
    %v2293 = vpop.f32.mrb[0].mxu0
    %2294 = vdwg.mxu0
    %v2299 = vunpack.c.l.b16 %v1775
    %v2300 = vunpack.c.l.b16 %v1776
    %v2301 = vunpack.c.l.b16 %v1777
    %v2302 = vunpack.c.l.b16 %v1778
    %v2303 = vpack.c.b16 %v2300, %v2299
    %v2304 = vpack.c.b16 %v2302, %v2301
    %2307 = vmatprep.subr.bf16.mxu0 0
    %2308 = vmatpush1.bf16.msra.mxu0 %v2303
    %2309 = vmatprep.subr.bf16.mxu0 0
    %2310 = vmatpush1.bf16.msra.mxu0 %v2304
    %2311 = vmatprep.subr.bf16.mxu0 0
    %2312 = vmatpush1.bf16.msra.mxu0 0
    %2313 = vmatprep.subr.bf16.mxu0 0
    %2314 = vmatpush1.bf16.msra.mxu0 0
    %2315 = vmatprep.subr.bf16.mxu0 0
    %2316 = vmatpush1.bf16.msra.mxu0 0
    %2317 = vmatprep.subr.bf16.mxu0 0
    %2318 = vmatpush1.bf16.msra.mxu0 0
    %2319 = vmatprep.subr.bf16.mxu0 0
    %2320 = vmatpush1.bf16.msra.mxu0 0
    %2321 = vmatprep.subr.bf16.mxu0 0
    %2322 = vmatpush1.bf16.msra.mxu0 0
    %2323 = vmatprep.subr.bf16.mxu0 0
    %2324 = vmatpush1.bf16.msra.mxu0 0
    %2325 = vmatprep.subr.bf16.mxu0 0
    %2326 = vmatpush1.bf16.msra.mxu0 0
    %2327 = vmatprep.subr.bf16.mxu0 0
    %2328 = vmatpush1.bf16.msra.mxu0 0
    %2329 = vmatprep.subr.bf16.mxu0 0
    %2330 = vmatpush1.bf16.msra.mxu0 0
    %2331 = vmatprep.subr.bf16.mxu0 0
    %2332 = vmatpush1.bf16.msra.mxu0 0
    %2333 = vmatprep.subr.bf16.mxu0 0
    %2334 = vmatpush1.bf16.msra.mxu0 0
    %2335 = vmatprep.subr.bf16.mxu0 0
    %2336 = vmatpush1.bf16.msra.mxu0 0
    %2337 = vmatprep.subr.bf16.mxu0 0
    %2338 = vmatpush1.bf16.msra.mxu0 0
    %2339 = vmatprep.mubr.bf16.mxu0 0
    %2340 = vmatmul.mubr.bf16.gmra.mrb[0].mxu0 %v1889
    %v2341 = vpop.f32.mrb[0].mxu0
    %v2342 = vadd.f32 %v1851, %v2341
    %v2343 = vpop.f32.mrb[0].mxu0
    %v2344 = vpop.f32.mrb[0].mxu0
    %v2345 = vpop.f32.mrb[0].mxu0
    %2346 = vdwg.mxu0
    %v2351 = vunpack.c.l.b16 %v1779
    %v2352 = vunpack.c.l.b16 %v1780
    %v2353 = vunpack.c.l.b16 %v1781
    %v2354 = vunpack.c.l.b16 %v1782
    %v2355 = vpack.c.b16 %v2352, %v2351
    %v2356 = vpack.c.b16 %v2354, %v2353
    %2359 = vmatprep.subr.bf16.mxu0 0
    %2360 = vmatpush1.bf16.msra.mxu0 %v2355
    %2361 = vmatprep.subr.bf16.mxu0 0
    %2362 = vmatpush1.bf16.msra.mxu0 %v2356
    %2363 = vmatprep.subr.bf16.mxu0 0
    %2364 = vmatpush1.bf16.msra.mxu0 0
    %2365 = vmatprep.subr.bf16.mxu0 0
    %2366 = vmatpush1.bf16.msra.mxu0 0
    %2367 = vmatprep.subr.bf16.mxu0 0
    %2368 = vmatpush1.bf16.msra.mxu0 0
    %2369 = vmatprep.subr.bf16.mxu0 0
    %2370 = vmatpush1.bf16.msra.mxu0 0
    %2371 = vmatprep.subr.bf16.mxu0 0
    %2372 = vmatpush1.bf16.msra.mxu0 0
    %2373 = vmatprep.subr.bf16.mxu0 0
    %2374 = vmatpush1.bf16.msra.mxu0 0
    %2375 = vmatprep.subr.bf16.mxu0 0
    %2376 = vmatpush1.bf16.msra.mxu0 0
    %2377 = vmatprep.subr.bf16.mxu0 0
    %2378 = vmatpush1.bf16.msra.mxu0 0
    %2379 = vmatprep.subr.bf16.mxu0 0
    %2380 = vmatpush1.bf16.msra.mxu0 0
    %2381 = vmatprep.subr.bf16.mxu0 0
    %2382 = vmatpush1.bf16.msra.mxu0 0
    %2383 = vmatprep.subr.bf16.mxu0 0
    %2384 = vmatpush1.bf16.msra.mxu0 0
    %2385 = vmatprep.subr.bf16.mxu0 0
    %2386 = vmatpush1.bf16.msra.mxu0 0
    %2387 = vmatprep.subr.bf16.mxu0 0
    %2388 = vmatpush1.bf16.msra.mxu0 0
    %2389 = vmatprep.subr.bf16.mxu0 0
    %2390 = vmatpush1.bf16.msra.mxu0 0
    %2391 = vmatprep.mubr.bf16.mxu0 0
    %2392 = vmatmul.mubr.bf16.gmra.mrb[0].mxu0 %v1889
    %v2393 = vpop.f32.mrb[0].mxu0
    %v2394 = vadd.f32 %v1855, %v2393
    %v2395 = vpop.f32.mrb[0].mxu0
    %v2396 = vpop.f32.mrb[0].mxu0
    %v2397 = vpop.f32.mrb[0].mxu0
    %2398 = vdwg.mxu0
    %v2403 = vunpack.c.l.b16 %v1783
    %v2404 = vunpack.c.l.b16 %v1784
    %v2405 = vunpack.c.l.b16 %v1785
    %v2406 = vunpack.c.l.b16 %v1786
    %v2407 = vpack.c.b16 %v2404, %v2403
    %v2408 = vpack.c.b16 %v2406, %v2405
    %2411 = vmatprep.subr.bf16.mxu0 0
    %2412 = vmatpush1.bf16.msra.mxu0 %v2407
    %2413 = vmatprep.subr.bf16.mxu0 0
    %2414 = vmatpush1.bf16.msra.mxu0 %v2408
    %2415 = vmatprep.subr.bf16.mxu0 0
    %2416 = vmatpush1.bf16.msra.mxu0 0
    %2417 = vmatprep.subr.bf16.mxu0 0
    %2418 = vmatpush1.bf16.msra.mxu0 0
    %2419 = vmatprep.subr.bf16.mxu0 0
    %2420 = vmatpush1.bf16.msra.mxu0 0
    %2421 = vmatprep.subr.bf16.mxu0 0
    %2422 = vmatpush1.bf16.msra.mxu0 0
    %2423 = vmatprep.subr.bf16.mxu0 0
    %2424 = vmatpush1.bf16.msra.mxu0 0
    %2425 = vmatprep.subr.bf16.mxu0 0
    %2426 = vmatpush1.bf16.msra.mxu0 0
    %2427 = vmatprep.subr.bf16.mxu0 0
    %2428 = vmatpush1.bf16.msra.mxu0 0
    %2429 = vmatprep.subr.bf16.mxu0 0
    %2430 = vmatpush1.bf16.msra.mxu0 0
    %2431 = vmatprep.subr.bf16.mxu0 0
    %2432 = vmatpush1.bf16.msra.mxu0 0
    %2433 = vmatprep.subr.bf16.mxu0 0
    %2434 = vmatpush1.bf16.msra.mxu0 0
    %2435 = vmatprep.subr.bf16.mxu0 0
    %2436 = vmatpush1.bf16.msra.mxu0 0
    %2437 = vmatprep.subr.bf16.mxu0 0
    %2438 = vmatpush1.bf16.msra.mxu0 0
    %2439 = vmatprep.subr.bf16.mxu0 0
    %2440 = vmatpush1.bf16.msra.mxu0 0
    %2441 = vmatprep.subr.bf16.mxu0 0
    %2442 = vmatpush1.bf16.msra.mxu0 0
    %2443 = vmatprep.mubr.bf16.mxu0 0
    %2444 = vmatmul.mubr.bf16.gmra.mrb[0].mxu0 %v1889
    %v2445 = vpop.f32.mrb[0].mxu0
    %v2446 = vadd.f32 %v1859, %v2445
    %v2447 = vpop.f32.mrb[0].mxu0
    %v2448 = vpop.f32.mrb[0].mxu0
    %v2449 = vpop.f32.mrb[0].mxu0
    %2450 = vdwg.mxu0
    %v2455 = vunpack.c.l.b16 %v1787
    %v2456 = vunpack.c.l.b16 %v1788
    %v2457 = vunpack.c.l.b16 %v1789
    %v2458 = vunpack.c.l.b16 %v1790
    %v2459 = vpack.c.b16 %v2456, %v2455
    %v2460 = vpack.c.b16 %v2458, %v2457
    %2463 = vmatprep.subr.bf16.mxu0 0
    %2464 = vmatpush1.bf16.msra.mxu0 %v2459
    %2465 = vmatprep.subr.bf16.mxu0 0
    %2466 = vmatpush1.bf16.msra.mxu0 %v2460
    %2467 = vmatprep.subr.bf16.mxu0 0
    %2468 = vmatpush1.bf16.msra.mxu0 0
    %2469 = vmatprep.subr.bf16.mxu0 0
    %2470 = vmatpush1.bf16.msra.mxu0 0
    %2471 = vmatprep.subr.bf16.mxu0 0
    %2472 = vmatpush1.bf16.msra.mxu0 0
    %2473 = vmatprep.subr.bf16.mxu0 0
    %2474 = vmatpush1.bf16.msra.mxu0 0
    %2475 = vmatprep.subr.bf16.mxu0 0
    %2476 = vmatpush1.bf16.msra.mxu0 0
    %2477 = vmatprep.subr.bf16.mxu0 0
    %2478 = vmatpush1.bf16.msra.mxu0 0
    %2479 = vmatprep.subr.bf16.mxu0 0
    %2480 = vmatpush1.bf16.msra.mxu0 0
    %2481 = vmatprep.subr.bf16.mxu0 0
    %2482 = vmatpush1.bf16.msra.mxu0 0
    %2483 = vmatprep.subr.bf16.mxu0 0
    %2484 = vmatpush1.bf16.msra.mxu0 0
    %2485 = vmatprep.subr.bf16.mxu0 0
    %2486 = vmatpush1.bf16.msra.mxu0 0
    %2487 = vmatprep.subr.bf16.mxu0 0
    %2488 = vmatpush1.bf16.msra.mxu0 0
    %2489 = vmatprep.subr.bf16.mxu0 0
    %2490 = vmatpush1.bf16.msra.mxu0 0
    %2491 = vmatprep.subr.bf16.mxu0 0
    %2492 = vmatpush1.bf16.msra.mxu0 0
    %2493 = vmatprep.subr.bf16.mxu0 0
    %2494 = vmatpush1.bf16.msra.mxu0 0
    %2495 = vmatprep.mubr.bf16.mxu0 0
    %2496 = vmatmul.mubr.bf16.gmra.mrb[0].mxu0 %v1889
    %v2497 = vpop.f32.mrb[0].mxu0
    %v2498 = vadd.f32 %v1863, %v2497
    %v2499 = vpop.f32.mrb[0].mxu0
    %v2500 = vpop.f32.mrb[0].mxu0
    %v2501 = vpop.f32.mrb[0].mxu0
    %2502 = vdwg.mxu0
    %v2503 = vmul.f32 %v1926, 0.35355338
    %v2504 = vmul.f32 %v1978, 0.35355338
    %v2505 = vmul.f32 %v2030, 0.35355338
    %v2506 = vmul.f32 %v2082, 0.35355338
    %v2507 = vpack.c.bf16 %v2503, %v2503
    %v2508 = vpack.c.bf16 %v2504, %v2504
    %v2509 = vpack.c.bf16 %v2505, %v2505
    %v2510 = vpack.c.bf16 %v2506, %v2506
    %v2511 = vpack.c.bf16 %v2134, %v2134
    %v2512 = vpack.c.bf16 %v2186, %v2186
    %v2513 = vpack.c.bf16 %v2238, %v2238
    %v2514 = vpack.c.bf16 %v2290, %v2290
    %v2516 = vsel %vm910, %v2507, 0
    %v2519 = vsel %vm910, %v2511, 0
    %2521 = vmatprep.subr.bf16.mxu0 0
    %2522 = vmatpush1.bf16.xpose.msra.mxu0 %v2519
    %2523 = vmatprep.subr.bf16.mxu0 0
    %2524 = vmatpush1.bf16.xpose.msra.mxu0 0
    %2525 = vmatprep.subr.bf16.mxu0 0
    %2526 = vmatpush1.bf16.xpose.msra.mxu0 0
    %2527 = vmatprep.subr.bf16.mxu0 0
    %2528 = vmatpush1.bf16.xpose.msra.mxu0 0
    %2529 = vmatprep.subr.bf16.mxu0 0
    %2530 = vmatpush1.bf16.xpose.msra.mxu0 0
    %2531 = vmatprep.subr.bf16.mxu0 0
    %2532 = vmatpush1.bf16.xpose.msra.mxu0 0
    %2533 = vmatprep.subr.bf16.mxu0 0
    %2534 = vmatpush1.bf16.xpose.msra.mxu0 0
    %2535 = vmatprep.subr.bf16.mxu0 0
    %2536 = vmatpush1.bf16.xpose.msra.mxu0 0
    %2537 = vmatprep.subr.bf16.mxu0 0
    %2538 = vmatpush1.bf16.xpose.msra.mxu0 0
    %2539 = vmatprep.subr.bf16.mxu0 0
    %2540 = vmatpush1.bf16.xpose.msra.mxu0 0
    %2541 = vmatprep.subr.bf16.mxu0 0
    %2542 = vmatpush1.bf16.xpose.msra.mxu0 0
    %2543 = vmatprep.subr.bf16.mxu0 0
    %2544 = vmatpush1.bf16.xpose.msra.mxu0 0
    %2545 = vmatprep.subr.bf16.mxu0 0
    %2546 = vmatpush1.bf16.xpose.msra.mxu0 0
    %2547 = vmatprep.subr.bf16.mxu0 0
    %2548 = vmatpush1.bf16.xpose.msra.mxu0 0
    %2549 = vmatprep.subr.bf16.mxu0 0
    %2550 = vmatpush1.bf16.xpose.msra.mxu0 0
    %2551 = vmatprep.subr.bf16.mxu0 0
    %2552 = vmatpush1.bf16.xpose.msra.mxu0 0
    %2553 = vmatprep.mubr.bf16.mxu0 0
    %2554 = vmatmul.mubr.bf16.gmra.mrb[0].mxu0 %v2516
    %v2555 = vpop.f32.mrb[0].mxu0
    %v2556 = vadd.f32 %v136, %v2555
    %v2557 = vpop.f32.mrb[0].mxu0
    %v2558 = vpop.f32.mrb[0].mxu0
    %v2559 = vpop.f32.mrb[0].mxu0
    %2560 = vdwg.mxu0
    %v2562 = vsel %vm910, %v2508, 0
    %v2565 = vsel %vm910, %v2512, 0
    %2567 = vmatprep.subr.bf16.mxu0 0
    %2568 = vmatpush1.bf16.xpose.msra.mxu0 %v2565
    %2569 = vmatprep.subr.bf16.mxu0 0
    %2570 = vmatpush1.bf16.xpose.msra.mxu0 0
    %2571 = vmatprep.subr.bf16.mxu0 0
    %2572 = vmatpush1.bf16.xpose.msra.mxu0 0
    %2573 = vmatprep.subr.bf16.mxu0 0
    %2574 = vmatpush1.bf16.xpose.msra.mxu0 0
    %2575 = vmatprep.subr.bf16.mxu0 0
    %2576 = vmatpush1.bf16.xpose.msra.mxu0 0
    %2577 = vmatprep.subr.bf16.mxu0 0
    %2578 = vmatpush1.bf16.xpose.msra.mxu0 0
    %2579 = vmatprep.subr.bf16.mxu0 0
    %2580 = vmatpush1.bf16.xpose.msra.mxu0 0
    %2581 = vmatprep.subr.bf16.mxu0 0
    %2582 = vmatpush1.bf16.xpose.msra.mxu0 0
    %2583 = vmatprep.subr.bf16.mxu0 0
    %2584 = vmatpush1.bf16.xpose.msra.mxu0 0
    %2585 = vmatprep.subr.bf16.mxu0 0
    %2586 = vmatpush1.bf16.xpose.msra.mxu0 0
    %2587 = vmatprep.subr.bf16.mxu0 0
    %2588 = vmatpush1.bf16.xpose.msra.mxu0 0
    %2589 = vmatprep.subr.bf16.mxu0 0
    %2590 = vmatpush1.bf16.xpose.msra.mxu0 0
    %2591 = vmatprep.subr.bf16.mxu0 0
    %2592 = vmatpush1.bf16.xpose.msra.mxu0 0
    %2593 = vmatprep.subr.bf16.mxu0 0
    %2594 = vmatpush1.bf16.xpose.msra.mxu0 0
    %2595 = vmatprep.subr.bf16.mxu0 0
    %2596 = vmatpush1.bf16.xpose.msra.mxu0 0
    %2597 = vmatprep.subr.bf16.mxu0 0
    %2598 = vmatpush1.bf16.xpose.msra.mxu0 0
    %2599 = vmatprep.mubr.bf16.mxu0 0
    %2600 = vmatmul.mubr.bf16.gmra.mrb[0].mxu0 %v2562
    %v2601 = vpop.f32.mrb[0].mxu0
    %v2602 = vadd.f32 %v136, %v2601
    %v2603 = vpop.f32.mrb[0].mxu0
    %v2604 = vpop.f32.mrb[0].mxu0
    %v2605 = vpop.f32.mrb[0].mxu0
    %2606 = vdwg.mxu0
    %v2608 = vsel %vm910, %v2509, 0
    %v2611 = vsel %vm910, %v2513, 0
    %2613 = vmatprep.subr.bf16.mxu0 0
    %2614 = vmatpush1.bf16.xpose.msra.mxu0 %v2611
    %2615 = vmatprep.subr.bf16.mxu0 0
    %2616 = vmatpush1.bf16.xpose.msra.mxu0 0
    %2617 = vmatprep.subr.bf16.mxu0 0
    %2618 = vmatpush1.bf16.xpose.msra.mxu0 0
    %2619 = vmatprep.subr.bf16.mxu0 0
    %2620 = vmatpush1.bf16.xpose.msra.mxu0 0
    %2621 = vmatprep.subr.bf16.mxu0 0
    %2622 = vmatpush1.bf16.xpose.msra.mxu0 0
    %2623 = vmatprep.subr.bf16.mxu0 0
    %2624 = vmatpush1.bf16.xpose.msra.mxu0 0
    %2625 = vmatprep.subr.bf16.mxu0 0
    %2626 = vmatpush1.bf16.xpose.msra.mxu0 0
    %2627 = vmatprep.subr.bf16.mxu0 0
    %2628 = vmatpush1.bf16.xpose.msra.mxu0 0
    %2629 = vmatprep.subr.bf16.mxu0 0
    %2630 = vmatpush1.bf16.xpose.msra.mxu0 0
    %2631 = vmatprep.subr.bf16.mxu0 0
    %2632 = vmatpush1.bf16.xpose.msra.mxu0 0
    %2633 = vmatprep.subr.bf16.mxu0 0
    %2634 = vmatpush1.bf16.xpose.msra.mxu0 0
    %2635 = vmatprep.subr.bf16.mxu0 0
    %2636 = vmatpush1.bf16.xpose.msra.mxu0 0
    %2637 = vmatprep.subr.bf16.mxu0 0
    %2638 = vmatpush1.bf16.xpose.msra.mxu0 0
    %2639 = vmatprep.subr.bf16.mxu0 0
    %2640 = vmatpush1.bf16.xpose.msra.mxu0 0
    %2641 = vmatprep.subr.bf16.mxu0 0
    %2642 = vmatpush1.bf16.xpose.msra.mxu0 0
    %2643 = vmatprep.subr.bf16.mxu0 0
    %2644 = vmatpush1.bf16.xpose.msra.mxu0 0
    %2645 = vmatprep.mubr.bf16.mxu0 0
    %2646 = vmatmul.mubr.bf16.gmra.mrb[0].mxu0 %v2608
    %v2647 = vpop.f32.mrb[0].mxu0
    %v2648 = vadd.f32 %v136, %v2647
    %v2649 = vpop.f32.mrb[0].mxu0
    %v2650 = vpop.f32.mrb[0].mxu0
    %v2651 = vpop.f32.mrb[0].mxu0
    %2652 = vdwg.mxu0
    %v2654 = vsel %vm910, %v2510, 0
    %v2657 = vsel %vm910, %v2514, 0
    %2659 = vmatprep.subr.bf16.mxu0 0
    %2660 = vmatpush1.bf16.xpose.msra.mxu0 %v2657
    %2661 = vmatprep.subr.bf16.mxu0 0
    %2662 = vmatpush1.bf16.xpose.msra.mxu0 0
    %2663 = vmatprep.subr.bf16.mxu0 0
    %2664 = vmatpush1.bf16.xpose.msra.mxu0 0
    %2665 = vmatprep.subr.bf16.mxu0 0
    %2666 = vmatpush1.bf16.xpose.msra.mxu0 0
    %2667 = vmatprep.subr.bf16.mxu0 0
    %2668 = vmatpush1.bf16.xpose.msra.mxu0 0
    %2669 = vmatprep.subr.bf16.mxu0 0
    %2670 = vmatpush1.bf16.xpose.msra.mxu0 0
    %2671 = vmatprep.subr.bf16.mxu0 0
    %2672 = vmatpush1.bf16.xpose.msra.mxu0 0
    %2673 = vmatprep.subr.bf16.mxu0 0
    %2674 = vmatpush1.bf16.xpose.msra.mxu0 0
    %2675 = vmatprep.subr.bf16.mxu0 0
    %2676 = vmatpush1.bf16.xpose.msra.mxu0 0
    %2677 = vmatprep.subr.bf16.mxu0 0
    %2678 = vmatpush1.bf16.xpose.msra.mxu0 0
    %2679 = vmatprep.subr.bf16.mxu0 0
    %2680 = vmatpush1.bf16.xpose.msra.mxu0 0
    %2681 = vmatprep.subr.bf16.mxu0 0
    %2682 = vmatpush1.bf16.xpose.msra.mxu0 0
    %2683 = vmatprep.subr.bf16.mxu0 0
    %2684 = vmatpush1.bf16.xpose.msra.mxu0 0
    %2685 = vmatprep.subr.bf16.mxu0 0
    %2686 = vmatpush1.bf16.xpose.msra.mxu0 0
    %2687 = vmatprep.subr.bf16.mxu0 0
    %2688 = vmatpush1.bf16.xpose.msra.mxu0 0
    %2689 = vmatprep.subr.bf16.mxu0 0
    %2690 = vmatpush1.bf16.xpose.msra.mxu0 0
    %2691 = vmatprep.mubr.bf16.mxu0 0
    %2692 = vmatmul.mubr.bf16.gmra.mrb[0].mxu0 %v2654
    %v2693 = vpop.f32.mrb[0].mxu0
    %v2694 = vadd.f32 %v136, %v2693
    %v2695 = vpop.f32.mrb[0].mxu0
    %v2696 = vpop.f32.mrb[0].mxu0
    %v2697 = vpop.f32.mrb[0].mxu0
    %2698 = vdwg.mxu0
    %v2699 = vsel %vm910, %v2556, -inf
    %2700 = vmax.xlane.f32.xlu0 %v2699
    %v2701 = vpop.xlane.xlu0 %2700
    %v2702 = vsel %vm910, %v2602, -inf
    %2703 = vmax.xlane.f32.xlu0 %v2702
    %v2704 = vpop.xlane.xlu0 %2703
    %v2705 = vsel %vm910, %v2648, -inf
    %2706 = vmax.xlane.f32.xlu0 %v2705
    %v2707 = vpop.xlane.xlu0 %2706
    %v2708 = vsel %vm910, %v2694, -inf
    %2709 = vmax.xlane.f32.xlu0 %v2708
    %v2710 = vpop.xlane.xlu0 %2709
    %v2711 = vsub.f32 %v2556, %v2701
    %v2712 = vsub.f32 %v2602, %v2704
    %v2713 = vsub.f32 %v2648, %v2707
    %v2714 = vsub.f32 %v2694, %v2710
    %v2715 = vmul.f32 %v2711, 1.442695
    %v2716 = vpow.pop %v2715
    %v2717 = vmul.f32 %v2712, 1.442695
    %v2718 = vpow.pop %v2717
    %v2719 = vmul.f32 %v2713, 1.442695
    %v2720 = vpow.pop %v2719
    %v2721 = vmul.f32 %v2714, 1.442695
    %v2722 = vpow.pop %v2721
    %v2723 = vsel %vm910, %v2716, 0.0
    %2724 = vadd.xlane.f32.xlu0 %v2723
    %v2725 = vpop.xlane.xlu0 %2724
    %v2726 = vsel %vm910, %v2718, 0.0
    %2727 = vadd.xlane.f32.xlu0 %v2726
    %v2728 = vpop.xlane.xlu0 %2727
    %v2729 = vsel %vm910, %v2720, 0.0
    %2730 = vadd.xlane.f32.xlu0 %v2729
    %v2731 = vpop.xlane.xlu0 %2730
    %v2732 = vsel %vm910, %v2722, 0.0
    %2733 = vadd.xlane.f32.xlu0 %v2732
    %v2734 = vpop.xlane.xlu0 %2733
    %v2735 = vrcp.pop %v2725
    %v2736 = vrcp.pop %v2728
    %v2737 = vrcp.pop %v2731
    %v2738 = vrcp.pop %v2734
    %v2739 = vmul.f32 %v2716, %v2735
    %v2740 = vmul.f32 %v2718, %v2736
    %v2741 = vmul.f32 %v2720, %v2737
    %v2742 = vmul.f32 %v2722, %v2738
    %v2743 = vpack.c.bf16 %v2739, %v2739
    %v2744 = vpack.c.bf16 %v2740, %v2740
    %v2745 = vpack.c.bf16 %v2741, %v2741
    %v2746 = vpack.c.bf16 %v2742, %v2742
    %v2747 = vpack.c.bf16 %v2342, %v2342
    %v2748 = vpack.c.bf16 %v2394, %v2394
    %v2749 = vpack.c.bf16 %v2446, %v2446
    %v2750 = vpack.c.bf16 %v2498, %v2498
    %v2752 = vsel %vm910, %v2743, 0
    %v2755 = vsel %vm1150, %v2747, 0
    %2757 = vmatprep.subr.bf16.mxu0 0
    %2758 = vmatpush1.bf16.msra.mxu0 %v2755
    %2759 = vmatprep.subr.bf16.mxu0 0
    %2760 = vmatpush1.bf16.msra.mxu0 0
    %2761 = vmatprep.subr.bf16.mxu0 0
    %2762 = vmatpush1.bf16.msra.mxu0 0
    %2763 = vmatprep.subr.bf16.mxu0 0
    %2764 = vmatpush1.bf16.msra.mxu0 0
    %2765 = vmatprep.subr.bf16.mxu0 0
    %2766 = vmatpush1.bf16.msra.mxu0 0
    %2767 = vmatprep.subr.bf16.mxu0 0
    %2768 = vmatpush1.bf16.msra.mxu0 0
    %2769 = vmatprep.subr.bf16.mxu0 0
    %2770 = vmatpush1.bf16.msra.mxu0 0
    %2771 = vmatprep.subr.bf16.mxu0 0
    %2772 = vmatpush1.bf16.msra.mxu0 0
    %2773 = vmatprep.subr.bf16.mxu0 0
    %2774 = vmatpush1.bf16.msra.mxu0 0
    %2775 = vmatprep.subr.bf16.mxu0 0
    %2776 = vmatpush1.bf16.msra.mxu0 0
    %2777 = vmatprep.subr.bf16.mxu0 0
    %2778 = vmatpush1.bf16.msra.mxu0 0
    %2779 = vmatprep.subr.bf16.mxu0 0
    %2780 = vmatpush1.bf16.msra.mxu0 0
    %2781 = vmatprep.subr.bf16.mxu0 0
    %2782 = vmatpush1.bf16.msra.mxu0 0
    %2783 = vmatprep.subr.bf16.mxu0 0
    %2784 = vmatpush1.bf16.msra.mxu0 0
    %2785 = vmatprep.subr.bf16.mxu0 0
    %2786 = vmatpush1.bf16.msra.mxu0 0
    %2787 = vmatprep.subr.bf16.mxu0 0
    %2788 = vmatpush1.bf16.msra.mxu0 0
    %2789 = vmatprep.mubr.bf16.mxu0 0
    %2790 = vmatmul.mubr.bf16.gmra.mrb[0].mxu0 %v2752
    %v2791 = vpop.f32.mrb[0].mxu0
    %v2792 = vadd.f32 0.0, %v2791
    %v2793 = vpop.f32.mrb[0].mxu0
    %v2794 = vpop.f32.mrb[0].mxu0
    %v2795 = vpop.f32.mrb[0].mxu0
    %2796 = vdwg.mxu0
    %v2798 = vsel %vm910, %v2744, 0
    %v2801 = vsel %vm1150, %v2748, 0
    %2803 = vmatprep.subr.bf16.mxu0 0
    %2804 = vmatpush1.bf16.msra.mxu0 %v2801
    %2805 = vmatprep.subr.bf16.mxu0 0
    %2806 = vmatpush1.bf16.msra.mxu0 0
    %2807 = vmatprep.subr.bf16.mxu0 0
    %2808 = vmatpush1.bf16.msra.mxu0 0
    %2809 = vmatprep.subr.bf16.mxu0 0
    %2810 = vmatpush1.bf16.msra.mxu0 0
    %2811 = vmatprep.subr.bf16.mxu0 0
    %2812 = vmatpush1.bf16.msra.mxu0 0
    %2813 = vmatprep.subr.bf16.mxu0 0
    %2814 = vmatpush1.bf16.msra.mxu0 0
    %2815 = vmatprep.subr.bf16.mxu0 0
    %2816 = vmatpush1.bf16.msra.mxu0 0
    %2817 = vmatprep.subr.bf16.mxu0 0
    %2818 = vmatpush1.bf16.msra.mxu0 0
    %2819 = vmatprep.subr.bf16.mxu0 0
    %2820 = vmatpush1.bf16.msra.mxu0 0
    %2821 = vmatprep.subr.bf16.mxu0 0
    %2822 = vmatpush1.bf16.msra.mxu0 0
    %2823 = vmatprep.subr.bf16.mxu0 0
    %2824 = vmatpush1.bf16.msra.mxu0 0
    %2825 = vmatprep.subr.bf16.mxu0 0
    %2826 = vmatpush1.bf16.msra.mxu0 0
    %2827 = vmatprep.subr.bf16.mxu0 0
    %2828 = vmatpush1.bf16.msra.mxu0 0
    %2829 = vmatprep.subr.bf16.mxu0 0
    %2830 = vmatpush1.bf16.msra.mxu0 0
    %2831 = vmatprep.subr.bf16.mxu0 0
    %2832 = vmatpush1.bf16.msra.mxu0 0
    %2833 = vmatprep.subr.bf16.mxu0 0
    %2834 = vmatpush1.bf16.msra.mxu0 0
    %2835 = vmatprep.mubr.bf16.mxu0 0
    %2836 = vmatmul.mubr.bf16.gmra.mrb[0].mxu0 %v2798
    %v2837 = vpop.f32.mrb[0].mxu0
    %v2838 = vadd.f32 0.0, %v2837
    %v2839 = vpop.f32.mrb[0].mxu0
    %v2840 = vpop.f32.mrb[0].mxu0
    %v2841 = vpop.f32.mrb[0].mxu0
    %2842 = vdwg.mxu0
    %v2844 = vsel %vm910, %v2745, 0
    %v2847 = vsel %vm1150, %v2749, 0
    %2849 = vmatprep.subr.bf16.mxu0 0
    %2850 = vmatpush1.bf16.msra.mxu0 %v2847
    %2851 = vmatprep.subr.bf16.mxu0 0
    %2852 = vmatpush1.bf16.msra.mxu0 0
    %2853 = vmatprep.subr.bf16.mxu0 0
    %2854 = vmatpush1.bf16.msra.mxu0 0
    %2855 = vmatprep.subr.bf16.mxu0 0
    %2856 = vmatpush1.bf16.msra.mxu0 0
    %2857 = vmatprep.subr.bf16.mxu0 0
    %2858 = vmatpush1.bf16.msra.mxu0 0
    %2859 = vmatprep.subr.bf16.mxu0 0
    %2860 = vmatpush1.bf16.msra.mxu0 0
    %2861 = vmatprep.subr.bf16.mxu0 0
    %2862 = vmatpush1.bf16.msra.mxu0 0
    %2863 = vmatprep.subr.bf16.mxu0 0
    %2864 = vmatpush1.bf16.msra.mxu0 0
    %2865 = vmatprep.subr.bf16.mxu0 0
    %2866 = vmatpush1.bf16.msra.mxu0 0
    %2867 = vmatprep.subr.bf16.mxu0 0
    %2868 = vmatpush1.bf16.msra.mxu0 0
    %2869 = vmatprep.subr.bf16.mxu0 0
    %2870 = vmatpush1.bf16.msra.mxu0 0
    %2871 = vmatprep.subr.bf16.mxu0 0
    %2872 = vmatpush1.bf16.msra.mxu0 0
    %2873 = vmatprep.subr.bf16.mxu0 0
    %2874 = vmatpush1.bf16.msra.mxu0 0
    %2875 = vmatprep.subr.bf16.mxu0 0
    %2876 = vmatpush1.bf16.msra.mxu0 0
    %2877 = vmatprep.subr.bf16.mxu0 0
    %2878 = vmatpush1.bf16.msra.mxu0 0
    %2879 = vmatprep.subr.bf16.mxu0 0
    %2880 = vmatpush1.bf16.msra.mxu0 0
    %2881 = vmatprep.mubr.bf16.mxu0 0
    %2882 = vmatmul.mubr.bf16.gmra.mrb[0].mxu0 %v2844
    %v2883 = vpop.f32.mrb[0].mxu0
    %v2884 = vadd.f32 0.0, %v2883
    %v2885 = vpop.f32.mrb[0].mxu0
    %v2886 = vpop.f32.mrb[0].mxu0
    %v2887 = vpop.f32.mrb[0].mxu0
    %2888 = vdwg.mxu0
    %v2890 = vsel %vm910, %v2746, 0
    %v2893 = vsel %vm1150, %v2750, 0
    %2895 = vmatprep.subr.bf16.mxu0 0
    %2896 = vmatpush1.bf16.msra.mxu0 %v2893
    %2897 = vmatprep.subr.bf16.mxu0 0
    %2898 = vmatpush1.bf16.msra.mxu0 0
    %2899 = vmatprep.subr.bf16.mxu0 0
    %2900 = vmatpush1.bf16.msra.mxu0 0
    %2901 = vmatprep.subr.bf16.mxu0 0
    %2902 = vmatpush1.bf16.msra.mxu0 0
    %2903 = vmatprep.subr.bf16.mxu0 0
    %2904 = vmatpush1.bf16.msra.mxu0 0
    %2905 = vmatprep.subr.bf16.mxu0 0
    %2906 = vmatpush1.bf16.msra.mxu0 0
    %2907 = vmatprep.subr.bf16.mxu0 0
    %2908 = vmatpush1.bf16.msra.mxu0 0
    %2909 = vmatprep.subr.bf16.mxu0 0
    %2910 = vmatpush1.bf16.msra.mxu0 0
    %2911 = vmatprep.subr.bf16.mxu0 0
    %2912 = vmatpush1.bf16.msra.mxu0 0
    %2913 = vmatprep.subr.bf16.mxu0 0
    %2914 = vmatpush1.bf16.msra.mxu0 0
    %2915 = vmatprep.subr.bf16.mxu0 0
    %2916 = vmatpush1.bf16.msra.mxu0 0
    %2917 = vmatprep.subr.bf16.mxu0 0
    %2918 = vmatpush1.bf16.msra.mxu0 0
    %2919 = vmatprep.subr.bf16.mxu0 0
    %2920 = vmatpush1.bf16.msra.mxu0 0
    %2921 = vmatprep.subr.bf16.mxu0 0
    %2922 = vmatpush1.bf16.msra.mxu0 0
    %2923 = vmatprep.subr.bf16.mxu0 0
    %2924 = vmatpush1.bf16.msra.mxu0 0
    %2925 = vmatprep.subr.bf16.mxu0 0
    %2926 = vmatpush1.bf16.msra.mxu0 0
    %2927 = vmatprep.mubr.bf16.mxu0 0
    %2928 = vmatmul.mubr.bf16.gmra.mrb[0].mxu0 %v2890
    %v2929 = vpop.f32.mrb[0].mxu0
    %v2930 = vadd.f32 0.0, %v2929
    %v2931 = vpop.f32.mrb[0].mxu0
    %v2932 = vpop.f32.mrb[0].mxu0
    %v2933 = vpop.f32.mrb[0].mxu0
    %2934 = vdwg.mxu0
    %v2935 = vpack.c.bf16 %v2792, %v2792
    %v2936 = vpack.c.bf16 %v2838, %v2838
    %v2937 = vpack.c.bf16 %v2884, %v2884
    %v2938 = vpack.c.bf16 %v2930, %v2930
    %s2939 = scalar_lea.vmem %s6, 16
    %v2940 = vld [vmem:[%s2939] sm:$0xf]
    %v2941 = vld [vmem:[%s2939 + $0x4] sm:$0xf]
    %v2942 = vld [vmem:[%s2939 + $0x8] sm:$0xf]
    %v2943 = vld [vmem:[%s2939 + $0xc] sm:$0xf]
    %v2945 = vsel %vm910, %v2935, 0
    %v2948 = vsel %vm1150, %v2940, 0
    %2950 = vmatprep.subr.bf16.mxu0 0
    %2951 = vmatpush1.bf16.msra.mxu0 %v2948
    %2952 = vmatprep.subr.bf16.mxu0 0
    %2953 = vmatpush1.bf16.msra.mxu0 0
    %2954 = vmatprep.subr.bf16.mxu0 0
    %2955 = vmatpush1.bf16.msra.mxu0 0
    %2956 = vmatprep.subr.bf16.mxu0 0
    %2957 = vmatpush1.bf16.msra.mxu0 0
    %2958 = vmatprep.subr.bf16.mxu0 0
    %2959 = vmatpush1.bf16.msra.mxu0 0
    %2960 = vmatprep.subr.bf16.mxu0 0
    %2961 = vmatpush1.bf16.msra.mxu0 0
    %2962 = vmatprep.subr.bf16.mxu0 0
    %2963 = vmatpush1.bf16.msra.mxu0 0
    %2964 = vmatprep.subr.bf16.mxu0 0
    %2965 = vmatpush1.bf16.msra.mxu0 0
    %2966 = vmatprep.subr.bf16.mxu0 0
    %2967 = vmatpush1.bf16.msra.mxu0 0
    %2968 = vmatprep.subr.bf16.mxu0 0
    %2969 = vmatpush1.bf16.msra.mxu0 0
    %2970 = vmatprep.subr.bf16.mxu0 0
    %2971 = vmatpush1.bf16.msra.mxu0 0
    %2972 = vmatprep.subr.bf16.mxu0 0
    %2973 = vmatpush1.bf16.msra.mxu0 0
    %2974 = vmatprep.subr.bf16.mxu0 0
    %2975 = vmatpush1.bf16.msra.mxu0 0
    %2976 = vmatprep.subr.bf16.mxu0 0
    %2977 = vmatpush1.bf16.msra.mxu0 0
    %2978 = vmatprep.subr.bf16.mxu0 0
    %2979 = vmatpush1.bf16.msra.mxu0 0
    %2980 = vmatprep.subr.bf16.mxu0 0
    %2981 = vmatpush1.bf16.msra.mxu0 0
    %2982 = vmatprep.mubr.bf16.mxu0 0
    %2983 = vmatmul.mubr.bf16.gmra.mrb[0].mxu0 %v2945
    %v2984 = vpop.f32.mrb[0].mxu0
    %v2985 = vadd.f32 0.0, %v2984
    %v2986 = vpop.f32.mrb[0].mxu0
    %v2987 = vpop.f32.mrb[0].mxu0
    %v2988 = vpop.f32.mrb[0].mxu0
    %2989 = vdwg.mxu0
    %v2991 = vsel %vm910, %v2936, 0
    %v2994 = vsel %vm1150, %v2941, 0
    %2996 = vmatprep.subr.bf16.mxu0 0
    %2997 = vmatpush1.bf16.msra.mxu0 %v2994
    %2998 = vmatprep.subr.bf16.mxu0 0
    %2999 = vmatpush1.bf16.msra.mxu0 0
    %3000 = vmatprep.subr.bf16.mxu0 0
    %3001 = vmatpush1.bf16.msra.mxu0 0
    %3002 = vmatprep.subr.bf16.mxu0 0
    %3003 = vmatpush1.bf16.msra.mxu0 0
    %3004 = vmatprep.subr.bf16.mxu0 0
    %3005 = vmatpush1.bf16.msra.mxu0 0
    %3006 = vmatprep.subr.bf16.mxu0 0
    %3007 = vmatpush1.bf16.msra.mxu0 0
    %3008 = vmatprep.subr.bf16.mxu0 0
    %3009 = vmatpush1.bf16.msra.mxu0 0
    %3010 = vmatprep.subr.bf16.mxu0 0
    %3011 = vmatpush1.bf16.msra.mxu0 0
    %3012 = vmatprep.subr.bf16.mxu0 0
    %3013 = vmatpush1.bf16.msra.mxu0 0
    %3014 = vmatprep.subr.bf16.mxu0 0
    %3015 = vmatpush1.bf16.msra.mxu0 0
    %3016 = vmatprep.subr.bf16.mxu0 0
    %3017 = vmatpush1.bf16.msra.mxu0 0
    %3018 = vmatprep.subr.bf16.mxu0 0
    %3019 = vmatpush1.bf16.msra.mxu0 0
    %3020 = vmatprep.subr.bf16.mxu0 0
    %3021 = vmatpush1.bf16.msra.mxu0 0
    %3022 = vmatprep.subr.bf16.mxu0 0
    %3023 = vmatpush1.bf16.msra.mxu0 0
    %3024 = vmatprep.subr.bf16.mxu0 0
    %3025 = vmatpush1.bf16.msra.mxu0 0
    %3026 = vmatprep.subr.bf16.mxu0 0
    %3027 = vmatpush1.bf16.msra.mxu0 0
    %3028 = vmatprep.mubr.bf16.mxu0 0
    %3029 = vmatmul.mubr.bf16.gmra.mrb[0].mxu0 %v2991
    %v3030 = vpop.f32.mrb[0].mxu0
    %v3031 = vadd.f32 0.0, %v3030
    %v3032 = vpop.f32.mrb[0].mxu0
    %v3033 = vpop.f32.mrb[0].mxu0
    %v3034 = vpop.f32.mrb[0].mxu0
    %3035 = vdwg.mxu0
    %v3037 = vsel %vm910, %v2937, 0
    %v3040 = vsel %vm1150, %v2942, 0
    %3042 = vmatprep.subr.bf16.mxu0 0
    %3043 = vmatpush1.bf16.msra.mxu0 %v3040
    %3044 = vmatprep.subr.bf16.mxu0 0
    %3045 = vmatpush1.bf16.msra.mxu0 0
    %3046 = vmatprep.subr.bf16.mxu0 0
    %3047 = vmatpush1.bf16.msra.mxu0 0
    %3048 = vmatprep.subr.bf16.mxu0 0
    %3049 = vmatpush1.bf16.msra.mxu0 0
    %3050 = vmatprep.subr.bf16.mxu0 0
    %3051 = vmatpush1.bf16.msra.mxu0 0
    %3052 = vmatprep.subr.bf16.mxu0 0
    %3053 = vmatpush1.bf16.msra.mxu0 0
    %3054 = vmatprep.subr.bf16.mxu0 0
    %3055 = vmatpush1.bf16.msra.mxu0 0
    %3056 = vmatprep.subr.bf16.mxu0 0
    %3057 = vmatpush1.bf16.msra.mxu0 0
    %3058 = vmatprep.subr.bf16.mxu0 0
    %3059 = vmatpush1.bf16.msra.mxu0 0
    %3060 = vmatprep.subr.bf16.mxu0 0
    %3061 = vmatpush1.bf16.msra.mxu0 0
    %3062 = vmatprep.subr.bf16.mxu0 0
    %3063 = vmatpush1.bf16.msra.mxu0 0
    %3064 = vmatprep.subr.bf16.mxu0 0
    %3065 = vmatpush1.bf16.msra.mxu0 0
    %3066 = vmatprep.subr.bf16.mxu0 0
    %3067 = vmatpush1.bf16.msra.mxu0 0
    %3068 = vmatprep.subr.bf16.mxu0 0
    %3069 = vmatpush1.bf16.msra.mxu0 0
    %3070 = vmatprep.subr.bf16.mxu0 0
    %3071 = vmatpush1.bf16.msra.mxu0 0
    %3072 = vmatprep.subr.bf16.mxu0 0
    %3073 = vmatpush1.bf16.msra.mxu0 0
    %3074 = vmatprep.mubr.bf16.mxu0 0
    %3075 = vmatmul.mubr.bf16.gmra.mrb[0].mxu0 %v3037
    %v3076 = vpop.f32.mrb[0].mxu0
    %v3077 = vadd.f32 0.0, %v3076
    %v3078 = vpop.f32.mrb[0].mxu0
    %v3079 = vpop.f32.mrb[0].mxu0
    %v3080 = vpop.f32.mrb[0].mxu0
    %3081 = vdwg.mxu0
    %v3083 = vsel %vm910, %v2938, 0
    %v3086 = vsel %vm1150, %v2943, 0
    %3088 = vmatprep.subr.bf16.mxu0 0
    %3089 = vmatpush1.bf16.msra.mxu0 %v3086
    %3090 = vmatprep.subr.bf16.mxu0 0
    %3091 = vmatpush1.bf16.msra.mxu0 0
    %3092 = vmatprep.subr.bf16.mxu0 0
    %3093 = vmatpush1.bf16.msra.mxu0 0
    %3094 = vmatprep.subr.bf16.mxu0 0
    %3095 = vmatpush1.bf16.msra.mxu0 0
    %3096 = vmatprep.subr.bf16.mxu0 0
    %3097 = vmatpush1.bf16.msra.mxu0 0
    %3098 = vmatprep.subr.bf16.mxu0 0
    %3099 = vmatpush1.bf16.msra.mxu0 0
    %3100 = vmatprep.subr.bf16.mxu0 0
    %3101 = vmatpush1.bf16.msra.mxu0 0
    %3102 = vmatprep.subr.bf16.mxu0 0
    %3103 = vmatpush1.bf16.msra.mxu0 0
    %3104 = vmatprep.subr.bf16.mxu0 0
    %3105 = vmatpush1.bf16.msra.mxu0 0
    %3106 = vmatprep.subr.bf16.mxu0 0
    %3107 = vmatpush1.bf16.msra.mxu0 0
    %3108 = vmatprep.subr.bf16.mxu0 0
    %3109 = vmatpush1.bf16.msra.mxu0 0
    %3110 = vmatprep.subr.bf16.mxu0 0
    %3111 = vmatpush1.bf16.msra.mxu0 0
    %3112 = vmatprep.subr.bf16.mxu0 0
    %3113 = vmatpush1.bf16.msra.mxu0 0
    %3114 = vmatprep.subr.bf16.mxu0 0
    %3115 = vmatpush1.bf16.msra.mxu0 0
    %3116 = vmatprep.subr.bf16.mxu0 0
    %3117 = vmatpush1.bf16.msra.mxu0 0
    %3118 = vmatprep.subr.bf16.mxu0 0
    %3119 = vmatpush1.bf16.msra.mxu0 0
    %3120 = vmatprep.mubr.bf16.mxu0 0
    %3121 = vmatmul.mubr.bf16.gmra.mrb[0].mxu0 %v3083
    %v3122 = vpop.f32.mrb[0].mxu0
    %v3123 = vadd.f32 0.0, %v3122
    %v3124 = vpop.f32.mrb[0].mxu0
    %v3125 = vpop.f32.mrb[0].mxu0
    %v3126 = vpop.f32.mrb[0].mxu0
    %3127 = vdwg.mxu0
    %v3128 = vsel %vm282, %v2985, 0.0
    %v3129 = vsel %vm282, %v3031, 0.0
    %v3130 = vadd.f32 %v3128, %v3129
    %v3131 = vsel %vm282, %v3077, 0.0
    %v3132 = vadd.f32 %v3130, %v3131
    %v3133 = vsel %vm282, %v3123, 0.0
    %v3134 = vadd.f32 %v3132, %v3133
    %s3135 = scalar_lea.vmem %s7, 1
    %v3136 = vld [vmem:[%s3135] sm:$0x1]
    %v3138 = vlaneseq
    %v3139 = vshrl.u32 %v3138, 7
    %v3140 = vsub.s32 0, %v3139
    %v3141 = vrot.slane %v3136, %v3140
    %v3143 = vadd.f32 %v3134, %v3141
    %v3144 = vadd.f32 %v1740, %v3143
    %s3145 = scalar_lea.vmem %s12, 1
    %v3146 = vld [vmem:[%s3145] sm:$0x1]
    %s3147 = scalar_lea.vmem %s13, 1
    %v3148 = vld [vmem:[%s3147] sm:$0x1]
    %v3149 = vsel %vm282, %v3144, 0.0
    %3150 = vadd.xlane.f32.xlu0 %v3149
    %v3151 = vpop.xlane.xlu0 %3150
    %v3152 = vmul.f32 %v3151, %v1545
    %v3153 = vsub.f32 %v3144, %v3152
    %v3154 = vmul.f32 %v3153, %v3153
    %v3155 = vsel %vm282, %v3154, 0.0
    %3156 = vadd.xlane.f32.xlu0 %v3155
    %v3157 = vpop.xlane.xlu0 %3156
    %v3158 = vmul.f32 %v3157, %v1545
    %v3159 = vadd.f32 %v3158, 1e-05
    %v3160 = vrsqrt.pop %v3159
    %v3161 = vmul.f32 %v3153, %v3160
    %v3163 = vlaneseq
    %v3164 = vshrl.u32 %v3163, 7
    %v3165 = vsub.s32 0, %v3164
    %v3166 = vrot.slane %v3146, %v3165
    %v3168 = vmul.f32 %v3161, %v3166
    %v3170 = vlaneseq
    %v3171 = vshrl.u32 %v3170, 7
    %v3172 = vsub.s32 0, %v3171
    %v3173 = vrot.slane %v3148, %v3172
    %v3175 = vadd.f32 %v3168, %v3173
    %v3176 = vpack.c.bf16 %v3175, %v3175
    %s3177 = scalar_lea.vmem %s8, 16
    %v3178 = vld [vmem:[%s3177] sm:$0xf]
    %v3179 = vld [vmem:[%s3177 + $0x4] sm:$0xf]
    %v3180 = vld [vmem:[%s3177 + $0x8] sm:$0xf]
    %v3181 = vld [vmem:[%s3177 + $0xc] sm:$0xf]
    %s3182 = scalar_lea.vmem %s9, 1
    %v3183 = vld [vmem:[%s3182] sm:$0x1]
    %v3185 = vlaneseq
    %v3186 = vshrl.u32 %v3185, 7
    %v3187 = vsub.s32 0, %v3186
    %v3188 = vrot.slane %v3183, %v3187
    %v3194 = vunpack.c.l.b16 %v3178
    %v3195 = vunpack.c.l.b16 %v3179
    %v3196 = vunpack.c.l.b16 %v3180
    %v3197 = vunpack.c.l.b16 %v3181
    %v3198 = vpack.c.b16 %v3195, %v3194
    %v3199 = vpack.c.b16 %v3197, %v3196
    %v3203 = vsel %vm282, %v3176, 0
    %3205 = vmatprep.subr.bf16.mxu0 0
    %3206 = vmatpush1.bf16.msra.mxu0 %v3198
    %3207 = vmatprep.subr.bf16.mxu0 0
    %3208 = vmatpush1.bf16.msra.mxu0 %v3199
    %3209 = vmatprep.subr.bf16.mxu0 0
    %3210 = vmatpush1.bf16.msra.mxu0 0
    %3211 = vmatprep.subr.bf16.mxu0 0
    %3212 = vmatpush1.bf16.msra.mxu0 0
    %3213 = vmatprep.subr.bf16.mxu0 0
    %3214 = vmatpush1.bf16.msra.mxu0 0
    %3215 = vmatprep.subr.bf16.mxu0 0
    %3216 = vmatpush1.bf16.msra.mxu0 0
    %3217 = vmatprep.subr.bf16.mxu0 0
    %3218 = vmatpush1.bf16.msra.mxu0 0
    %3219 = vmatprep.subr.bf16.mxu0 0
    %3220 = vmatpush1.bf16.msra.mxu0 0
    %3221 = vmatprep.subr.bf16.mxu0 0
    %3222 = vmatpush1.bf16.msra.mxu0 0
    %3223 = vmatprep.subr.bf16.mxu0 0
    %3224 = vmatpush1.bf16.msra.mxu0 0
    %3225 = vmatprep.subr.bf16.mxu0 0
    %3226 = vmatpush1.bf16.msra.mxu0 0
    %3227 = vmatprep.subr.bf16.mxu0 0
    %3228 = vmatpush1.bf16.msra.mxu0 0
    %3229 = vmatprep.subr.bf16.mxu0 0
    %3230 = vmatpush1.bf16.msra.mxu0 0
    %3231 = vmatprep.subr.bf16.mxu0 0
    %3232 = vmatpush1.bf16.msra.mxu0 0
    %3233 = vmatprep.subr.bf16.mxu0 0
    %3234 = vmatpush1.bf16.msra.mxu0 0
    %3235 = vmatprep.subr.bf16.mxu0 0
    %3236 = vmatpush1.bf16.msra.mxu0 0
    %3237 = vmatprep.mubr.bf16.mxu0 0
    %3238 = vmatmul.mubr.bf16.gmra.mrb[0].mxu0 %v3203
    %v3239 = vpop.f32.mrb[0].mxu0
    %v3240 = vadd.f32 %v3188, %v3239
    %v3241 = vpop.f32.mrb[0].mxu0
    %v3242 = vpop.f32.mrb[0].mxu0
    %v3243 = vpop.f32.mrb[0].mxu0
    %3244 = vdwg.mxu0
    %v3245 = vxor.u32 %v3240, 2147483648
    %v3246 = vmul.f32 %v3245, 1.442695
    %v3247 = vpow.pop %v3246
    %v3248 = vadd.f32 %v3247, 1.0
    %v3249 = vrcp.pop %v3248
    %v3250 = vmul.f32 1.0, %v3249
    %v3251 = vmul.f32 %v3240, %v3250
    %v3252 = vpack.c.bf16 %v3251, %v3251
    %s3253 = scalar_lea.vmem %s10, 16
    %v3254 = vld [vmem:[%s3253] sm:$0xf]
    %v3255 = vld [vmem:[%s3253 + $0x4] sm:$0xf]
    %v3256 = vld [vmem:[%s3253 + $0x8] sm:$0xf]
    %v3257 = vld [vmem:[%s3253 + $0xc] sm:$0xf]
    %s3258 = scalar_lea.vmem %s11, 1
    %v3259 = vld [vmem:[%s3258] sm:$0x1]
    %v3261 = vlaneseq
    %v3262 = vshrl.u32 %v3261, 7
    %v3263 = vsub.s32 0, %v3262
    %v3264 = vrot.slane %v3259, %v3263
    %v3270 = vunpack.c.l.b16 %v3254
    %v3271 = vunpack.c.l.b16 %v3255
    %v3272 = vunpack.c.l.b16 %v3256
    %v3273 = vunpack.c.l.b16 %v3257
    %v3274 = vpack.c.b16 %v3271, %v3270
    %v3275 = vpack.c.b16 %v3273, %v3272
    %v3279 = vsel %vm282, %v3252, 0
    %3281 = vmatprep.subr.bf16.mxu0 0
    %3282 = vmatpush1.bf16.msra.mxu0 %v3274
    %3283 = vmatprep.subr.bf16.mxu0 0
    %3284 = vmatpush1.bf16.msra.mxu0 %v3275
    %3285 = vmatprep.subr.bf16.mxu0 0
    %3286 = vmatpush1.bf16.msra.mxu0 0
    %3287 = vmatprep.subr.bf16.mxu0 0
    %3288 = vmatpush1.bf16.msra.mxu0 0
    %3289 = vmatprep.subr.bf16.mxu0 0
    %3290 = vmatpush1.bf16.msra.mxu0 0
    %3291 = vmatprep.subr.bf16.mxu0 0
    %3292 = vmatpush1.bf16.msra.mxu0 0
    %3293 = vmatprep.subr.bf16.mxu0 0
    %3294 = vmatpush1.bf16.msra.mxu0 0
    %3295 = vmatprep.subr.bf16.mxu0 0
    %3296 = vmatpush1.bf16.msra.mxu0 0
    %3297 = vmatprep.subr.bf16.mxu0 0
    %3298 = vmatpush1.bf16.msra.mxu0 0
    %3299 = vmatprep.subr.bf16.mxu0 0
    %3300 = vmatpush1.bf16.msra.mxu0 0
    %3301 = vmatprep.subr.bf16.mxu0 0
    %3302 = vmatpush1.bf16.msra.mxu0 0
    %3303 = vmatprep.subr.bf16.mxu0 0
    %3304 = vmatpush1.bf16.msra.mxu0 0
    %3305 = vmatprep.subr.bf16.mxu0 0
    %3306 = vmatpush1.bf16.msra.mxu0 0
    %3307 = vmatprep.subr.bf16.mxu0 0
    %3308 = vmatpush1.bf16.msra.mxu0 0
    %3309 = vmatprep.subr.bf16.mxu0 0
    %3310 = vmatpush1.bf16.msra.mxu0 0
    %3311 = vmatprep.subr.bf16.mxu0 0
    %3312 = vmatpush1.bf16.msra.mxu0 0
    %3313 = vmatprep.mubr.bf16.mxu0 0
    %3314 = vmatmul.mubr.bf16.gmra.mrb[0].mxu0 %v3279
    %v3315 = vpop.f32.mrb[0].mxu0
    %v3316 = vadd.f32 %v3264, %v3315
    %v3317 = vpop.f32.mrb[0].mxu0
    %v3318 = vpop.f32.mrb[0].mxu0
    %v3319 = vpop.f32.mrb[0].mxu0
    %3320 = vdwg.mxu0
    %v3321 = vadd.f32 %v3175, %v3316
    %s3322 = scalar_lea.vmem %s14, 1
    %v3323 = vld [vmem:[%s3322] sm:$0x1]
    %s3324 = scalar_lea.vmem %s15, 1
    %v3325 = vld [vmem:[%s3324] sm:$0x1]
    %v3326 = vsel %vm282, %v3321, 0.0
    %3327 = vadd.xlane.f32.xlu0 %v3326
    %v3328 = vpop.xlane.xlu0 %3327
    %v3329 = vmul.f32 %v3328, %v1545
    %v3330 = vsub.f32 %v3321, %v3329
    %v3331 = vmul.f32 %v3330, %v3330
    %v3332 = vsel %vm282, %v3331, 0.0
    %3333 = vadd.xlane.f32.xlu0 %v3332
    %v3334 = vpop.xlane.xlu0 %3333
    %v3335 = vmul.f32 %v3334, %v1545
    %v3336 = vadd.f32 %v3335, 1e-05
    %v3337 = vrsqrt.pop %v3336
    %v3338 = vmul.f32 %v3330, %v3337
    %v3340 = vlaneseq
    %v3341 = vshrl.u32 %v3340, 7
    %v3342 = vsub.s32 0, %v3341
    %v3343 = vrot.slane %v3323, %v3342
    %v3345 = vmul.f32 %v3338, %v3343
    %v3347 = vlaneseq
    %v3348 = vshrl.u32 %v3347, 7
    %v3349 = vsub.s32 0, %v3348
    %v3350 = vrot.slane %v3325, %v3349
    %v3352 = vadd.f32 %v3345, %v3350
    %v3353 = vxor.u32 %v3352, 2147483648
    %v3354 = vmul.f32 %v3353, 1.442695
    %v3355 = vpow.pop %v3354
    %v3356 = vadd.f32 %v3355, 1.0
    %v3357 = vrcp.pop %v3356
    %v3358 = vmul.f32 1.0, %v3357
    %v3359 = vmul.f32 %v3352, %v3358
    %v3360 = vpack.c.bf16 %v3359, %v3359
    %v3361 = vld [vmem:[%s16] sm:$0xf]
    %v3362 = vld [vmem:[%s16 + $0x4] sm:$0xf]
    %v3363 = vld [vmem:[%s16 + $0x8] sm:$0xf]
    %v3364 = vld [vmem:[%s16 + $0xc] sm:$0xf]
    %v3365 = vld [vmem:[%s17] sm:$0x1]
    %v3367 = vlaneseq
    %v3368 = vshrl.u32 %v3367, 7
    %v3369 = vsub.s32 0, %v3368
    %v3370 = vrot.slane %v3365, %v3369
    %v3376 = vunpack.c.l.b16 %v3361
    %v3377 = vunpack.c.l.b16 %v3362
    %v3378 = vunpack.c.l.b16 %v3363
    %v3379 = vunpack.c.l.b16 %v3364
    %v3380 = vpack.c.b16 %v3377, %v3376
    %v3381 = vpack.c.b16 %v3379, %v3378
    %v3385 = vsel %vm282, %v3360, 0
    %3387 = vmatprep.subr.bf16.mxu0 0
    %3388 = vmatpush1.bf16.msra.mxu0 %v3380
    %3389 = vmatprep.subr.bf16.mxu0 0
    %3390 = vmatpush1.bf16.msra.mxu0 %v3381
    %3391 = vmatprep.subr.bf16.mxu0 0
    %3392 = vmatpush1.bf16.msra.mxu0 0
    %3393 = vmatprep.subr.bf16.mxu0 0
    %3394 = vmatpush1.bf16.msra.mxu0 0
    %3395 = vmatprep.subr.bf16.mxu0 0
    %3396 = vmatpush1.bf16.msra.mxu0 0
    %3397 = vmatprep.subr.bf16.mxu0 0
    %3398 = vmatpush1.bf16.msra.mxu0 0
    %3399 = vmatprep.subr.bf16.mxu0 0
    %3400 = vmatpush1.bf16.msra.mxu0 0
    %3401 = vmatprep.subr.bf16.mxu0 0
    %3402 = vmatpush1.bf16.msra.mxu0 0
    %3403 = vmatprep.subr.bf16.mxu0 0
    %3404 = vmatpush1.bf16.msra.mxu0 0
    %3405 = vmatprep.subr.bf16.mxu0 0
    %3406 = vmatpush1.bf16.msra.mxu0 0
    %3407 = vmatprep.subr.bf16.mxu0 0
    %3408 = vmatpush1.bf16.msra.mxu0 0
    %3409 = vmatprep.subr.bf16.mxu0 0
    %3410 = vmatpush1.bf16.msra.mxu0 0
    %3411 = vmatprep.subr.bf16.mxu0 0
    %3412 = vmatpush1.bf16.msra.mxu0 0
    %3413 = vmatprep.subr.bf16.mxu0 0
    %3414 = vmatpush1.bf16.msra.mxu0 0
    %3415 = vmatprep.subr.bf16.mxu0 0
    %3416 = vmatpush1.bf16.msra.mxu0 0
    %3417 = vmatprep.subr.bf16.mxu0 0
    %3418 = vmatpush1.bf16.msra.mxu0 0
    %3419 = vmatprep.mubr.bf16.mxu0 0
    %3420 = vmatmul.mubr.bf16.gmra.mrb[0].mxu0 %v3385
    %v3421 = vpop.f32.mrb[0].mxu0
    %v3422 = vadd.f32 %v3370, %v3421
    %v3423 = vpop.f32.mrb[0].mxu0
    %v3424 = vpop.f32.mrb[0].mxu0
    %v3425 = vpop.f32.mrb[0].mxu0
    %3426 = vdwg.mxu0
    %3427 = vst [vmem:[#allocation2] sm:$0xff] %v3422
    // Predicated region
    $region74: #{tpu_custom_call.1} parent=1 // pred_check
      _
    $region75: #{tpu_custom_call.1} parent=1 // pred_check_branch
      %3429 = sbr.rel (0) target = $region77
    $region76: #{tpu_custom_call.1} parent=1 // pred_region
      %s3431 = ssub.s32 128, 128
      %3432 = vsyncadd [#allocation3], %s3431
      %s3434 = sshll.u32 [#allocation2], 4
      %s3435 = int_to_ptr.vmem [resolvable:$true] %s3434
      %3437 = dma.vmem_to_hbm [thread:$0]  %s3435, 128, %s18, [#allocation3]
    $region77: #{tpu_custom_call.1} parent=1 // pred_fallthru
      _
    // Predicated region
    $region78: #{tpu_custom_call.1} parent=1 // pred_check
      _
    $region79: #{tpu_custom_call.1} parent=1 // pred_check_branch
      %3439 = sbr.rel (0) target = $region81
    $region80: #{tpu_custom_call.1} parent=1 // pred_region
      %3440 = dma.done [#allocation3], 128
    $region81: #{tpu_custom_call.1} parent=1 // pred_fallthru
      _
    %3441 = vsyncpa [#allocation3], 1

</llo_original>
